<compile_context>
chip_gen: v5e
topology: v5e:2x2
jax: 0.10.0
libtpu: 0.0.40
codegen_flags: <defaults>
</compile_context>

<pallas_src>
import jax
import jax.numpy as jnp
from jax import lax
from jax.experimental import pallas as pl
from jax.experimental.pallas import tpu as pltpu


def _conv1x1_kernel(x_ref, w_ref, b_ref, o_ref):
    # x_ref: (M_pad, Cin)       -- all pixel rows, padded to a full sublane group
    # w_ref: (Cin, tile_co)     -- pre-transposed weight tile (K-major, N lane-dense)
    # b_ref: (1, tile_co)
    # o_ref: (M_pad, tile_co)
    acc = jnp.dot(
        x_ref[...], w_ref[...],
        preferred_element_type=jnp.float32,
        precision=lax.Precision.HIGHEST,   # true f32 multiplies; free under DMA
    )
    o_ref[...] = (acc + b_ref[...]).astype(o_ref.dtype)


def prepare_conv1x1_params(weight, bias):
    """One-time parameter prep (NOT in the per-call hot path).

    weight: (Cout, Cin, 1, 1) -> (Cin, Cout) so the kernel matmul is the
    MXU-native (M, K) x (K, N) with N lane-dense. bias: (Cout,) -> (1, Cout).
    """
    Cout, Cin = weight.shape[0], weight.shape[1]
    wm = jnp.transpose(weight.reshape(Cout, Cin), (1, 0))  # (Cin, Cout)
    bm = bias.reshape(1, Cout)
    return wm, bm


def conv2d_1x1(x_nchw, wm, bm, *, tile_co=1152):
    """1x1 conv, stride 1, using pre-transposed params from prepare_conv1x1_params.

    x_nchw: (N, Cin, H, W); wm: (Cin, Cout); bm: (1, Cout).
    NOTE: the final NHWC->NCHW transpose is a metadata op for H=W=1; this
    wrapper targets 1x1 spatial inputs (as in this module).
    """
    N, Cin, H, Wsp = x_nchw.shape
    Cout = wm.shape[1]
    assert Cout % tile_co == 0 and tile_co % 128 == 0

    M = N * H * Wsp
    M_pad = max(8, ((M + 7) // 8) * 8)   # full sublane group -> unmasked stores

    # Flatten spatial+batch into rows, channels last; zero-pad rows to M_pad.
    xm = jnp.transpose(x_nchw, (0, 2, 3, 1)).reshape(M, Cin)
    xm = jnp.pad(xm, ((0, M_pad - M), (0, 0)))

    grid = (Cout // tile_co,)

    flops = 2 * M_pad * Cin * Cout
    bytes_accessed = 4 * (M_pad * Cin + Cin * Cout + Cout + M_pad * Cout)

    out = pl.pallas_call(
        _conv1x1_kernel,
        out_shape=jax.ShapeDtypeStruct((M_pad, Cout), jnp.float32),
        grid=grid,
        in_specs=[
            # x: tiny, resident across all grid steps (constant index_map).
            pl.BlockSpec((M_pad, Cin), lambda i: (0, 0)),
            # weight: tiled along Cout -> double-buffered DMA hides the matmul.
            pl.BlockSpec((Cin, tile_co), lambda i: (0, i)),
            # bias: tiled along Cout.
            pl.BlockSpec((1, tile_co), lambda i: (0, i)),
        ],
        out_specs=pl.BlockSpec((M_pad, tile_co), lambda i: (0, i)),
        cost_estimate=pl.CostEstimate(
            flops=flops, transcendentals=0, bytes_accessed=bytes_accessed),
    )(xm, wm, bm)

    # Drop padded rows, back to NCHW.
    out = out[:M]
    return jnp.transpose(out.reshape(N, H, Wsp, Cout), (0, 3, 1, 2))


if __name__ == "__main__":
    key = jax.random.PRNGKey(0)
    kx, kw, kb = jax.random.split(key, 3)

    Cin, Cout = 144, 3456
    # Input matches the module's forward: [1, 144, 1, 1]
    x = jax.random.normal(kx, (1, Cin, 1, 1), dtype=jnp.float32)

    # Deterministic synthetic parameters (shapes from Conv2d(144, 3456, 1)).
    fan_in = Cin  # kernel is 1x1
    bound = 1.0 / (fan_in ** 0.5)
    weight = jax.random.uniform(kw, (Cout, Cin, 1, 1), jnp.float32,
                                minval=-bound, maxval=bound)
    bias = jax.random.uniform(kb, (Cout,), jnp.float32,
                              minval=-bound, maxval=bound)

    # One-time param prep (outside per-call hot path).
    wm, bm = prepare_conv1x1_params(weight, bias)

    y = conv2d_1x1(x, wm, bm)
    jax.block_until_ready(y)

    # Sanity check against plain-JAX reference.
    ref = (x.reshape(1, Cin) @ weight.reshape(Cout, Cin).T + bias).reshape(
        1, Cout, 1, 1)
    assert y.shape == (1, Cout, 1, 1), y.shape
    assert jnp.allclose(y, ref, atol=1e-4, rtol=1e-4)

    print("KERNEL_OK")
</pallas_src>

<mosaic_0001>
module attributes {stable_mosaic.version = 11 : i64} {
  func.func @_conv1x1_kernel(%arg0: i32, %arg1: memref<8x144xf32, #tpu.memory_space<vmem>>, %arg2: memref<144x1152xf32, #tpu.memory_space<vmem>>, %arg3: memref<1x1152xf32, #tpu.memory_space<vmem>>, %arg4: memref<8x1152xf32, #tpu.memory_space<vmem>>) attributes {dimension_semantics = [#tpu.dimension_semantics<arbitrary>], iteration_bounds = array<i64: 3>, scalar_prefetch = 0 : i64, scratch_operands = 0 : i64, tpu.core_type = #tpu.core_type<tc>, window_params = [{pipeline_mode = #tpu.pipeline_mode<synchronous>, transform_indices = @transform_0, window_bounds = array<i64: 8, 144>}, {transform_indices = @transform_1, window_bounds = array<i64: 144, 1152>}, {transform_indices = @transform_2, window_bounds = array<i64: 1, 1152>}, {transform_indices = @transform_3, window_bounds = array<i64: 8, 1152>}]} {
    %c0 = arith.constant 0 : index
    %c0_0 = arith.constant 0 : index
    %0 = vector.load %arg1[%c0, %c0_0] : memref<8x144xf32, #tpu.memory_space<vmem>>, vector<8x144xf32>
    %c0_1 = arith.constant 0 : index
    %c0_2 = arith.constant 0 : index
    %1 = vector.load %arg2[%c0_1, %c0_2] : memref<144x1152xf32, #tpu.memory_space<vmem>>, vector<144x1152xf32>
    %cst = arith.constant dense<0.000000e+00> : vector<8x1152xf32>
    %2 = tpu.matmul %0, %1, %cst {dimension_numbers = #tpu.dot_dimension_numbers<[1], [0], [0], [1], [0, 0, 1, 1], [], []>, precision = #tpu.contract_precision<fp32>} : vector<8x144xf32>, vector<144x1152xf32>, vector<8x1152xf32> -> vector<8x1152xf32>
    %c0_3 = arith.constant 0 : index
    %c0_4 = arith.constant 0 : index
    %3 = vector.load %arg3[%c0_3, %c0_4] : memref<1x1152xf32, #tpu.memory_space<vmem>>, vector<1x1152xf32>
    %4 = vector.broadcast %3 : vector<1x1152xf32> to vector<8x1152xf32>
    %5 = arith.addf %2, %4 : vector<8x1152xf32>
    %c0_5 = arith.constant 0 : index
    %c0_6 = arith.constant 0 : index
    %6 = vector.load %arg4[%c0_5, %c0_6] : memref<8x1152xf32, #tpu.memory_space<vmem>>, vector<8x1152xf32>
    tpu.vector_store %arg4[%c0_5, %c0_6], %5 {strides = array<i32>} : memref<8x1152xf32, #tpu.memory_space<vmem>>, vector<8x1152xf32>,
    return
  }
  func.func @transform_0(%arg0: i32) -> (i32, i32) {
    %c0_i32 = arith.constant 0 : i32
    %c0_i32_0 = arith.constant 0 : i32
    %c0_i32_1 = arith.constant 0 : i32
    return %c0_i32, %c0_i32_0 : i32, i32
  }
  func.func @transform_1(%arg0: i32) -> (i32, i32) {
    %c0_i32 = arith.constant 0 : i32
    %c0_i32_0 = arith.constant 0 : i32
    return %c0_i32, %arg0 : i32, i32
  }
  func.func @transform_2(%arg0: i32) -> (i32, i32) {
    %c0_i32 = arith.constant 0 : i32
    %c0_i32_0 = arith.constant 0 : i32
    return %c0_i32, %arg0 : i32, i32
  }
  func.func @transform_3(%arg0: i32) -> (i32, i32) {
    %c0_i32 = arith.constant 0 : i32
    %c0_i32_0 = arith.constant 0 : i32
    return %c0_i32, %arg0 : i32, i32
  }
}

</mosaic_0001>

<llo_original>
// kernel: tpu_custom_call.1
$region0: #{tpu_custom_call.1}
  #allocation0 [shape = 'u32[]', space=smem, size = 0x4, offset = 0x4, fixed_abs, tag = 'smem constant byte address 0x4 - core index']
  #allocation1 [shape = 'u32[72,128]{1,0:T(1,128)}', space=vmem, size = 0x9000, scoped, tag = 'internal scratch']
  %s0 = inlined_call_operand.hbm [shape: f32[8,144], index: 0, kind: input, shape index: {}]
  %s1 = inlined_call_operand.hbm [shape: f32[144,3456], index: 1, kind: input, shape index: {}]
  %s2 = inlined_call_operand.hbm [shape: f32[1,3456], index: 2, kind: input, shape index: {}]
  %s3 = inlined_call_operand.hbm [shape: f32[8,3456], index: 3, kind: output, shape index: {}]
  %s4 = sld [smem:[#allocation0]]
  $region57: #{tpu_custom_call.1} parent=0
    _
  %s6 = ssub.s32 1, %s4
  %s7 = scalar_select 0, %s6, %s4
  $region1: #{tpu_custom_call.1} parent=0
    #allocation2 [shape = 'u8[8192]{0}', space=vmem, size = 0x2000, scoped, tag = 'input window, operand 0, single buffered']
    #allocation3 [shape = 's32[2]{0}', space=sflag, size = 0x8, scoped, tag = 'scoped memory for tpu_custom_call.1']
    #allocation4 [shape = 's32[2]{0}', space=sflag, size = 0x8, scoped, tag = 'scoped memory for tpu_custom_call.1']
    #allocation5 [shape = 'u8[1327104]{0}', space=vmem, size = 0x144000, scoped, tag = 'input window, operand 1']
    #allocation6 [shape = 's32[2]{0}', space=sflag, size = 0x8, scoped, tag = 'scoped memory for tpu_custom_call.1']
    #allocation7 [shape = 'u8[9216]{0}', space=vmem, size = 0x2400, scoped, tag = 'input window, operand 2']
    #allocation8 [shape = 'u8[73728]{0}', space=vmem, size = 0x12000, scoped, tag = 'output window, operand 0']
    %8 = vsyncpa [#allocation3], 0
    %9 = vsyncpa [#allocation6], 0
    %s10 = scalar_lea.sflag [#allocation6], 1
    %11 = vsyncpa %s10, 0
    %12 = vsyncpa [#allocation4], 0
    %s13 = scalar_lea.sflag [#allocation4], 1
    %14 = vsyncpa %s13, 0
    loop: start=0, step=1, limit=5
    $region2: #{tpu_custom_call.1} parent=1 // loop_pre_header
      _
    $region3: #{tpu_custom_call.1} parent=1 // loop_header
      %s16 = sphi 0, %s20
      %p17 = scmp.ge.s32.totalorder %s16, 5
      %s24 = sphi 0, %s24
      %s26 = sphi 0, %s24
      %s27 = sphi 0, %s26
      %s41 = sphi 0, %s27
      %s47 = sphi 0, %s49
      %s50 = sphi 0, %s47
      %s51 = sphi 0, %s50
      %s67 = sphi 0, %s51
      %s73 = sphi 0, %s75
      %s76 = sphi 0, %s73
      %s77 = sphi 0, %s76
      %s93 = sphi 0, %s77
      %s99 = sphi 0, %s101
      %s102 = sphi 0, %s99
      %s103 = sphi 0, %s102
      %s119 = sphi 0, %s103
    $region4: #{tpu_custom_call.1} parent=1 // loop_header_branch
      %19 = sbr.rel (%p17) target = $region8
    $region5: #{tpu_custom_call.1} parent=1 // loop_body
      %s21 = ssub.s32 %s16, 1
      %s22 = ssub.s32 %s16, 2
      %s23 = sadd.s32 %s16, 1
      %s25 = sadd.s32 %s24, 1
      %p28 = scmp.eq.s32.totalorder %s16, 2
      %p29 = scmp.ne.s32.totalorder %s24, %s26
      %p30 = scmp.eq.s32.totalorder %s16, 0
      %p31 = por %p29, %p30
      %p32 = scmp.ne.s32.totalorder %s24, %s26
      %p33 = scmp.eq.s32.totalorder %s21, 2
      %p34 = por %p32, %p33
      %p35 = scmp.ne.s32.totalorder %s26, %s27
      %p36 = scmp.eq.s32.totalorder %s21, 0
      %p37 = por %p35, %p36
      %p38 = scmp.ne.s32.totalorder %s26, %s27
      %p39 = scmp.eq.s32.totalorder %s22, 2
      %p40 = por %p38, %p39
      %p42 = scmp.ne.s32.totalorder %s27, %s41
      %p43 = scmp.eq.s32.totalorder %s22, 0
      %p44 = por %p42, %p43
      %s45 = ssub.s32 %s16, %s23
      %p46 = scmp.eq.s32.totalorder %s45, 0
      %s48 = sadd.s32 %s47, 1
      %s49 = scalar_select %p46, %s47, %s48
      %p52 = pneg %p46
      %p53 = scmp.eq.s32.totalorder %s16, 2
      %p54 = por %p52, %p53
      %p55 = scmp.ne.s32.totalorder %s47, %s50
      %p56 = scmp.eq.s32.totalorder %s16, 0
      %p57 = por %p55, %p56
      %p58 = scmp.ne.s32.totalorder %s47, %s50
      %p59 = scmp.eq.s32.totalorder %s21, 2
      %p60 = por %p58, %p59
      %p61 = scmp.ne.s32.totalorder %s50, %s51
      %p62 = scmp.eq.s32.totalorder %s21, 0
      %p63 = por %p61, %p62
      %p64 = scmp.ne.s32.totalorder %s50, %s51
      %p65 = scmp.eq.s32.totalorder %s22, 2
      %p66 = por %p64, %p65
      %p68 = scmp.ne.s32.totalorder %s51, %s67
      %p69 = scmp.eq.s32.totalorder %s22, 0
      %p70 = por %p68, %p69
      %s71 = ssub.s32 %s16, %s23
      %p72 = scmp.eq.s32.totalorder %s71, 0
      %s74 = sadd.s32 %s73, 1
      %s75 = scalar_select %p72, %s73, %s74
      %p78 = pneg %p72
      %p79 = scmp.eq.s32.totalorder %s16, 2
      %p80 = por %p78, %p79
      %p81 = scmp.ne.s32.totalorder %s73, %s76
      %p82 = scmp.eq.s32.totalorder %s16, 0
      %p83 = por %p81, %p82
      %p84 = scmp.ne.s32.totalorder %s73, %s76
      %p85 = scmp.eq.s32.totalorder %s21, 2
      %p86 = por %p84, %p85
      %p87 = scmp.ne.s32.totalorder %s76, %s77
      %p88 = scmp.eq.s32.totalorder %s21, 0
      %p89 = por %p87, %p88
      %p90 = scmp.ne.s32.totalorder %s76, %s77
      %p91 = scmp.eq.s32.totalorder %s22, 2
      %p92 = por %p90, %p91
      %p94 = scmp.ne.s32.totalorder %s77, %s93
      %p95 = scmp.eq.s32.totalorder %s22, 0
      %p96 = por %p94, %p95
      %s97 = ssub.s32 %s16, %s23
      %p98 = scmp.eq.s32.totalorder %s97, 0
      %s100 = sadd.s32 %s99, 1
      %s101 = scalar_select %p98, %s99, %s100
      %p104 = pneg %p98
      %p105 = scmp.eq.s32.totalorder %s16, 2
      %p106 = por %p104, %p105
      %p107 = scmp.ne.s32.totalorder %s99, %s102
      %p108 = scmp.eq.s32.totalorder %s16, 0
      %p109 = por %p107, %p108
      %p110 = scmp.ne.s32.totalorder %s99, %s102
      %p111 = scmp.eq.s32.totalorder %s21, 2
      %p112 = por %p110, %p111
      %p113 = scmp.ne.s32.totalorder %s102, %s103
      %p114 = scmp.eq.s32.totalorder %s21, 0
      %p115 = por %p113, %p114
      %p116 = scmp.ne.s32.totalorder %s102, %s103
      %p117 = scmp.eq.s32.totalorder %s22, 2
      %p118 = por %p116, %p117
      %p120 = scmp.ne.s32.totalorder %s103, %s119
      %p121 = scmp.eq.s32.totalorder %s22, 0
      %p122 = por %p120, %p121
      %p123 = scmp.le.s32.totalorder 1, %s16
      %p124 = scmp.lt.s32.totalorder %s16, 4
      %p125 = pnand %p123, %p124
      %p126 = pneg %p125
      // Predicated region
      $region9: #{tpu_custom_call.1} parent=5 // pred_check
        _
      $region10: #{tpu_custom_call.1} parent=5 // pred_check_branch
        %128 = sbr.rel (%p125) target = $region12
      $region11: #{tpu_custom_call.1} parent=5 // pred_region
        %s129 = ssub.s32 %s16, 1
        // Predicated region
        $region13: #{tpu_custom_call.1} parent=11 // pred_check
          %p130 = pneg %p37
        $region14: #{tpu_custom_call.1} parent=11 // pred_check_branch
          %132 = sbr.rel (%p130) target = $region16
        $region15: #{tpu_custom_call.1} parent=11 // pred_region
          %134 = vsyncadd [#allocation3], 0
          %s136 = sshll.u32 %s0, 4
          %s137 = int_to_ptr.hbm [resolvable:$true] %s136
          %s138 = sshll.u32 [#allocation2], 4
          %s139 = int_to_ptr.vmem [resolvable:$true] %s138
          %141 = dma.hbm_to_vmem [thread:$0]  %s137, 256, %s139, [#allocation3]
        $region16: #{tpu_custom_call.1} parent=11 // pred_fallthru
          _
      $region12: #{tpu_custom_call.1} parent=5 // pred_fallthru
        _
      %p142 = scmp.lt.s32.totalorder %s16, 3
      // Predicated region
      $region17: #{tpu_custom_call.1} parent=5 // pred_check
        %p143 = pneg %p142
      $region18: #{tpu_custom_call.1} parent=5 // pred_check_branch
        %145 = sbr.rel (%p143) target = $region20
      $region19: #{tpu_custom_call.1} parent=5 // pred_region
        // Predicated region
        $region21: #{tpu_custom_call.1} parent=19 // pred_check
          %p146 = pneg %p57
        $region22: #{tpu_custom_call.1} parent=19 // pred_check_branch
          %148 = sbr.rel (%p146) target = $region24
        $region23: #{tpu_custom_call.1} parent=19 // pred_region
          %s149 = sand.u32 %s16, 1
          %s150 = scalar_lea.sflag [#allocation6], %s149
          %s151 = sand.u32 %s47, 1
          %s152 = smul.addr %s151, 1296
          %s153 = scalar_lea.vmem [#allocation5], %s152
          %s154 = smul.u32 9, %s16
          %156 = vsyncadd %s150, 0
          %s157 = smul.addr %s154, 8
          %s158 = scalar_lea.hbm %s1, %s157
          %s159 = sshll.u32 %s158, 4
          %s160 = int_to_ptr.hbm [resolvable:$true] %s159
          %s161 = sshll.u32 %s153, 4
          %s162 = int_to_ptr.vmem [resolvable:$true] %s161
          %167 = dma.hbm_to_vmem [thread:$0]  %s160, 20736, %s162, %s150, 3456, 1152, 72
        $region24: #{tpu_custom_call.1} parent=19 // pred_fallthru
          _
        // Predicated region
        $region25: #{tpu_custom_call.1} parent=19 // pred_check
          %p168 = pneg %p83
        $region26: #{tpu_custom_call.1} parent=19 // pred_check_branch
          %170 = sbr.rel (%p168) target = $region28
        $region27: #{tpu_custom_call.1} parent=19 // pred_region
          %s171 = sand.u32 %s16, 1
          %s172 = scalar_lea.sflag [#allocation6], %s171
          %s173 = sand.u32 %s73, 1
          %s174 = smul.addr %s173, 9
          %s175 = scalar_lea.vmem [#allocation7], %s174
          %s176 = smul.u32 9, %s16
          %178 = vsyncadd %s172, 0
          %s179 = scalar_lea.hbm %s2, %s176
          %s181 = sshll.u32 %s179, 4
          %s182 = int_to_ptr.hbm [resolvable:$true] %s181
          %s183 = sshll.u32 %s175, 4
          %s184 = int_to_ptr.vmem [resolvable:$true] %s183
          %186 = dma.hbm_to_vmem [thread:$0]  %s182, 144, %s184, %s172
        $region28: #{tpu_custom_call.1} parent=19 // pred_fallthru
          _
      $region20: #{tpu_custom_call.1} parent=5 // pred_fallthru
        _
      %p187 = scmp.le.s32.totalorder 1, %s16
      %p188 = scmp.lt.s32.totalorder %s16, 4
      %p189 = pnand %p187, %p188
      %p190 = pneg %p189
      // Predicated region
      $region29: #{tpu_custom_call.1} parent=5 // pred_check
        _
      $region30: #{tpu_custom_call.1} parent=5 // pred_check_branch
        %192 = sbr.rel (%p189) target = $region32
      $region31: #{tpu_custom_call.1} parent=5 // pred_region
        %s193 = ssub.s32 %s16, 1
        // Predicated region
        $region33: #{tpu_custom_call.1} parent=31 // pred_check
          %p194 = pneg %p37
        $region34: #{tpu_custom_call.1} parent=31 // pred_check_branch
          %196 = sbr.rel (%p194) target = $region36
        $region35: #{tpu_custom_call.1} parent=31 // pred_region
          %198 = dma.done [#allocation3], 256
        $region36: #{tpu_custom_call.1} parent=31 // pred_fallthru
          _
        %s199 = sand.u32 %s21, 1
        %s200 = scalar_lea.sflag [#allocation6], %s199
        %s201 = sand.u32 %s50, 1
        %s202 = smul.addr %s201, 1296
        %s203 = scalar_lea.vmem [#allocation5], %s202
        // Predicated region
        $region37: #{tpu_custom_call.1} parent=31 // pred_check
          %p204 = pneg %p63
        $region38: #{tpu_custom_call.1} parent=31 // pred_check_branch
          %206 = sbr.rel (%p204) target = $region40
        $region39: #{tpu_custom_call.1} parent=31 // pred_region
          %208 = dma.done %s200, 20736
        $region40: #{tpu_custom_call.1} parent=31 // pred_fallthru
          _
        %s209 = sand.u32 %s21, 1
        %s210 = scalar_lea.sflag [#allocation6], %s209
        %s211 = sand.u32 %s76, 1
        %s212 = smul.addr %s211, 9
        %s213 = scalar_lea.vmem [#allocation7], %s212
        // Predicated region
        $region41: #{tpu_custom_call.1} parent=31 // pred_check
          %p214 = pneg %p89
        $region42: #{tpu_custom_call.1} parent=31 // pred_check_branch
          %216 = sbr.rel (%p214) target = $region44
        $region43: #{tpu_custom_call.1} parent=31 // pred_region
          %218 = dma.done %s210, 144
        $region44: #{tpu_custom_call.1} parent=31 // pred_fallthru
          _
        %p219 = pneg %p37
        %p220 = pneg %p34
        %s221 = sand.u32 %s21, 1
        %s222 = scalar_lea.sflag [#allocation6], %s221
        %s223 = sand.u32 %s50, 1
        %s224 = smul.addr %s223, 1296
        %s225 = scalar_lea.vmem [#allocation5], %s224
        %p226 = pneg %p63
        %p227 = pneg %p60
        %s228 = sand.u32 %s21, 1
        %s229 = scalar_lea.sflag [#allocation6], %s228
        %s230 = sand.u32 %s76, 1
        %s231 = smul.addr %s230, 9
        %s232 = scalar_lea.vmem [#allocation7], %s231
        %p233 = pneg %p89
        %p234 = pneg %p86
        %p235 = pneg %p115
        %p236 = pneg %p112
        %s237 = sand.u32 %s102, 1
        %s238 = scalar_lea.sflag [#allocation4], %s237
        %s239 = sand.u32 %s102, 1
        %s240 = smul.addr %s239, 72
        %s241 = scalar_lea.vmem [#allocation8], %s240
        %s242 = smul.u32 9, %s21
        %s243 = smul.u32 9, %s21
        %s244 = smul.u32 9, %s21
        %v245 = vld [vmem:[#allocation2] sm:$0xff]
        %v246 = vld [vmem:[#allocation2 + $0x8] sm:$0xff]
        %v247 = vld [vmem:[%s203] sm:$0xff]
        %v248 = vld [vmem:[%s203 + $0x8] sm:$0xff]
        %v249 = vld [vmem:[%s203 + $0x10] sm:$0xff]
        %v250 = vld [vmem:[%s203 + $0x18] sm:$0xff]
        %v251 = vld [vmem:[%s203 + $0x20] sm:$0xff]
        %v252 = vld [vmem:[%s203 + $0x28] sm:$0xff]
        %v253 = vld [vmem:[%s203 + $0x30] sm:$0xff]
        %v254 = vld [vmem:[%s203 + $0x38] sm:$0xff]
        %v255 = vld [vmem:[%s203 + $0x40] sm:$0xff]
        %v256 = vld [vmem:[%s203 + $0x48] sm:$0xff]
        %v257 = vld [vmem:[%s203 + $0x50] sm:$0xff]
        %v258 = vld [vmem:[%s203 + $0x58] sm:$0xff]
        %v259 = vld [vmem:[%s203 + $0x60] sm:$0xff]
        %v260 = vld [vmem:[%s203 + $0x68] sm:$0xff]
        %v261 = vld [vmem:[%s203 + $0x70] sm:$0xff]
        %v262 = vld [vmem:[%s203 + $0x78] sm:$0xff]
        %v263 = vld [vmem:[%s203 + $0x80] sm:$0xff]
        %v264 = vld [vmem:[%s203 + $0x88] sm:$0xff]
        %v265 = vld [vmem:[%s203 + $0x90] sm:$0xff]
        %v266 = vld [vmem:[%s203 + $0x98] sm:$0xff]
        %v267 = vld [vmem:[%s203 + $0xa0] sm:$0xff]
        %v268 = vld [vmem:[%s203 + $0xa8] sm:$0xff]
        %v269 = vld [vmem:[%s203 + $0xb0] sm:$0xff]
        %v270 = vld [vmem:[%s203 + $0xb8] sm:$0xff]
        %v271 = vld [vmem:[%s203 + $0xc0] sm:$0xff]
        %v272 = vld [vmem:[%s203 + $0xc8] sm:$0xff]
        %v273 = vld [vmem:[%s203 + $0xd0] sm:$0xff]
        %v274 = vld [vmem:[%s203 + $0xd8] sm:$0xff]
        %v275 = vld [vmem:[%s203 + $0xe0] sm:$0xff]
        %v276 = vld [vmem:[%s203 + $0xe8] sm:$0xff]
        %v277 = vld [vmem:[%s203 + $0xf0] sm:$0xff]
        %v278 = vld [vmem:[%s203 + $0xf8] sm:$0xff]
        %v279 = vld [vmem:[%s203 + $0x100] sm:$0xff]
        %v280 = vld [vmem:[%s203 + $0x108] sm:$0xff]
        %v281 = vld [vmem:[%s203 + $0x110] sm:$0xff]
        %v282 = vld [vmem:[%s203 + $0x118] sm:$0xff]
        %v283 = vld [vmem:[%s203 + $0x120] sm:$0xff]
        %v284 = vld [vmem:[%s203 + $0x128] sm:$0xff]
        %v285 = vld [vmem:[%s203 + $0x130] sm:$0xff]
        %v286 = vld [vmem:[%s203 + $0x138] sm:$0xff]
        %v287 = vld [vmem:[%s203 + $0x140] sm:$0xff]
        %v288 = vld [vmem:[%s203 + $0x148] sm:$0xff]
        %v289 = vld [vmem:[%s203 + $0x150] sm:$0xff]
        %v290 = vld [vmem:[%s203 + $0x158] sm:$0xff]
        %v291 = vld [vmem:[%s203 + $0x160] sm:$0xff]
        %v292 = vld [vmem:[%s203 + $0x168] sm:$0xff]
        %v293 = vld [vmem:[%s203 + $0x170] sm:$0xff]
        %v294 = vld [vmem:[%s203 + $0x178] sm:$0xff]
        %v295 = vld [vmem:[%s203 + $0x180] sm:$0xff]
        %v296 = vld [vmem:[%s203 + $0x188] sm:$0xff]
        %v297 = vld [vmem:[%s203 + $0x190] sm:$0xff]
        %v298 = vld [vmem:[%s203 + $0x198] sm:$0xff]
        %v299 = vld [vmem:[%s203 + $0x1a0] sm:$0xff]
        %v300 = vld [vmem:[%s203 + $0x1a8] sm:$0xff]
        %v301 = vld [vmem:[%s203 + $0x1b0] sm:$0xff]
        %v302 = vld [vmem:[%s203 + $0x1b8] sm:$0xff]
        %v303 = vld [vmem:[%s203 + $0x1c0] sm:$0xff]
        %v304 = vld [vmem:[%s203 + $0x1c8] sm:$0xff]
        %v305 = vld [vmem:[%s203 + $0x1d0] sm:$0xff]
        %v306 = vld [vmem:[%s203 + $0x1d8] sm:$0xff]
        %v307 = vld [vmem:[%s203 + $0x1e0] sm:$0xff]
        %v308 = vld [vmem:[%s203 + $0x1e8] sm:$0xff]
        %v309 = vld [vmem:[%s203 + $0x1f0] sm:$0xff]
        %v310 = vld [vmem:[%s203 + $0x1f8] sm:$0xff]
        %v311 = vld [vmem:[%s203 + $0x200] sm:$0xff]
        %v312 = vld [vmem:[%s203 + $0x208] sm:$0xff]
        %v313 = vld [vmem:[%s203 + $0x210] sm:$0xff]
        %v314 = vld [vmem:[%s203 + $0x218] sm:$0xff]
        %v315 = vld [vmem:[%s203 + $0x220] sm:$0xff]
        %v316 = vld [vmem:[%s203 + $0x228] sm:$0xff]
        %v317 = vld [vmem:[%s203 + $0x230] sm:$0xff]
        %v318 = vld [vmem:[%s203 + $0x238] sm:$0xff]
        %v319 = vld [vmem:[%s203 + $0x240] sm:$0xff]
        %v320 = vld [vmem:[%s203 + $0x248] sm:$0xff]
        %v321 = vld [vmem:[%s203 + $0x250] sm:$0xff]
        %v322 = vld [vmem:[%s203 + $0x258] sm:$0xff]
        %v323 = vld [vmem:[%s203 + $0x260] sm:$0xff]
        %v324 = vld [vmem:[%s203 + $0x268] sm:$0xff]
        %v325 = vld [vmem:[%s203 + $0x270] sm:$0xff]
        %v326 = vld [vmem:[%s203 + $0x278] sm:$0xff]
        %v327 = vld [vmem:[%s203 + $0x280] sm:$0xff]
        %v328 = vld [vmem:[%s203 + $0x288] sm:$0xff]
        %v329 = vld [vmem:[%s203 + $0x290] sm:$0xff]
        %v330 = vld [vmem:[%s203 + $0x298] sm:$0xff]
        %v331 = vld [vmem:[%s203 + $0x2a0] sm:$0xff]
        %v332 = vld [vmem:[%s203 + $0x2a8] sm:$0xff]
        %v333 = vld [vmem:[%s203 + $0x2b0] sm:$0xff]
        %v334 = vld [vmem:[%s203 + $0x2b8] sm:$0xff]
        %v335 = vld [vmem:[%s203 + $0x2c0] sm:$0xff]
        %v336 = vld [vmem:[%s203 + $0x2c8] sm:$0xff]
        %v337 = vld [vmem:[%s203 + $0x2d0] sm:$0xff]
        %v338 = vld [vmem:[%s203 + $0x2d8] sm:$0xff]
        %v339 = vld [vmem:[%s203 + $0x2e0] sm:$0xff]
        %v340 = vld [vmem:[%s203 + $0x2e8] sm:$0xff]
        %v341 = vld [vmem:[%s203 + $0x2f0] sm:$0xff]
        %v342 = vld [vmem:[%s203 + $0x2f8] sm:$0xff]
        %v343 = vld [vmem:[%s203 + $0x300] sm:$0xff]
        %v344 = vld [vmem:[%s203 + $0x308] sm:$0xff]
        %v345 = vld [vmem:[%s203 + $0x310] sm:$0xff]
        %v346 = vld [vmem:[%s203 + $0x318] sm:$0xff]
        %v347 = vld [vmem:[%s203 + $0x320] sm:$0xff]
        %v348 = vld [vmem:[%s203 + $0x328] sm:$0xff]
        %v349 = vld [vmem:[%s203 + $0x330] sm:$0xff]
        %v350 = vld [vmem:[%s203 + $0x338] sm:$0xff]
        %v351 = vld [vmem:[%s203 + $0x340] sm:$0xff]
        %v352 = vld [vmem:[%s203 + $0x348] sm:$0xff]
        %v353 = vld [vmem:[%s203 + $0x350] sm:$0xff]
        %v354 = vld [vmem:[%s203 + $0x358] sm:$0xff]
        %v355 = vld [vmem:[%s203 + $0x360] sm:$0xff]
        %v356 = vld [vmem:[%s203 + $0x368] sm:$0xff]
        %v357 = vld [vmem:[%s203 + $0x370] sm:$0xff]
        %v358 = vld [vmem:[%s203 + $0x378] sm:$0xff]
        %v359 = vld [vmem:[%s203 + $0x380] sm:$0xff]
        %v360 = vld [vmem:[%s203 + $0x388] sm:$0xff]
        %v361 = vld [vmem:[%s203 + $0x390] sm:$0xff]
        %v362 = vld [vmem:[%s203 + $0x398] sm:$0xff]
        %v363 = vld [vmem:[%s203 + $0x3a0] sm:$0xff]
        %v364 = vld [vmem:[%s203 + $0x3a8] sm:$0xff]
        %v365 = vld [vmem:[%s203 + $0x3b0] sm:$0xff]
        %v366 = vld [vmem:[%s203 + $0x3b8] sm:$0xff]
        %v367 = vld [vmem:[%s203 + $0x3c0] sm:$0xff]
        %v368 = vld [vmem:[%s203 + $0x3c8] sm:$0xff]
        %v369 = vld [vmem:[%s203 + $0x3d0] sm:$0xff]
        %v370 = vld [vmem:[%s203 + $0x3d8] sm:$0xff]
        %v371 = vld [vmem:[%s203 + $0x3e0] sm:$0xff]
        %v372 = vld [vmem:[%s203 + $0x3e8] sm:$0xff]
        %v373 = vld [vmem:[%s203 + $0x3f0] sm:$0xff]
        %v374 = vld [vmem:[%s203 + $0x3f8] sm:$0xff]
        %v375 = vld [vmem:[%s203 + $0x400] sm:$0xff]
        %v376 = vld [vmem:[%s203 + $0x408] sm:$0xff]
        %v377 = vld [vmem:[%s203 + $0x410] sm:$0xff]
        %v378 = vld [vmem:[%s203 + $0x418] sm:$0xff]
        %v379 = vld [vmem:[%s203 + $0x420] sm:$0xff]
        %v380 = vld [vmem:[%s203 + $0x428] sm:$0xff]
        %v381 = vld [vmem:[%s203 + $0x430] sm:$0xff]
        %v382 = vld [vmem:[%s203 + $0x438] sm:$0xff]
        %v383 = vld [vmem:[%s203 + $0x440] sm:$0xff]
        %v384 = vld [vmem:[%s203 + $0x448] sm:$0xff]
        %v385 = vld [vmem:[%s203 + $0x450] sm:$0xff]
        %v386 = vld [vmem:[%s203 + $0x458] sm:$0xff]
        %v387 = vld [vmem:[%s203 + $0x460] sm:$0xff]
        %v388 = vld [vmem:[%s203 + $0x468] sm:$0xff]
        %v389 = vld [vmem:[%s203 + $0x470] sm:$0xff]
        %v390 = vld [vmem:[%s203 + $0x478] sm:$0xff]
        %v391 = vld [vmem:[%s203 + $0x480] sm:$0xff]
        %v392 = vld [vmem:[%s203 + $0x488] sm:$0xff]
        %v393 = vld [vmem:[%s203 + $0x490] sm:$0xff]
        %v394 = vld [vmem:[%s203 + $0x498] sm:$0xff]
        %v395 = vld [vmem:[%s203 + $0x4a0] sm:$0xff]
        %v396 = vld [vmem:[%s203 + $0x4a8] sm:$0xff]
        %v397 = vld [vmem:[%s203 + $0x4b0] sm:$0xff]
        %v398 = vld [vmem:[%s203 + $0x4b8] sm:$0xff]
        %v399 = vld [vmem:[%s203 + $0x4c0] sm:$0xff]
        %v400 = vld [vmem:[%s203 + $0x4c8] sm:$0xff]
        %v401 = vld [vmem:[%s203 + $0x4d0] sm:$0xff]
        %v402 = vld [vmem:[%s203 + $0x4d8] sm:$0xff]
        %v403 = vld [vmem:[%s203 + $0x4e0] sm:$0xff]
        %v404 = vld [vmem:[%s203 + $0x4e8] sm:$0xff]
        %v405 = vld [vmem:[%s203 + $0x4f0] sm:$0xff]
        %v406 = vld [vmem:[%s203 + $0x4f8] sm:$0xff]
        %v407 = vld [vmem:[%s203 + $0x500] sm:$0xff]
        %v408 = vld [vmem:[%s203 + $0x508] sm:$0xff]
        %v409 = vld [vmem:[%s213] sm:$0xff]
        %v410 = vld [vmem:[%s213 + $0x8] sm:$0x1]
        %v413 = vperm.slane %v409, 0
        %v414 = vperm.slane %v409, 1
        %v415 = vperm.slane %v409, 2
        %v416 = vperm.slane %v409, 3
        %v417 = vperm.slane %v409, 4
        %v418 = vperm.slane %v409, 5
        %v419 = vperm.slane %v409, 6
        %v420 = vperm.slane %v409, 7
        %v421 = vperm.slane %v410, 0
        %vm431 = vcmask 130048
        %v433 = vsel %vm431, %v246, 0
        %v435 = vand.u32 %v382, 4294901760
        %436 = vmatpush.msra.mxu0 %v435
        %v437 = vand.u32 %v373, 4294901760
        %438 = vmatpush.msra.mxu0 %v437
        %v439 = vand.u32 %v364, 4294901760
        %440 = vmatpush.msra.mxu0 %v439
        %v441 = vand.u32 %v355, 4294901760
        %442 = vmatpush.msra.mxu0 %v441
        %v443 = vand.u32 %v346, 4294901760
        %444 = vmatpush.msra.mxu0 %v443
        %v445 = vand.u32 %v337, 4294901760
        %446 = vmatpush.msra.mxu0 %v445
        %v447 = vand.u32 %v328, 4294901760
        %448 = vmatpush.msra.mxu0 %v447
        %v449 = vand.u32 %v319, 4294901760
        %450 = vmatpush.msra.mxu0 %v449
        %v451 = vand.u32 %v310, 4294901760
        %452 = vmatpush.msra.mxu0 %v451
        %v453 = vand.u32 %v301, 4294901760
        %454 = vmatpush.msra.mxu0 %v453
        %v455 = vand.u32 %v292, 4294901760
        %456 = vmatpush.msra.mxu0 %v455
        %v457 = vand.u32 %v283, 4294901760
        %458 = vmatpush.msra.mxu0 %v457
        %v459 = vand.u32 %v274, 4294901760
        %460 = vmatpush.msra.mxu0 %v459
        %v461 = vand.u32 %v265, 4294901760
        %462 = vmatpush.msra.mxu0 %v461
        %v463 = vand.u32 %v256, 4294901760
        %464 = vmatpush.msra.mxu0 %v463
        %v465 = vand.u32 %v247, 4294901760
        %466 = vmatpush.msra.mxu0 %v465
        %v467 = vand.u32 %v245, 4294901760
        %v468 = vsub.f32 %v245, %v467
        %v469 = vand.u32 %v468, 4294901760
        %v470 = vsub.f32 %v468, %v469
        %v471 = vand.u32 %v470, 4294901760
        %472 = vmatmul.f32.gmra.mxu0 %v471
        %v473 = vpop.f32.mrf.mxu0
        %v474 = vadd.f32 %v413, %v473
        %475 = vdwg.mxu0
        %v476 = vand.u32 %v382, 4294901760
        %v477 = vsub.f32 %v382, %v476
        %v478 = vand.u32 %v477, 4294901760
        %v479 = vsub.f32 %v477, %v478
        %v480 = vand.u32 %v479, 4294901760
        %481 = vmatpush.msra.mxu0 %v480
        %v482 = vand.u32 %v373, 4294901760
        %v483 = vsub.f32 %v373, %v482
        %v484 = vand.u32 %v483, 4294901760
        %v485 = vsub.f32 %v483, %v484
        %v486 = vand.u32 %v485, 4294901760
        %487 = vmatpush.msra.mxu0 %v486
        %v488 = vand.u32 %v364, 4294901760
        %v489 = vsub.f32 %v364, %v488
        %v490 = vand.u32 %v489, 4294901760
        %v491 = vsub.f32 %v489, %v490
        %v492 = vand.u32 %v491, 4294901760
        %493 = vmatpush.msra.mxu0 %v492
        %v494 = vand.u32 %v355, 4294901760
        %v495 = vsub.f32 %v355, %v494
        %v496 = vand.u32 %v495, 4294901760
        %v497 = vsub.f32 %v495, %v496
        %v498 = vand.u32 %v497, 4294901760
        %499 = vmatpush.msra.mxu0 %v498
        %v500 = vand.u32 %v346, 4294901760
        %v501 = vsub.f32 %v346, %v500
        %v502 = vand.u32 %v501, 4294901760
        %v503 = vsub.f32 %v501, %v502
        %v504 = vand.u32 %v503, 4294901760
        %505 = vmatpush.msra.mxu0 %v504
        %v506 = vand.u32 %v337, 4294901760
        %v507 = vsub.f32 %v337, %v506
        %v508 = vand.u32 %v507, 4294901760
        %v509 = vsub.f32 %v507, %v508
        %v510 = vand.u32 %v509, 4294901760
        %511 = vmatpush.msra.mxu0 %v510
        %v512 = vand.u32 %v328, 4294901760
        %v513 = vsub.f32 %v328, %v512
        %v514 = vand.u32 %v513, 4294901760
        %v515 = vsub.f32 %v513, %v514
        %v516 = vand.u32 %v515, 4294901760
        %517 = vmatpush.msra.mxu0 %v516
        %v518 = vand.u32 %v319, 4294901760
        %v519 = vsub.f32 %v319, %v518
        %v520 = vand.u32 %v519, 4294901760
        %v521 = vsub.f32 %v519, %v520
        %v522 = vand.u32 %v521, 4294901760
        %523 = vmatpush.msra.mxu0 %v522
        %v524 = vand.u32 %v310, 4294901760
        %v525 = vsub.f32 %v310, %v524
        %v526 = vand.u32 %v525, 4294901760
        %v527 = vsub.f32 %v525, %v526
        %v528 = vand.u32 %v527, 4294901760
        %529 = vmatpush.msra.mxu0 %v528
        %v530 = vand.u32 %v301, 4294901760
        %v531 = vsub.f32 %v301, %v530
        %v532 = vand.u32 %v531, 4294901760
        %v533 = vsub.f32 %v531, %v532
        %v534 = vand.u32 %v533, 4294901760
        %535 = vmatpush.msra.mxu0 %v534
        %v536 = vand.u32 %v292, 4294901760
        %v537 = vsub.f32 %v292, %v536
        %v538 = vand.u32 %v537, 4294901760
        %v539 = vsub.f32 %v537, %v538
        %v540 = vand.u32 %v539, 4294901760
        %541 = vmatpush.msra.mxu0 %v540
        %v542 = vand.u32 %v283, 4294901760
        %v543 = vsub.f32 %v283, %v542
        %v544 = vand.u32 %v543, 4294901760
        %v545 = vsub.f32 %v543, %v544
        %v546 = vand.u32 %v545, 4294901760
        %547 = vmatpush.msra.mxu0 %v546
        %v548 = vand.u32 %v274, 4294901760
        %v549 = vsub.f32 %v274, %v548
        %v550 = vand.u32 %v549, 4294901760
        %v551 = vsub.f32 %v549, %v550
        %v552 = vand.u32 %v551, 4294901760
        %553 = vmatpush.msra.mxu0 %v552
        %v554 = vand.u32 %v265, 4294901760
        %v555 = vsub.f32 %v265, %v554
        %v556 = vand.u32 %v555, 4294901760
        %v557 = vsub.f32 %v555, %v556
        %v558 = vand.u32 %v557, 4294901760
        %559 = vmatpush.msra.mxu0 %v558
        %v560 = vand.u32 %v256, 4294901760
        %v561 = vsub.f32 %v256, %v560
        %v562 = vand.u32 %v561, 4294901760
        %v563 = vsub.f32 %v561, %v562
        %v564 = vand.u32 %v563, 4294901760
        %565 = vmatpush.msra.mxu0 %v564
        %v566 = vand.u32 %v247, 4294901760
        %v567 = vsub.f32 %v247, %v566
        %v568 = vand.u32 %v567, 4294901760
        %v569 = vsub.f32 %v567, %v568
        %v570 = vand.u32 %v569, 4294901760
        %571 = vmatpush.msra.mxu0 %v570
        %v572 = vand.u32 %v245, 4294901760
        %573 = vmatmul.f32.gmra.mxu0 %v572
        %v574 = vpop.f32.mrf.mxu0
        %v575 = vadd.f32 %v474, %v574
        %576 = vdwg.mxu0
        %v577 = vand.u32 %v382, 4294901760
        %v578 = vsub.f32 %v382, %v577
        %579 = vmatpush.msra.mxu0 %v578
        %v580 = vand.u32 %v373, 4294901760
        %v581 = vsub.f32 %v373, %v580
        %582 = vmatpush.msra.mxu0 %v581
        %v583 = vand.u32 %v364, 4294901760
        %v584 = vsub.f32 %v364, %v583
        %585 = vmatpush.msra.mxu0 %v584
        %v586 = vand.u32 %v355, 4294901760
        %v587 = vsub.f32 %v355, %v586
        %588 = vmatpush.msra.mxu0 %v587
        %v589 = vand.u32 %v346, 4294901760
        %v590 = vsub.f32 %v346, %v589
        %591 = vmatpush.msra.mxu0 %v590
        %v592 = vand.u32 %v337, 4294901760
        %v593 = vsub.f32 %v337, %v592
        %594 = vmatpush.msra.mxu0 %v593
        %v595 = vand.u32 %v328, 4294901760
        %v596 = vsub.f32 %v328, %v595
        %597 = vmatpush.msra.mxu0 %v596
        %v598 = vand.u32 %v319, 4294901760
        %v599 = vsub.f32 %v319, %v598
        %600 = vmatpush.msra.mxu0 %v599
        %v601 = vand.u32 %v310, 4294901760
        %v602 = vsub.f32 %v310, %v601
        %603 = vmatpush.msra.mxu0 %v602
        %v604 = vand.u32 %v301, 4294901760
        %v605 = vsub.f32 %v301, %v604
        %606 = vmatpush.msra.mxu0 %v605
        %v607 = vand.u32 %v292, 4294901760
        %v608 = vsub.f32 %v292, %v607
        %609 = vmatpush.msra.mxu0 %v608
        %v610 = vand.u32 %v283, 4294901760
        %v611 = vsub.f32 %v283, %v610
        %612 = vmatpush.msra.mxu0 %v611
        %v613 = vand.u32 %v274, 4294901760
        %v614 = vsub.f32 %v274, %v613
        %615 = vmatpush.msra.mxu0 %v614
        %v616 = vand.u32 %v265, 4294901760
        %v617 = vsub.f32 %v265, %v616
        %618 = vmatpush.msra.mxu0 %v617
        %v619 = vand.u32 %v256, 4294901760
        %v620 = vsub.f32 %v256, %v619
        %621 = vmatpush.msra.mxu0 %v620
        %v622 = vand.u32 %v247, 4294901760
        %v623 = vsub.f32 %v247, %v622
        %624 = vmatpush.msra.mxu0 %v623
        %v625 = vand.u32 %v245, 4294901760
        %v626 = vsub.f32 %v245, %v625
        %627 = vmatmul.f32.gmra.mxu0 %v626
        %v628 = vpop.f32.mrf.mxu0
        %v629 = vadd.f32 %v575, %v628
        %630 = vdwg.mxu0
        %v631 = vand.u32 %v382, 4294901760
        %632 = vmatpush.msra.mxu0 %v631
        %v633 = vand.u32 %v373, 4294901760
        %634 = vmatpush.msra.mxu0 %v633
        %v635 = vand.u32 %v364, 4294901760
        %636 = vmatpush.msra.mxu0 %v635
        %v637 = vand.u32 %v355, 4294901760
        %638 = vmatpush.msra.mxu0 %v637
        %v639 = vand.u32 %v346, 4294901760
        %640 = vmatpush.msra.mxu0 %v639
        %v641 = vand.u32 %v337, 4294901760
        %642 = vmatpush.msra.mxu0 %v641
        %v643 = vand.u32 %v328, 4294901760
        %644 = vmatpush.msra.mxu0 %v643
        %v645 = vand.u32 %v319, 4294901760
        %646 = vmatpush.msra.mxu0 %v645
        %v647 = vand.u32 %v310, 4294901760
        %648 = vmatpush.msra.mxu0 %v647
        %v649 = vand.u32 %v301, 4294901760
        %650 = vmatpush.msra.mxu0 %v649
        %v651 = vand.u32 %v292, 4294901760
        %652 = vmatpush.msra.mxu0 %v651
        %v653 = vand.u32 %v283, 4294901760
        %654 = vmatpush.msra.mxu0 %v653
        %v655 = vand.u32 %v274, 4294901760
        %656 = vmatpush.msra.mxu0 %v655
        %v657 = vand.u32 %v265, 4294901760
        %658 = vmatpush.msra.mxu0 %v657
        %v659 = vand.u32 %v256, 4294901760
        %660 = vmatpush.msra.mxu0 %v659
        %v661 = vand.u32 %v247, 4294901760
        %662 = vmatpush.msra.mxu0 %v661
        %v663 = vand.u32 %v245, 4294901760
        %v664 = vsub.f32 %v245, %v663
        %v665 = vand.u32 %v664, 4294901760
        %666 = vmatmul.f32.gmra.mxu0 %v665
        %v667 = vpop.f32.mrf.mxu0
        %v668 = vadd.f32 %v629, %v667
        %669 = vdwg.mxu0
        %v670 = vand.u32 %v382, 4294901760
        %v671 = vsub.f32 %v382, %v670
        %v672 = vand.u32 %v671, 4294901760
        %673 = vmatpush.msra.mxu0 %v672
        %v674 = vand.u32 %v373, 4294901760
        %v675 = vsub.f32 %v373, %v674
        %v676 = vand.u32 %v675, 4294901760
        %677 = vmatpush.msra.mxu0 %v676
        %v678 = vand.u32 %v364, 4294901760
        %v679 = vsub.f32 %v364, %v678
        %v680 = vand.u32 %v679, 4294901760
        %681 = vmatpush.msra.mxu0 %v680
        %v682 = vand.u32 %v355, 4294901760
        %v683 = vsub.f32 %v355, %v682
        %v684 = vand.u32 %v683, 4294901760
        %685 = vmatpush.msra.mxu0 %v684
        %v686 = vand.u32 %v346, 4294901760
        %v687 = vsub.f32 %v346, %v686
        %v688 = vand.u32 %v687, 4294901760
        %689 = vmatpush.msra.mxu0 %v688
        %v690 = vand.u32 %v337, 4294901760
        %v691 = vsub.f32 %v337, %v690
        %v692 = vand.u32 %v691, 4294901760
        %693 = vmatpush.msra.mxu0 %v692
        %v694 = vand.u32 %v328, 4294901760
        %v695 = vsub.f32 %v328, %v694
        %v696 = vand.u32 %v695, 4294901760
        %697 = vmatpush.msra.mxu0 %v696
        %v698 = vand.u32 %v319, 4294901760
        %v699 = vsub.f32 %v319, %v698
        %v700 = vand.u32 %v699, 4294901760
        %701 = vmatpush.msra.mxu0 %v700
        %v702 = vand.u32 %v310, 4294901760
        %v703 = vsub.f32 %v310, %v702
        %v704 = vand.u32 %v703, 4294901760
        %705 = vmatpush.msra.mxu0 %v704
        %v706 = vand.u32 %v301, 4294901760
        %v707 = vsub.f32 %v301, %v706
        %v708 = vand.u32 %v707, 4294901760
        %709 = vmatpush.msra.mxu0 %v708
        %v710 = vand.u32 %v292, 4294901760
        %v711 = vsub.f32 %v292, %v710
        %v712 = vand.u32 %v711, 4294901760
        %713 = vmatpush.msra.mxu0 %v712
        %v714 = vand.u32 %v283, 4294901760
        %v715 = vsub.f32 %v283, %v714
        %v716 = vand.u32 %v715, 4294901760
        %717 = vmatpush.msra.mxu0 %v716
        %v718 = vand.u32 %v274, 4294901760
        %v719 = vsub.f32 %v274, %v718
        %v720 = vand.u32 %v719, 4294901760
        %721 = vmatpush.msra.mxu0 %v720
        %v722 = vand.u32 %v265, 4294901760
        %v723 = vsub.f32 %v265, %v722
        %v724 = vand.u32 %v723, 4294901760
        %725 = vmatpush.msra.mxu0 %v724
        %v726 = vand.u32 %v256, 4294901760
        %v727 = vsub.f32 %v256, %v726
        %v728 = vand.u32 %v727, 4294901760
        %729 = vmatpush.msra.mxu0 %v728
        %v730 = vand.u32 %v247, 4294901760
        %v731 = vsub.f32 %v247, %v730
        %v732 = vand.u32 %v731, 4294901760
        %733 = vmatpush.msra.mxu0 %v732
        %v734 = vand.u32 %v245, 4294901760
        %735 = vmatmul.f32.gmra.mxu0 %v734
        %v736 = vpop.f32.mrf.mxu0
        %v737 = vadd.f32 %v668, %v736
        %738 = vdwg.mxu0
        %v739 = vand.u32 %v382, 4294901760
        %740 = vmatpush.msra.mxu0 %v739
        %v741 = vand.u32 %v373, 4294901760
        %742 = vmatpush.msra.mxu0 %v741
        %v743 = vand.u32 %v364, 4294901760
        %744 = vmatpush.msra.mxu0 %v743
        %v745 = vand.u32 %v355, 4294901760
        %746 = vmatpush.msra.mxu0 %v745
        %v747 = vand.u32 %v346, 4294901760
        %748 = vmatpush.msra.mxu0 %v747
        %v749 = vand.u32 %v337, 4294901760
        %750 = vmatpush.msra.mxu0 %v749
        %v751 = vand.u32 %v328, 4294901760
        %752 = vmatpush.msra.mxu0 %v751
        %v753 = vand.u32 %v319, 4294901760
        %754 = vmatpush.msra.mxu0 %v753
        %v755 = vand.u32 %v310, 4294901760
        %756 = vmatpush.msra.mxu0 %v755
        %v757 = vand.u32 %v301, 4294901760
        %758 = vmatpush.msra.mxu0 %v757
        %v759 = vand.u32 %v292, 4294901760
        %760 = vmatpush.msra.mxu0 %v759
        %v761 = vand.u32 %v283, 4294901760
        %762 = vmatpush.msra.mxu0 %v761
        %v763 = vand.u32 %v274, 4294901760
        %764 = vmatpush.msra.mxu0 %v763
        %v765 = vand.u32 %v265, 4294901760
        %766 = vmatpush.msra.mxu0 %v765
        %v767 = vand.u32 %v256, 4294901760
        %768 = vmatpush.msra.mxu0 %v767
        %v769 = vand.u32 %v247, 4294901760
        %770 = vmatpush.msra.mxu0 %v769
        %v771 = vand.u32 %v245, 4294901760
        %772 = vmatmul.f32.gmra.mxu0 %v771
        %v773 = vpop.f32.mrf.mxu0
        %v774 = vadd.f32 %v737, %v773
        %775 = vdwg.mxu0
        %776 = vmatpush.msra.mxu0 0.0
        %777 = vmatpush.msra.mxu0 0.0
        %778 = vmatpush.msra.mxu0 0.0
        %779 = vmatpush.msra.mxu0 0.0
        %780 = vmatpush.msra.mxu0 0.0
        %781 = vmatpush.msra.mxu0 0.0
        %782 = vmatpush.msra.mxu0 0.0
        %783 = vmatpush.msra.mxu0 0.0
        %784 = vmatpush.msra.mxu0 0.0
        %785 = vmatpush.msra.mxu0 0.0
        %786 = vmatpush.msra.mxu0 0.0
        %787 = vmatpush.msra.mxu0 0.0
        %788 = vmatpush.msra.mxu0 0.0
        %789 = vmatpush.msra.mxu0 0.0
        %v790 = vand.u32 %v400, 4294901760
        %791 = vmatpush.msra.mxu0 %v790
        %v792 = vand.u32 %v391, 4294901760
        %793 = vmatpush.msra.mxu0 %v792
        %v794 = vand.u32 %v433, 4294901760
        %v795 = vsub.f32 %v433, %v794
        %v796 = vand.u32 %v795, 4294901760
        %v797 = vsub.f32 %v795, %v796
        %v798 = vand.u32 %v797, 4294901760
        %799 = vmatmul.f32.gmra.mxu0 %v798
        %v800 = vpop.f32.mrf.mxu0
        %v801 = vadd.f32 %v774, %v800
        %802 = vdwg.mxu0
        %803 = vmatpush.msra.mxu0 0.0
        %804 = vmatpush.msra.mxu0 0.0
        %805 = vmatpush.msra.mxu0 0.0
        %806 = vmatpush.msra.mxu0 0.0
        %807 = vmatpush.msra.mxu0 0.0
        %808 = vmatpush.msra.mxu0 0.0
        %809 = vmatpush.msra.mxu0 0.0
        %810 = vmatpush.msra.mxu0 0.0
        %811 = vmatpush.msra.mxu0 0.0
        %812 = vmatpush.msra.mxu0 0.0
        %813 = vmatpush.msra.mxu0 0.0
        %814 = vmatpush.msra.mxu0 0.0
        %815 = vmatpush.msra.mxu0 0.0
        %816 = vmatpush.msra.mxu0 0.0
        %v817 = vand.u32 %v400, 4294901760
        %v818 = vsub.f32 %v400, %v817
        %v819 = vand.u32 %v818, 4294901760
        %v820 = vsub.f32 %v818, %v819
        %v821 = vand.u32 %v820, 4294901760
        %822 = vmatpush.msra.mxu0 %v821
        %v823 = vand.u32 %v391, 4294901760
        %v824 = vsub.f32 %v391, %v823
        %v825 = vand.u32 %v824, 4294901760
        %v826 = vsub.f32 %v824, %v825
        %v827 = vand.u32 %v826, 4294901760
        %828 = vmatpush.msra.mxu0 %v827
        %v829 = vand.u32 %v433, 4294901760
        %830 = vmatmul.f32.gmra.mxu0 %v829
        %v831 = vpop.f32.mrf.mxu0
        %v832 = vadd.f32 %v801, %v831
        %833 = vdwg.mxu0
        %834 = vmatpush.msra.mxu0 0.0
        %835 = vmatpush.msra.mxu0 0.0
        %836 = vmatpush.msra.mxu0 0.0
        %837 = vmatpush.msra.mxu0 0.0
        %838 = vmatpush.msra.mxu0 0.0
        %839 = vmatpush.msra.mxu0 0.0
        %840 = vmatpush.msra.mxu0 0.0
        %841 = vmatpush.msra.mxu0 0.0
        %842 = vmatpush.msra.mxu0 0.0
        %843 = vmatpush.msra.mxu0 0.0
        %844 = vmatpush.msra.mxu0 0.0
        %845 = vmatpush.msra.mxu0 0.0
        %846 = vmatpush.msra.mxu0 0.0
        %847 = vmatpush.msra.mxu0 0.0
        %v848 = vand.u32 %v400, 4294901760
        %v849 = vsub.f32 %v400, %v848
        %850 = vmatpush.msra.mxu0 %v849
        %v851 = vand.u32 %v391, 4294901760
        %v852 = vsub.f32 %v391, %v851
        %853 = vmatpush.msra.mxu0 %v852
        %v854 = vand.u32 %v433, 4294901760
        %v855 = vsub.f32 %v433, %v854
        %856 = vmatmul.f32.gmra.mxu0 %v855
        %v857 = vpop.f32.mrf.mxu0
        %v858 = vadd.f32 %v832, %v857
        %859 = vdwg.mxu0
        %860 = vmatpush.msra.mxu0 0.0
        %861 = vmatpush.msra.mxu0 0.0
        %862 = vmatpush.msra.mxu0 0.0
        %863 = vmatpush.msra.mxu0 0.0
        %864 = vmatpush.msra.mxu0 0.0
        %865 = vmatpush.msra.mxu0 0.0
        %866 = vmatpush.msra.mxu0 0.0
        %867 = vmatpush.msra.mxu0 0.0
        %868 = vmatpush.msra.mxu0 0.0
        %869 = vmatpush.msra.mxu0 0.0
        %870 = vmatpush.msra.mxu0 0.0
        %871 = vmatpush.msra.mxu0 0.0
        %872 = vmatpush.msra.mxu0 0.0
        %873 = vmatpush.msra.mxu0 0.0
        %v874 = vand.u32 %v400, 4294901760
        %875 = vmatpush.msra.mxu0 %v874
        %v876 = vand.u32 %v391, 4294901760
        %877 = vmatpush.msra.mxu0 %v876
        %v878 = vand.u32 %v433, 4294901760
        %v879 = vsub.f32 %v433, %v878
        %v880 = vand.u32 %v879, 4294901760
        %881 = vmatmul.f32.gmra.mxu0 %v880
        %v882 = vpop.f32.mrf.mxu0
        %v883 = vadd.f32 %v858, %v882
        %884 = vdwg.mxu0
        %885 = vmatpush.msra.mxu0 0.0
        %886 = vmatpush.msra.mxu0 0.0
        %887 = vmatpush.msra.mxu0 0.0
        %888 = vmatpush.msra.mxu0 0.0
        %889 = vmatpush.msra.mxu0 0.0
        %890 = vmatpush.msra.mxu0 0.0
        %891 = vmatpush.msra.mxu0 0.0
        %892 = vmatpush.msra.mxu0 0.0
        %893 = vmatpush.msra.mxu0 0.0
        %894 = vmatpush.msra.mxu0 0.0
        %895 = vmatpush.msra.mxu0 0.0
        %896 = vmatpush.msra.mxu0 0.0
        %897 = vmatpush.msra.mxu0 0.0
        %898 = vmatpush.msra.mxu0 0.0
        %v899 = vand.u32 %v400, 4294901760
        %v900 = vsub.f32 %v400, %v899
        %v901 = vand.u32 %v900, 4294901760
        %902 = vmatpush.msra.mxu0 %v901
        %v903 = vand.u32 %v391, 4294901760
        %v904 = vsub.f32 %v391, %v903
        %v905 = vand.u32 %v904, 4294901760
        %906 = vmatpush.msra.mxu0 %v905
        %v907 = vand.u32 %v433, 4294901760
        %908 = vmatmul.f32.gmra.mxu0 %v907
        %v909 = vpop.f32.mrf.mxu0
        %v910 = vadd.f32 %v883, %v909
        %911 = vdwg.mxu0
        %912 = vmatpush.msra.mxu0 0.0
        %913 = vmatpush.msra.mxu0 0.0
        %914 = vmatpush.msra.mxu0 0.0
        %915 = vmatpush.msra.mxu0 0.0
        %916 = vmatpush.msra.mxu0 0.0
        %917 = vmatpush.msra.mxu0 0.0
        %918 = vmatpush.msra.mxu0 0.0
        %919 = vmatpush.msra.mxu0 0.0
        %920 = vmatpush.msra.mxu0 0.0
        %921 = vmatpush.msra.mxu0 0.0
        %922 = vmatpush.msra.mxu0 0.0
        %923 = vmatpush.msra.mxu0 0.0
        %924 = vmatpush.msra.mxu0 0.0
        %925 = vmatpush.msra.mxu0 0.0
        %v926 = vand.u32 %v400, 4294901760
        %927 = vmatpush.msra.mxu0 %v926
        %v928 = vand.u32 %v391, 4294901760
        %929 = vmatpush.msra.mxu0 %v928
        %v930 = vand.u32 %v433, 4294901760
        %931 = vmatmul.f32.gmra.mxu0 %v930
        %v932 = vpop.f32.mrf.mxu0
        %v933 = vadd.f32 %v910, %v932
        %934 = vdwg.mxu0
        %v935 = vand.u32 %v383, 4294901760
        %936 = vmatpush.msra.mxu0 %v935
        %v937 = vand.u32 %v374, 4294901760
        %938 = vmatpush.msra.mxu0 %v937
        %v939 = vand.u32 %v365, 4294901760
        %940 = vmatpush.msra.mxu0 %v939
        %v941 = vand.u32 %v356, 4294901760
        %942 = vmatpush.msra.mxu0 %v941
        %v943 = vand.u32 %v347, 4294901760
        %944 = vmatpush.msra.mxu0 %v943
        %v945 = vand.u32 %v338, 4294901760
        %946 = vmatpush.msra.mxu0 %v945
        %v947 = vand.u32 %v329, 4294901760
        %948 = vmatpush.msra.mxu0 %v947
        %v949 = vand.u32 %v320, 4294901760
        %950 = vmatpush.msra.mxu0 %v949
        %v951 = vand.u32 %v311, 4294901760
        %952 = vmatpush.msra.mxu0 %v951
        %v953 = vand.u32 %v302, 4294901760
        %954 = vmatpush.msra.mxu0 %v953
        %v955 = vand.u32 %v293, 4294901760
        %956 = vmatpush.msra.mxu0 %v955
        %v957 = vand.u32 %v284, 4294901760
        %958 = vmatpush.msra.mxu0 %v957
        %v959 = vand.u32 %v275, 4294901760
        %960 = vmatpush.msra.mxu0 %v959
        %v961 = vand.u32 %v266, 4294901760
        %962 = vmatpush.msra.mxu0 %v961
        %v963 = vand.u32 %v257, 4294901760
        %964 = vmatpush.msra.mxu0 %v963
        %v965 = vand.u32 %v248, 4294901760
        %966 = vmatpush.msra.mxu0 %v965
        %v967 = vand.u32 %v245, 4294901760
        %v968 = vsub.f32 %v245, %v967
        %v969 = vand.u32 %v968, 4294901760
        %v970 = vsub.f32 %v968, %v969
        %v971 = vand.u32 %v970, 4294901760
        %972 = vmatmul.f32.gmra.mxu0 %v971
        %v973 = vpop.f32.mrf.mxu0
        %v974 = vadd.f32 %v414, %v973
        %975 = vdwg.mxu0
        %v976 = vand.u32 %v383, 4294901760
        %v977 = vsub.f32 %v383, %v976
        %v978 = vand.u32 %v977, 4294901760
        %v979 = vsub.f32 %v977, %v978
        %v980 = vand.u32 %v979, 4294901760
        %981 = vmatpush.msra.mxu0 %v980
        %v982 = vand.u32 %v374, 4294901760
        %v983 = vsub.f32 %v374, %v982
        %v984 = vand.u32 %v983, 4294901760
        %v985 = vsub.f32 %v983, %v984
        %v986 = vand.u32 %v985, 4294901760
        %987 = vmatpush.msra.mxu0 %v986
        %v988 = vand.u32 %v365, 4294901760
        %v989 = vsub.f32 %v365, %v988
        %v990 = vand.u32 %v989, 4294901760
        %v991 = vsub.f32 %v989, %v990
        %v992 = vand.u32 %v991, 4294901760
        %993 = vmatpush.msra.mxu0 %v992
        %v994 = vand.u32 %v356, 4294901760
        %v995 = vsub.f32 %v356, %v994
        %v996 = vand.u32 %v995, 4294901760
        %v997 = vsub.f32 %v995, %v996
        %v998 = vand.u32 %v997, 4294901760
        %999 = vmatpush.msra.mxu0 %v998
        %v1000 = vand.u32 %v347, 4294901760
        %v1001 = vsub.f32 %v347, %v1000
        %v1002 = vand.u32 %v1001, 4294901760
        %v1003 = vsub.f32 %v1001, %v1002
        %v1004 = vand.u32 %v1003, 4294901760
        %1005 = vmatpush.msra.mxu0 %v1004
        %v1006 = vand.u32 %v338, 4294901760
        %v1007 = vsub.f32 %v338, %v1006
        %v1008 = vand.u32 %v1007, 4294901760
        %v1009 = vsub.f32 %v1007, %v1008
        %v1010 = vand.u32 %v1009, 4294901760
        %1011 = vmatpush.msra.mxu0 %v1010
        %v1012 = vand.u32 %v329, 4294901760
        %v1013 = vsub.f32 %v329, %v1012
        %v1014 = vand.u32 %v1013, 4294901760
        %v1015 = vsub.f32 %v1013, %v1014
        %v1016 = vand.u32 %v1015, 4294901760
        %1017 = vmatpush.msra.mxu0 %v1016
        %v1018 = vand.u32 %v320, 4294901760
        %v1019 = vsub.f32 %v320, %v1018
        %v1020 = vand.u32 %v1019, 4294901760
        %v1021 = vsub.f32 %v1019, %v1020
        %v1022 = vand.u32 %v1021, 4294901760
        %1023 = vmatpush.msra.mxu0 %v1022
        %v1024 = vand.u32 %v311, 4294901760
        %v1025 = vsub.f32 %v311, %v1024
        %v1026 = vand.u32 %v1025, 4294901760
        %v1027 = vsub.f32 %v1025, %v1026
        %v1028 = vand.u32 %v1027, 4294901760
        %1029 = vmatpush.msra.mxu0 %v1028
        %v1030 = vand.u32 %v302, 4294901760
        %v1031 = vsub.f32 %v302, %v1030
        %v1032 = vand.u32 %v1031, 4294901760
        %v1033 = vsub.f32 %v1031, %v1032
        %v1034 = vand.u32 %v1033, 4294901760
        %1035 = vmatpush.msra.mxu0 %v1034
        %v1036 = vand.u32 %v293, 4294901760
        %v1037 = vsub.f32 %v293, %v1036
        %v1038 = vand.u32 %v1037, 4294901760
        %v1039 = vsub.f32 %v1037, %v1038
        %v1040 = vand.u32 %v1039, 4294901760
        %1041 = vmatpush.msra.mxu0 %v1040
        %v1042 = vand.u32 %v284, 4294901760
        %v1043 = vsub.f32 %v284, %v1042
        %v1044 = vand.u32 %v1043, 4294901760
        %v1045 = vsub.f32 %v1043, %v1044
        %v1046 = vand.u32 %v1045, 4294901760
        %1047 = vmatpush.msra.mxu0 %v1046
        %v1048 = vand.u32 %v275, 4294901760
        %v1049 = vsub.f32 %v275, %v1048
        %v1050 = vand.u32 %v1049, 4294901760
        %v1051 = vsub.f32 %v1049, %v1050
        %v1052 = vand.u32 %v1051, 4294901760
        %1053 = vmatpush.msra.mxu0 %v1052
        %v1054 = vand.u32 %v266, 4294901760
        %v1055 = vsub.f32 %v266, %v1054
        %v1056 = vand.u32 %v1055, 4294901760
        %v1057 = vsub.f32 %v1055, %v1056
        %v1058 = vand.u32 %v1057, 4294901760
        %1059 = vmatpush.msra.mxu0 %v1058
        %v1060 = vand.u32 %v257, 4294901760
        %v1061 = vsub.f32 %v257, %v1060
        %v1062 = vand.u32 %v1061, 4294901760
        %v1063 = vsub.f32 %v1061, %v1062
        %v1064 = vand.u32 %v1063, 4294901760
        %1065 = vmatpush.msra.mxu0 %v1064
        %v1066 = vand.u32 %v248, 4294901760
        %v1067 = vsub.f32 %v248, %v1066
        %v1068 = vand.u32 %v1067, 4294901760
        %v1069 = vsub.f32 %v1067, %v1068
        %v1070 = vand.u32 %v1069, 4294901760
        %1071 = vmatpush.msra.mxu0 %v1070
        %v1072 = vand.u32 %v245, 4294901760
        %1073 = vmatmul.f32.gmra.mxu0 %v1072
        %v1074 = vpop.f32.mrf.mxu0
        %v1075 = vadd.f32 %v974, %v1074
        %1076 = vdwg.mxu0
        %v1077 = vand.u32 %v383, 4294901760
        %v1078 = vsub.f32 %v383, %v1077
        %1079 = vmatpush.msra.mxu0 %v1078
        %v1080 = vand.u32 %v374, 4294901760
        %v1081 = vsub.f32 %v374, %v1080
        %1082 = vmatpush.msra.mxu0 %v1081
        %v1083 = vand.u32 %v365, 4294901760
        %v1084 = vsub.f32 %v365, %v1083
        %1085 = vmatpush.msra.mxu0 %v1084
        %v1086 = vand.u32 %v356, 4294901760
        %v1087 = vsub.f32 %v356, %v1086
        %1088 = vmatpush.msra.mxu0 %v1087
        %v1089 = vand.u32 %v347, 4294901760
        %v1090 = vsub.f32 %v347, %v1089
        %1091 = vmatpush.msra.mxu0 %v1090
        %v1092 = vand.u32 %v338, 4294901760
        %v1093 = vsub.f32 %v338, %v1092
        %1094 = vmatpush.msra.mxu0 %v1093
        %v1095 = vand.u32 %v329, 4294901760
        %v1096 = vsub.f32 %v329, %v1095
        %1097 = vmatpush.msra.mxu0 %v1096
        %v1098 = vand.u32 %v320, 4294901760
        %v1099 = vsub.f32 %v320, %v1098
        %1100 = vmatpush.msra.mxu0 %v1099
        %v1101 = vand.u32 %v311, 4294901760
        %v1102 = vsub.f32 %v311, %v1101
        %1103 = vmatpush.msra.mxu0 %v1102
        %v1104 = vand.u32 %v302, 4294901760
        %v1105 = vsub.f32 %v302, %v1104
        %1106 = vmatpush.msra.mxu0 %v1105
        %v1107 = vand.u32 %v293, 4294901760
        %v1108 = vsub.f32 %v293, %v1107
        %1109 = vmatpush.msra.mxu0 %v1108
        %v1110 = vand.u32 %v284, 4294901760
        %v1111 = vsub.f32 %v284, %v1110
        %1112 = vmatpush.msra.mxu0 %v1111
        %v1113 = vand.u32 %v275, 4294901760
        %v1114 = vsub.f32 %v275, %v1113
        %1115 = vmatpush.msra.mxu0 %v1114
        %v1116 = vand.u32 %v266, 4294901760
        %v1117 = vsub.f32 %v266, %v1116
        %1118 = vmatpush.msra.mxu0 %v1117
        %v1119 = vand.u32 %v257, 4294901760
        %v1120 = vsub.f32 %v257, %v1119
        %1121 = vmatpush.msra.mxu0 %v1120
        %v1122 = vand.u32 %v248, 4294901760
        %v1123 = vsub.f32 %v248, %v1122
        %1124 = vmatpush.msra.mxu0 %v1123
        %v1125 = vand.u32 %v245, 4294901760
        %v1126 = vsub.f32 %v245, %v1125
        %1127 = vmatmul.f32.gmra.mxu0 %v1126
        %v1128 = vpop.f32.mrf.mxu0
        %v1129 = vadd.f32 %v1075, %v1128
        %1130 = vdwg.mxu0
        %v1131 = vand.u32 %v383, 4294901760
        %1132 = vmatpush.msra.mxu0 %v1131
        %v1133 = vand.u32 %v374, 4294901760
        %1134 = vmatpush.msra.mxu0 %v1133
        %v1135 = vand.u32 %v365, 4294901760
        %1136 = vmatpush.msra.mxu0 %v1135
        %v1137 = vand.u32 %v356, 4294901760
        %1138 = vmatpush.msra.mxu0 %v1137
        %v1139 = vand.u32 %v347, 4294901760
        %1140 = vmatpush.msra.mxu0 %v1139
        %v1141 = vand.u32 %v338, 4294901760
        %1142 = vmatpush.msra.mxu0 %v1141
        %v1143 = vand.u32 %v329, 4294901760
        %1144 = vmatpush.msra.mxu0 %v1143
        %v1145 = vand.u32 %v320, 4294901760
        %1146 = vmatpush.msra.mxu0 %v1145
        %v1147 = vand.u32 %v311, 4294901760
        %1148 = vmatpush.msra.mxu0 %v1147
        %v1149 = vand.u32 %v302, 4294901760
        %1150 = vmatpush.msra.mxu0 %v1149
        %v1151 = vand.u32 %v293, 4294901760
        %1152 = vmatpush.msra.mxu0 %v1151
        %v1153 = vand.u32 %v284, 4294901760
        %1154 = vmatpush.msra.mxu0 %v1153
        %v1155 = vand.u32 %v275, 4294901760
        %1156 = vmatpush.msra.mxu0 %v1155
        %v1157 = vand.u32 %v266, 4294901760
        %1158 = vmatpush.msra.mxu0 %v1157
        %v1159 = vand.u32 %v257, 4294901760
        %1160 = vmatpush.msra.mxu0 %v1159
        %v1161 = vand.u32 %v248, 4294901760
        %1162 = vmatpush.msra.mxu0 %v1161
        %v1163 = vand.u32 %v245, 4294901760
        %v1164 = vsub.f32 %v245, %v1163
        %v1165 = vand.u32 %v1164, 4294901760
        %1166 = vmatmul.f32.gmra.mxu0 %v1165
        %v1167 = vpop.f32.mrf.mxu0
        %v1168 = vadd.f32 %v1129, %v1167
        %1169 = vdwg.mxu0
        %v1170 = vand.u32 %v383, 4294901760
        %v1171 = vsub.f32 %v383, %v1170
        %v1172 = vand.u32 %v1171, 4294901760
        %1173 = vmatpush.msra.mxu0 %v1172
        %v1174 = vand.u32 %v374, 4294901760
        %v1175 = vsub.f32 %v374, %v1174
        %v1176 = vand.u32 %v1175, 4294901760
        %1177 = vmatpush.msra.mxu0 %v1176
        %v1178 = vand.u32 %v365, 4294901760
        %v1179 = vsub.f32 %v365, %v1178
        %v1180 = vand.u32 %v1179, 4294901760
        %1181 = vmatpush.msra.mxu0 %v1180
        %v1182 = vand.u32 %v356, 4294901760
        %v1183 = vsub.f32 %v356, %v1182
        %v1184 = vand.u32 %v1183, 4294901760
        %1185 = vmatpush.msra.mxu0 %v1184
        %v1186 = vand.u32 %v347, 4294901760
        %v1187 = vsub.f32 %v347, %v1186
        %v1188 = vand.u32 %v1187, 4294901760
        %1189 = vmatpush.msra.mxu0 %v1188
        %v1190 = vand.u32 %v338, 4294901760
        %v1191 = vsub.f32 %v338, %v1190
        %v1192 = vand.u32 %v1191, 4294901760
        %1193 = vmatpush.msra.mxu0 %v1192
        %v1194 = vand.u32 %v329, 4294901760
        %v1195 = vsub.f32 %v329, %v1194
        %v1196 = vand.u32 %v1195, 4294901760
        %1197 = vmatpush.msra.mxu0 %v1196
        %v1198 = vand.u32 %v320, 4294901760
        %v1199 = vsub.f32 %v320, %v1198
        %v1200 = vand.u32 %v1199, 4294901760
        %1201 = vmatpush.msra.mxu0 %v1200
        %v1202 = vand.u32 %v311, 4294901760
        %v1203 = vsub.f32 %v311, %v1202
        %v1204 = vand.u32 %v1203, 4294901760
        %1205 = vmatpush.msra.mxu0 %v1204
        %v1206 = vand.u32 %v302, 4294901760
        %v1207 = vsub.f32 %v302, %v1206
        %v1208 = vand.u32 %v1207, 4294901760
        %1209 = vmatpush.msra.mxu0 %v1208
        %v1210 = vand.u32 %v293, 4294901760
        %v1211 = vsub.f32 %v293, %v1210
        %v1212 = vand.u32 %v1211, 4294901760
        %1213 = vmatpush.msra.mxu0 %v1212
        %v1214 = vand.u32 %v284, 4294901760
        %v1215 = vsub.f32 %v284, %v1214
        %v1216 = vand.u32 %v1215, 4294901760
        %1217 = vmatpush.msra.mxu0 %v1216
        %v1218 = vand.u32 %v275, 4294901760
        %v1219 = vsub.f32 %v275, %v1218
        %v1220 = vand.u32 %v1219, 4294901760
        %1221 = vmatpush.msra.mxu0 %v1220
        %v1222 = vand.u32 %v266, 4294901760
        %v1223 = vsub.f32 %v266, %v1222
        %v1224 = vand.u32 %v1223, 4294901760
        %1225 = vmatpush.msra.mxu0 %v1224
        %v1226 = vand.u32 %v257, 4294901760
        %v1227 = vsub.f32 %v257, %v1226
        %v1228 = vand.u32 %v1227, 4294901760
        %1229 = vmatpush.msra.mxu0 %v1228
        %v1230 = vand.u32 %v248, 4294901760
        %v1231 = vsub.f32 %v248, %v1230
        %v1232 = vand.u32 %v1231, 4294901760
        %1233 = vmatpush.msra.mxu0 %v1232
        %v1234 = vand.u32 %v245, 4294901760
        %1235 = vmatmul.f32.gmra.mxu0 %v1234
        %v1236 = vpop.f32.mrf.mxu0
        %v1237 = vadd.f32 %v1168, %v1236
        %1238 = vdwg.mxu0
        %v1239 = vand.u32 %v383, 4294901760
        %1240 = vmatpush.msra.mxu0 %v1239
        %v1241 = vand.u32 %v374, 4294901760
        %1242 = vmatpush.msra.mxu0 %v1241
        %v1243 = vand.u32 %v365, 4294901760
        %1244 = vmatpush.msra.mxu0 %v1243
        %v1245 = vand.u32 %v356, 4294901760
        %1246 = vmatpush.msra.mxu0 %v1245
        %v1247 = vand.u32 %v347, 4294901760
        %1248 = vmatpush.msra.mxu0 %v1247
        %v1249 = vand.u32 %v338, 4294901760
        %1250 = vmatpush.msra.mxu0 %v1249
        %v1251 = vand.u32 %v329, 4294901760
        %1252 = vmatpush.msra.mxu0 %v1251
        %v1253 = vand.u32 %v320, 4294901760
        %1254 = vmatpush.msra.mxu0 %v1253
        %v1255 = vand.u32 %v311, 4294901760
        %1256 = vmatpush.msra.mxu0 %v1255
        %v1257 = vand.u32 %v302, 4294901760
        %1258 = vmatpush.msra.mxu0 %v1257
        %v1259 = vand.u32 %v293, 4294901760
        %1260 = vmatpush.msra.mxu0 %v1259
        %v1261 = vand.u32 %v284, 4294901760
        %1262 = vmatpush.msra.mxu0 %v1261
        %v1263 = vand.u32 %v275, 4294901760
        %1264 = vmatpush.msra.mxu0 %v1263
        %v1265 = vand.u32 %v266, 4294901760
        %1266 = vmatpush.msra.mxu0 %v1265
        %v1267 = vand.u32 %v257, 4294901760
        %1268 = vmatpush.msra.mxu0 %v1267
        %v1269 = vand.u32 %v248, 4294901760
        %1270 = vmatpush.msra.mxu0 %v1269
        %v1271 = vand.u32 %v245, 4294901760
        %1272 = vmatmul.f32.gmra.mxu0 %v1271
        %v1273 = vpop.f32.mrf.mxu0
        %v1274 = vadd.f32 %v1237, %v1273
        %1275 = vdwg.mxu0
        %1276 = vmatpush.msra.mxu0 0.0
        %1277 = vmatpush.msra.mxu0 0.0
        %1278 = vmatpush.msra.mxu0 0.0
        %1279 = vmatpush.msra.mxu0 0.0
        %1280 = vmatpush.msra.mxu0 0.0
        %1281 = vmatpush.msra.mxu0 0.0
        %1282 = vmatpush.msra.mxu0 0.0
        %1283 = vmatpush.msra.mxu0 0.0
        %1284 = vmatpush.msra.mxu0 0.0
        %1285 = vmatpush.msra.mxu0 0.0
        %1286 = vmatpush.msra.mxu0 0.0
        %1287 = vmatpush.msra.mxu0 0.0
        %1288 = vmatpush.msra.mxu0 0.0
        %1289 = vmatpush.msra.mxu0 0.0
        %v1290 = vand.u32 %v401, 4294901760
        %1291 = vmatpush.msra.mxu0 %v1290
        %v1292 = vand.u32 %v392, 4294901760
        %1293 = vmatpush.msra.mxu0 %v1292
        %v1294 = vand.u32 %v433, 4294901760
        %v1295 = vsub.f32 %v433, %v1294
        %v1296 = vand.u32 %v1295, 4294901760
        %v1297 = vsub.f32 %v1295, %v1296
        %v1298 = vand.u32 %v1297, 4294901760
        %1299 = vmatmul.f32.gmra.mxu0 %v1298
        %v1300 = vpop.f32.mrf.mxu0
        %v1301 = vadd.f32 %v1274, %v1300
        %1302 = vdwg.mxu0
        %1303 = vmatpush.msra.mxu0 0.0
        %1304 = vmatpush.msra.mxu0 0.0
        %1305 = vmatpush.msra.mxu0 0.0
        %1306 = vmatpush.msra.mxu0 0.0
        %1307 = vmatpush.msra.mxu0 0.0
        %1308 = vmatpush.msra.mxu0 0.0
        %1309 = vmatpush.msra.mxu0 0.0
        %1310 = vmatpush.msra.mxu0 0.0
        %1311 = vmatpush.msra.mxu0 0.0
        %1312 = vmatpush.msra.mxu0 0.0
        %1313 = vmatpush.msra.mxu0 0.0
        %1314 = vmatpush.msra.mxu0 0.0
        %1315 = vmatpush.msra.mxu0 0.0
        %1316 = vmatpush.msra.mxu0 0.0
        %v1317 = vand.u32 %v401, 4294901760
        %v1318 = vsub.f32 %v401, %v1317
        %v1319 = vand.u32 %v1318, 4294901760
        %v1320 = vsub.f32 %v1318, %v1319
        %v1321 = vand.u32 %v1320, 4294901760
        %1322 = vmatpush.msra.mxu0 %v1321
        %v1323 = vand.u32 %v392, 4294901760
        %v1324 = vsub.f32 %v392, %v1323
        %v1325 = vand.u32 %v1324, 4294901760
        %v1326 = vsub.f32 %v1324, %v1325
        %v1327 = vand.u32 %v1326, 4294901760
        %1328 = vmatpush.msra.mxu0 %v1327
        %v1329 = vand.u32 %v433, 4294901760
        %1330 = vmatmul.f32.gmra.mxu0 %v1329
        %v1331 = vpop.f32.mrf.mxu0
        %v1332 = vadd.f32 %v1301, %v1331
        %1333 = vdwg.mxu0
        %1334 = vmatpush.msra.mxu0 0.0
        %1335 = vmatpush.msra.mxu0 0.0
        %1336 = vmatpush.msra.mxu0 0.0
        %1337 = vmatpush.msra.mxu0 0.0
        %1338 = vmatpush.msra.mxu0 0.0
        %1339 = vmatpush.msra.mxu0 0.0
        %1340 = vmatpush.msra.mxu0 0.0
        %1341 = vmatpush.msra.mxu0 0.0
        %1342 = vmatpush.msra.mxu0 0.0
        %1343 = vmatpush.msra.mxu0 0.0
        %1344 = vmatpush.msra.mxu0 0.0
        %1345 = vmatpush.msra.mxu0 0.0
        %1346 = vmatpush.msra.mxu0 0.0
        %1347 = vmatpush.msra.mxu0 0.0
        %v1348 = vand.u32 %v401, 4294901760
        %v1349 = vsub.f32 %v401, %v1348
        %1350 = vmatpush.msra.mxu0 %v1349
        %v1351 = vand.u32 %v392, 4294901760
        %v1352 = vsub.f32 %v392, %v1351
        %1353 = vmatpush.msra.mxu0 %v1352
        %v1354 = vand.u32 %v433, 4294901760
        %v1355 = vsub.f32 %v433, %v1354
        %1356 = vmatmul.f32.gmra.mxu0 %v1355
        %v1357 = vpop.f32.mrf.mxu0
        %v1358 = vadd.f32 %v1332, %v1357
        %1359 = vdwg.mxu0
        %1360 = vmatpush.msra.mxu0 0.0
        %1361 = vmatpush.msra.mxu0 0.0
        %1362 = vmatpush.msra.mxu0 0.0
        %1363 = vmatpush.msra.mxu0 0.0
        %1364 = vmatpush.msra.mxu0 0.0
        %1365 = vmatpush.msra.mxu0 0.0
        %1366 = vmatpush.msra.mxu0 0.0
        %1367 = vmatpush.msra.mxu0 0.0
        %1368 = vmatpush.msra.mxu0 0.0
        %1369 = vmatpush.msra.mxu0 0.0
        %1370 = vmatpush.msra.mxu0 0.0
        %1371 = vmatpush.msra.mxu0 0.0
        %1372 = vmatpush.msra.mxu0 0.0
        %1373 = vmatpush.msra.mxu0 0.0
        %v1374 = vand.u32 %v401, 4294901760
        %1375 = vmatpush.msra.mxu0 %v1374
        %v1376 = vand.u32 %v392, 4294901760
        %1377 = vmatpush.msra.mxu0 %v1376
        %v1378 = vand.u32 %v433, 4294901760
        %v1379 = vsub.f32 %v433, %v1378
        %v1380 = vand.u32 %v1379, 4294901760
        %1381 = vmatmul.f32.gmra.mxu0 %v1380
        %v1382 = vpop.f32.mrf.mxu0
        %v1383 = vadd.f32 %v1358, %v1382
        %1384 = vdwg.mxu0
        %1385 = vmatpush.msra.mxu0 0.0
        %1386 = vmatpush.msra.mxu0 0.0
        %1387 = vmatpush.msra.mxu0 0.0
        %1388 = vmatpush.msra.mxu0 0.0
        %1389 = vmatpush.msra.mxu0 0.0
        %1390 = vmatpush.msra.mxu0 0.0
        %1391 = vmatpush.msra.mxu0 0.0
        %1392 = vmatpush.msra.mxu0 0.0
        %1393 = vmatpush.msra.mxu0 0.0
        %1394 = vmatpush.msra.mxu0 0.0
        %1395 = vmatpush.msra.mxu0 0.0
        %1396 = vmatpush.msra.mxu0 0.0
        %1397 = vmatpush.msra.mxu0 0.0
        %1398 = vmatpush.msra.mxu0 0.0
        %v1399 = vand.u32 %v401, 4294901760
        %v1400 = vsub.f32 %v401, %v1399
        %v1401 = vand.u32 %v1400, 4294901760
        %1402 = vmatpush.msra.mxu0 %v1401
        %v1403 = vand.u32 %v392, 4294901760
        %v1404 = vsub.f32 %v392, %v1403
        %v1405 = vand.u32 %v1404, 4294901760
        %1406 = vmatpush.msra.mxu0 %v1405
        %v1407 = vand.u32 %v433, 4294901760
        %1408 = vmatmul.f32.gmra.mxu0 %v1407
        %v1409 = vpop.f32.mrf.mxu0
        %v1410 = vadd.f32 %v1383, %v1409
        %1411 = vdwg.mxu0
        %1412 = vmatpush.msra.mxu0 0.0
        %1413 = vmatpush.msra.mxu0 0.0
        %1414 = vmatpush.msra.mxu0 0.0
        %1415 = vmatpush.msra.mxu0 0.0
        %1416 = vmatpush.msra.mxu0 0.0
        %1417 = vmatpush.msra.mxu0 0.0
        %1418 = vmatpush.msra.mxu0 0.0
        %1419 = vmatpush.msra.mxu0 0.0
        %1420 = vmatpush.msra.mxu0 0.0
        %1421 = vmatpush.msra.mxu0 0.0
        %1422 = vmatpush.msra.mxu0 0.0
        %1423 = vmatpush.msra.mxu0 0.0
        %1424 = vmatpush.msra.mxu0 0.0
        %1425 = vmatpush.msra.mxu0 0.0
        %v1426 = vand.u32 %v401, 4294901760
        %1427 = vmatpush.msra.mxu0 %v1426
        %v1428 = vand.u32 %v392, 4294901760
        %1429 = vmatpush.msra.mxu0 %v1428
        %v1430 = vand.u32 %v433, 4294901760
        %1431 = vmatmul.f32.gmra.mxu0 %v1430
        %v1432 = vpop.f32.mrf.mxu0
        %v1433 = vadd.f32 %v1410, %v1432
        %1434 = vdwg.mxu0
        %v1435 = vand.u32 %v384, 4294901760
        %1436 = vmatpush.msra.mxu0 %v1435
        %v1437 = vand.u32 %v375, 4294901760
        %1438 = vmatpush.msra.mxu0 %v1437
        %v1439 = vand.u32 %v366, 4294901760
        %1440 = vmatpush.msra.mxu0 %v1439
        %v1441 = vand.u32 %v357, 4294901760
        %1442 = vmatpush.msra.mxu0 %v1441
        %v1443 = vand.u32 %v348, 4294901760
        %1444 = vmatpush.msra.mxu0 %v1443
        %v1445 = vand.u32 %v339, 4294901760
        %1446 = vmatpush.msra.mxu0 %v1445
        %v1447 = vand.u32 %v330, 4294901760
        %1448 = vmatpush.msra.mxu0 %v1447
        %v1449 = vand.u32 %v321, 4294901760
        %1450 = vmatpush.msra.mxu0 %v1449
        %v1451 = vand.u32 %v312, 4294901760
        %1452 = vmatpush.msra.mxu0 %v1451
        %v1453 = vand.u32 %v303, 4294901760
        %1454 = vmatpush.msra.mxu0 %v1453
        %v1455 = vand.u32 %v294, 4294901760
        %1456 = vmatpush.msra.mxu0 %v1455
        %v1457 = vand.u32 %v285, 4294901760
        %1458 = vmatpush.msra.mxu0 %v1457
        %v1459 = vand.u32 %v276, 4294901760
        %1460 = vmatpush.msra.mxu0 %v1459
        %v1461 = vand.u32 %v267, 4294901760
        %1462 = vmatpush.msra.mxu0 %v1461
        %v1463 = vand.u32 %v258, 4294901760
        %1464 = vmatpush.msra.mxu0 %v1463
        %v1465 = vand.u32 %v249, 4294901760
        %1466 = vmatpush.msra.mxu0 %v1465
        %v1467 = vand.u32 %v245, 4294901760
        %v1468 = vsub.f32 %v245, %v1467
        %v1469 = vand.u32 %v1468, 4294901760
        %v1470 = vsub.f32 %v1468, %v1469
        %v1471 = vand.u32 %v1470, 4294901760
        %1472 = vmatmul.f32.gmra.mxu0 %v1471
        %v1473 = vpop.f32.mrf.mxu0
        %v1474 = vadd.f32 %v415, %v1473
        %1475 = vdwg.mxu0
        %v1476 = vand.u32 %v384, 4294901760
        %v1477 = vsub.f32 %v384, %v1476
        %v1478 = vand.u32 %v1477, 4294901760
        %v1479 = vsub.f32 %v1477, %v1478
        %v1480 = vand.u32 %v1479, 4294901760
        %1481 = vmatpush.msra.mxu0 %v1480
        %v1482 = vand.u32 %v375, 4294901760
        %v1483 = vsub.f32 %v375, %v1482
        %v1484 = vand.u32 %v1483, 4294901760
        %v1485 = vsub.f32 %v1483, %v1484
        %v1486 = vand.u32 %v1485, 4294901760
        %1487 = vmatpush.msra.mxu0 %v1486
        %v1488 = vand.u32 %v366, 4294901760
        %v1489 = vsub.f32 %v366, %v1488
        %v1490 = vand.u32 %v1489, 4294901760
        %v1491 = vsub.f32 %v1489, %v1490
        %v1492 = vand.u32 %v1491, 4294901760
        %1493 = vmatpush.msra.mxu0 %v1492
        %v1494 = vand.u32 %v357, 4294901760
        %v1495 = vsub.f32 %v357, %v1494
        %v1496 = vand.u32 %v1495, 4294901760
        %v1497 = vsub.f32 %v1495, %v1496
        %v1498 = vand.u32 %v1497, 4294901760
        %1499 = vmatpush.msra.mxu0 %v1498
        %v1500 = vand.u32 %v348, 4294901760
        %v1501 = vsub.f32 %v348, %v1500
        %v1502 = vand.u32 %v1501, 4294901760
        %v1503 = vsub.f32 %v1501, %v1502
        %v1504 = vand.u32 %v1503, 4294901760
        %1505 = vmatpush.msra.mxu0 %v1504
        %v1506 = vand.u32 %v339, 4294901760
        %v1507 = vsub.f32 %v339, %v1506
        %v1508 = vand.u32 %v1507, 4294901760
        %v1509 = vsub.f32 %v1507, %v1508
        %v1510 = vand.u32 %v1509, 4294901760
        %1511 = vmatpush.msra.mxu0 %v1510
        %v1512 = vand.u32 %v330, 4294901760
        %v1513 = vsub.f32 %v330, %v1512
        %v1514 = vand.u32 %v1513, 4294901760
        %v1515 = vsub.f32 %v1513, %v1514
        %v1516 = vand.u32 %v1515, 4294901760
        %1517 = vmatpush.msra.mxu0 %v1516
        %v1518 = vand.u32 %v321, 4294901760
        %v1519 = vsub.f32 %v321, %v1518
        %v1520 = vand.u32 %v1519, 4294901760
        %v1521 = vsub.f32 %v1519, %v1520
        %v1522 = vand.u32 %v1521, 4294901760
        %1523 = vmatpush.msra.mxu0 %v1522
        %v1524 = vand.u32 %v312, 4294901760
        %v1525 = vsub.f32 %v312, %v1524
        %v1526 = vand.u32 %v1525, 4294901760
        %v1527 = vsub.f32 %v1525, %v1526
        %v1528 = vand.u32 %v1527, 4294901760
        %1529 = vmatpush.msra.mxu0 %v1528
        %v1530 = vand.u32 %v303, 4294901760
        %v1531 = vsub.f32 %v303, %v1530
        %v1532 = vand.u32 %v1531, 4294901760
        %v1533 = vsub.f32 %v1531, %v1532
        %v1534 = vand.u32 %v1533, 4294901760
        %1535 = vmatpush.msra.mxu0 %v1534
        %v1536 = vand.u32 %v294, 4294901760
        %v1537 = vsub.f32 %v294, %v1536
        %v1538 = vand.u32 %v1537, 4294901760
        %v1539 = vsub.f32 %v1537, %v1538
        %v1540 = vand.u32 %v1539, 4294901760
        %1541 = vmatpush.msra.mxu0 %v1540
        %v1542 = vand.u32 %v285, 4294901760
        %v1543 = vsub.f32 %v285, %v1542
        %v1544 = vand.u32 %v1543, 4294901760
        %v1545 = vsub.f32 %v1543, %v1544
        %v1546 = vand.u32 %v1545, 4294901760
        %1547 = vmatpush.msra.mxu0 %v1546
        %v1548 = vand.u32 %v276, 4294901760
        %v1549 = vsub.f32 %v276, %v1548
        %v1550 = vand.u32 %v1549, 4294901760
        %v1551 = vsub.f32 %v1549, %v1550
        %v1552 = vand.u32 %v1551, 4294901760
        %1553 = vmatpush.msra.mxu0 %v1552
        %v1554 = vand.u32 %v267, 4294901760
        %v1555 = vsub.f32 %v267, %v1554
        %v1556 = vand.u32 %v1555, 4294901760
        %v1557 = vsub.f32 %v1555, %v1556
        %v1558 = vand.u32 %v1557, 4294901760
        %1559 = vmatpush.msra.mxu0 %v1558
        %v1560 = vand.u32 %v258, 4294901760
        %v1561 = vsub.f32 %v258, %v1560
        %v1562 = vand.u32 %v1561, 4294901760
        %v1563 = vsub.f32 %v1561, %v1562
        %v1564 = vand.u32 %v1563, 4294901760
        %1565 = vmatpush.msra.mxu0 %v1564
        %v1566 = vand.u32 %v249, 4294901760
        %v1567 = vsub.f32 %v249, %v1566
        %v1568 = vand.u32 %v1567, 4294901760
        %v1569 = vsub.f32 %v1567, %v1568
        %v1570 = vand.u32 %v1569, 4294901760
        %1571 = vmatpush.msra.mxu0 %v1570
        %v1572 = vand.u32 %v245, 4294901760
        %1573 = vmatmul.f32.gmra.mxu0 %v1572
        %v1574 = vpop.f32.mrf.mxu0
        %v1575 = vadd.f32 %v1474, %v1574
        %1576 = vdwg.mxu0
        %v1577 = vand.u32 %v384, 4294901760
        %v1578 = vsub.f32 %v384, %v1577
        %1579 = vmatpush.msra.mxu0 %v1578
        %v1580 = vand.u32 %v375, 4294901760
        %v1581 = vsub.f32 %v375, %v1580
        %1582 = vmatpush.msra.mxu0 %v1581
        %v1583 = vand.u32 %v366, 4294901760
        %v1584 = vsub.f32 %v366, %v1583
        %1585 = vmatpush.msra.mxu0 %v1584
        %v1586 = vand.u32 %v357, 4294901760
        %v1587 = vsub.f32 %v357, %v1586
        %1588 = vmatpush.msra.mxu0 %v1587
        %v1589 = vand.u32 %v348, 4294901760
        %v1590 = vsub.f32 %v348, %v1589
        %1591 = vmatpush.msra.mxu0 %v1590
        %v1592 = vand.u32 %v339, 4294901760
        %v1593 = vsub.f32 %v339, %v1592
        %1594 = vmatpush.msra.mxu0 %v1593
        %v1595 = vand.u32 %v330, 4294901760
        %v1596 = vsub.f32 %v330, %v1595
        %1597 = vmatpush.msra.mxu0 %v1596
        %v1598 = vand.u32 %v321, 4294901760
        %v1599 = vsub.f32 %v321, %v1598
        %1600 = vmatpush.msra.mxu0 %v1599
        %v1601 = vand.u32 %v312, 4294901760
        %v1602 = vsub.f32 %v312, %v1601
        %1603 = vmatpush.msra.mxu0 %v1602
        %v1604 = vand.u32 %v303, 4294901760
        %v1605 = vsub.f32 %v303, %v1604
        %1606 = vmatpush.msra.mxu0 %v1605
        %v1607 = vand.u32 %v294, 4294901760
        %v1608 = vsub.f32 %v294, %v1607
        %1609 = vmatpush.msra.mxu0 %v1608
        %v1610 = vand.u32 %v285, 4294901760
        %v1611 = vsub.f32 %v285, %v1610
        %1612 = vmatpush.msra.mxu0 %v1611
        %v1613 = vand.u32 %v276, 4294901760
        %v1614 = vsub.f32 %v276, %v1613
        %1615 = vmatpush.msra.mxu0 %v1614
        %v1616 = vand.u32 %v267, 4294901760
        %v1617 = vsub.f32 %v267, %v1616
        %1618 = vmatpush.msra.mxu0 %v1617
        %v1619 = vand.u32 %v258, 4294901760
        %v1620 = vsub.f32 %v258, %v1619
        %1621 = vmatpush.msra.mxu0 %v1620
        %v1622 = vand.u32 %v249, 4294901760
        %v1623 = vsub.f32 %v249, %v1622
        %1624 = vmatpush.msra.mxu0 %v1623
        %v1625 = vand.u32 %v245, 4294901760
        %v1626 = vsub.f32 %v245, %v1625
        %1627 = vmatmul.f32.gmra.mxu0 %v1626
        %v1628 = vpop.f32.mrf.mxu0
        %v1629 = vadd.f32 %v1575, %v1628
        %1630 = vdwg.mxu0
        %v1631 = vand.u32 %v384, 4294901760
        %1632 = vmatpush.msra.mxu0 %v1631
        %v1633 = vand.u32 %v375, 4294901760
        %1634 = vmatpush.msra.mxu0 %v1633
        %v1635 = vand.u32 %v366, 4294901760
        %1636 = vmatpush.msra.mxu0 %v1635
        %v1637 = vand.u32 %v357, 4294901760
        %1638 = vmatpush.msra.mxu0 %v1637
        %v1639 = vand.u32 %v348, 4294901760
        %1640 = vmatpush.msra.mxu0 %v1639
        %v1641 = vand.u32 %v339, 4294901760
        %1642 = vmatpush.msra.mxu0 %v1641
        %v1643 = vand.u32 %v330, 4294901760
        %1644 = vmatpush.msra.mxu0 %v1643
        %v1645 = vand.u32 %v321, 4294901760
        %1646 = vmatpush.msra.mxu0 %v1645
        %v1647 = vand.u32 %v312, 4294901760
        %1648 = vmatpush.msra.mxu0 %v1647
        %v1649 = vand.u32 %v303, 4294901760
        %1650 = vmatpush.msra.mxu0 %v1649
        %v1651 = vand.u32 %v294, 4294901760
        %1652 = vmatpush.msra.mxu0 %v1651
        %v1653 = vand.u32 %v285, 4294901760
        %1654 = vmatpush.msra.mxu0 %v1653
        %v1655 = vand.u32 %v276, 4294901760
        %1656 = vmatpush.msra.mxu0 %v1655
        %v1657 = vand.u32 %v267, 4294901760
        %1658 = vmatpush.msra.mxu0 %v1657
        %v1659 = vand.u32 %v258, 4294901760
        %1660 = vmatpush.msra.mxu0 %v1659
        %v1661 = vand.u32 %v249, 4294901760
        %1662 = vmatpush.msra.mxu0 %v1661
        %v1663 = vand.u32 %v245, 4294901760
        %v1664 = vsub.f32 %v245, %v1663
        %v1665 = vand.u32 %v1664, 4294901760
        %1666 = vmatmul.f32.gmra.mxu0 %v1665
        %v1667 = vpop.f32.mrf.mxu0
        %v1668 = vadd.f32 %v1629, %v1667
        %1669 = vdwg.mxu0
        %v1670 = vand.u32 %v384, 4294901760
        %v1671 = vsub.f32 %v384, %v1670
        %v1672 = vand.u32 %v1671, 4294901760
        %1673 = vmatpush.msra.mxu0 %v1672
        %v1674 = vand.u32 %v375, 4294901760
        %v1675 = vsub.f32 %v375, %v1674
        %v1676 = vand.u32 %v1675, 4294901760
        %1677 = vmatpush.msra.mxu0 %v1676
        %v1678 = vand.u32 %v366, 4294901760
        %v1679 = vsub.f32 %v366, %v1678
        %v1680 = vand.u32 %v1679, 4294901760
        %1681 = vmatpush.msra.mxu0 %v1680
        %v1682 = vand.u32 %v357, 4294901760
        %v1683 = vsub.f32 %v357, %v1682
        %v1684 = vand.u32 %v1683, 4294901760
        %1685 = vmatpush.msra.mxu0 %v1684
        %v1686 = vand.u32 %v348, 4294901760
        %v1687 = vsub.f32 %v348, %v1686
        %v1688 = vand.u32 %v1687, 4294901760
        %1689 = vmatpush.msra.mxu0 %v1688
        %v1690 = vand.u32 %v339, 4294901760
        %v1691 = vsub.f32 %v339, %v1690
        %v1692 = vand.u32 %v1691, 4294901760
        %1693 = vmatpush.msra.mxu0 %v1692
        %v1694 = vand.u32 %v330, 4294901760
        %v1695 = vsub.f32 %v330, %v1694
        %v1696 = vand.u32 %v1695, 4294901760
        %1697 = vmatpush.msra.mxu0 %v1696
        %v1698 = vand.u32 %v321, 4294901760
        %v1699 = vsub.f32 %v321, %v1698
        %v1700 = vand.u32 %v1699, 4294901760
        %1701 = vmatpush.msra.mxu0 %v1700
        %v1702 = vand.u32 %v312, 4294901760
        %v1703 = vsub.f32 %v312, %v1702
        %v1704 = vand.u32 %v1703, 4294901760
        %1705 = vmatpush.msra.mxu0 %v1704
        %v1706 = vand.u32 %v303, 4294901760
        %v1707 = vsub.f32 %v303, %v1706
        %v1708 = vand.u32 %v1707, 4294901760
        %1709 = vmatpush.msra.mxu0 %v1708
        %v1710 = vand.u32 %v294, 4294901760
        %v1711 = vsub.f32 %v294, %v1710
        %v1712 = vand.u32 %v1711, 4294901760
        %1713 = vmatpush.msra.mxu0 %v1712
        %v1714 = vand.u32 %v285, 4294901760
        %v1715 = vsub.f32 %v285, %v1714
        %v1716 = vand.u32 %v1715, 4294901760
        %1717 = vmatpush.msra.mxu0 %v1716
        %v1718 = vand.u32 %v276, 4294901760
        %v1719 = vsub.f32 %v276, %v1718
        %v1720 = vand.u32 %v1719, 4294901760
        %1721 = vmatpush.msra.mxu0 %v1720
        %v1722 = vand.u32 %v267, 4294901760
        %v1723 = vsub.f32 %v267, %v1722
        %v1724 = vand.u32 %v1723, 4294901760
        %1725 = vmatpush.msra.mxu0 %v1724
        %v1726 = vand.u32 %v258, 4294901760
        %v1727 = vsub.f32 %v258, %v1726
        %v1728 = vand.u32 %v1727, 4294901760
        %1729 = vmatpush.msra.mxu0 %v1728
        %v1730 = vand.u32 %v249, 4294901760
        %v1731 = vsub.f32 %v249, %v1730
        %v1732 = vand.u32 %v1731, 4294901760
        %1733 = vmatpush.msra.mxu0 %v1732
        %v1734 = vand.u32 %v245, 4294901760
        %1735 = vmatmul.f32.gmra.mxu0 %v1734
        %v1736 = vpop.f32.mrf.mxu0
        %v1737 = vadd.f32 %v1668, %v1736
        %1738 = vdwg.mxu0
        %v1739 = vand.u32 %v384, 4294901760
        %1740 = vmatpush.msra.mxu0 %v1739
        %v1741 = vand.u32 %v375, 4294901760
        %1742 = vmatpush.msra.mxu0 %v1741
        %v1743 = vand.u32 %v366, 4294901760
        %1744 = vmatpush.msra.mxu0 %v1743
        %v1745 = vand.u32 %v357, 4294901760
        %1746 = vmatpush.msra.mxu0 %v1745
        %v1747 = vand.u32 %v348, 4294901760
        %1748 = vmatpush.msra.mxu0 %v1747
        %v1749 = vand.u32 %v339, 4294901760
        %1750 = vmatpush.msra.mxu0 %v1749
        %v1751 = vand.u32 %v330, 4294901760
        %1752 = vmatpush.msra.mxu0 %v1751
        %v1753 = vand.u32 %v321, 4294901760
        %1754 = vmatpush.msra.mxu0 %v1753
        %v1755 = vand.u32 %v312, 4294901760
        %1756 = vmatpush.msra.mxu0 %v1755
        %v1757 = vand.u32 %v303, 4294901760
        %1758 = vmatpush.msra.mxu0 %v1757
        %v1759 = vand.u32 %v294, 4294901760
        %1760 = vmatpush.msra.mxu0 %v1759
        %v1761 = vand.u32 %v285, 4294901760
        %1762 = vmatpush.msra.mxu0 %v1761
        %v1763 = vand.u32 %v276, 4294901760
        %1764 = vmatpush.msra.mxu0 %v1763
        %v1765 = vand.u32 %v267, 4294901760
        %1766 = vmatpush.msra.mxu0 %v1765
        %v1767 = vand.u32 %v258, 4294901760
        %1768 = vmatpush.msra.mxu0 %v1767
        %v1769 = vand.u32 %v249, 4294901760
        %1770 = vmatpush.msra.mxu0 %v1769
        %v1771 = vand.u32 %v245, 4294901760
        %1772 = vmatmul.f32.gmra.mxu0 %v1771
        %v1773 = vpop.f32.mrf.mxu0
        %v1774 = vadd.f32 %v1737, %v1773
        %1775 = vdwg.mxu0
        %1776 = vmatpush.msra.mxu0 0.0
        %1777 = vmatpush.msra.mxu0 0.0
        %1778 = vmatpush.msra.mxu0 0.0
        %1779 = vmatpush.msra.mxu0 0.0
        %1780 = vmatpush.msra.mxu0 0.0
        %1781 = vmatpush.msra.mxu0 0.0
        %1782 = vmatpush.msra.mxu0 0.0
        %1783 = vmatpush.msra.mxu0 0.0
        %1784 = vmatpush.msra.mxu0 0.0
        %1785 = vmatpush.msra.mxu0 0.0
        %1786 = vmatpush.msra.mxu0 0.0
        %1787 = vmatpush.msra.mxu0 0.0
        %1788 = vmatpush.msra.mxu0 0.0
        %1789 = vmatpush.msra.mxu0 0.0
        %v1790 = vand.u32 %v402, 4294901760
        %1791 = vmatpush.msra.mxu0 %v1790
        %v1792 = vand.u32 %v393, 4294901760
        %1793 = vmatpush.msra.mxu0 %v1792
        %v1794 = vand.u32 %v433, 4294901760
        %v1795 = vsub.f32 %v433, %v1794
        %v1796 = vand.u32 %v1795, 4294901760
        %v1797 = vsub.f32 %v1795, %v1796
        %v1798 = vand.u32 %v1797, 4294901760
        %1799 = vmatmul.f32.gmra.mxu0 %v1798
        %v1800 = vpop.f32.mrf.mxu0
        %v1801 = vadd.f32 %v1774, %v1800
        %1802 = vdwg.mxu0
        %1803 = vmatpush.msra.mxu0 0.0
        %1804 = vmatpush.msra.mxu0 0.0
        %1805 = vmatpush.msra.mxu0 0.0
        %1806 = vmatpush.msra.mxu0 0.0
        %1807 = vmatpush.msra.mxu0 0.0
        %1808 = vmatpush.msra.mxu0 0.0
        %1809 = vmatpush.msra.mxu0 0.0
        %1810 = vmatpush.msra.mxu0 0.0
        %1811 = vmatpush.msra.mxu0 0.0
        %1812 = vmatpush.msra.mxu0 0.0
        %1813 = vmatpush.msra.mxu0 0.0
        %1814 = vmatpush.msra.mxu0 0.0
        %1815 = vmatpush.msra.mxu0 0.0
        %1816 = vmatpush.msra.mxu0 0.0
        %v1817 = vand.u32 %v402, 4294901760
        %v1818 = vsub.f32 %v402, %v1817
        %v1819 = vand.u32 %v1818, 4294901760
        %v1820 = vsub.f32 %v1818, %v1819
        %v1821 = vand.u32 %v1820, 4294901760
        %1822 = vmatpush.msra.mxu0 %v1821
        %v1823 = vand.u32 %v393, 4294901760
        %v1824 = vsub.f32 %v393, %v1823
        %v1825 = vand.u32 %v1824, 4294901760
        %v1826 = vsub.f32 %v1824, %v1825
        %v1827 = vand.u32 %v1826, 4294901760
        %1828 = vmatpush.msra.mxu0 %v1827
        %v1829 = vand.u32 %v433, 4294901760
        %1830 = vmatmul.f32.gmra.mxu0 %v1829
        %v1831 = vpop.f32.mrf.mxu0
        %v1832 = vadd.f32 %v1801, %v1831
        %1833 = vdwg.mxu0
        %1834 = vmatpush.msra.mxu0 0.0
        %1835 = vmatpush.msra.mxu0 0.0
        %1836 = vmatpush.msra.mxu0 0.0
        %1837 = vmatpush.msra.mxu0 0.0
        %1838 = vmatpush.msra.mxu0 0.0
        %1839 = vmatpush.msra.mxu0 0.0
        %1840 = vmatpush.msra.mxu0 0.0
        %1841 = vmatpush.msra.mxu0 0.0
        %1842 = vmatpush.msra.mxu0 0.0
        %1843 = vmatpush.msra.mxu0 0.0
        %1844 = vmatpush.msra.mxu0 0.0
        %1845 = vmatpush.msra.mxu0 0.0
        %1846 = vmatpush.msra.mxu0 0.0
        %1847 = vmatpush.msra.mxu0 0.0
        %v1848 = vand.u32 %v402, 4294901760
        %v1849 = vsub.f32 %v402, %v1848
        %1850 = vmatpush.msra.mxu0 %v1849
        %v1851 = vand.u32 %v393, 4294901760
        %v1852 = vsub.f32 %v393, %v1851
        %1853 = vmatpush.msra.mxu0 %v1852
        %v1854 = vand.u32 %v433, 4294901760
        %v1855 = vsub.f32 %v433, %v1854
        %1856 = vmatmul.f32.gmra.mxu0 %v1855
        %v1857 = vpop.f32.mrf.mxu0
        %v1858 = vadd.f32 %v1832, %v1857
        %1859 = vdwg.mxu0
        %1860 = vmatpush.msra.mxu0 0.0
        %1861 = vmatpush.msra.mxu0 0.0
        %1862 = vmatpush.msra.mxu0 0.0
        %1863 = vmatpush.msra.mxu0 0.0
        %1864 = vmatpush.msra.mxu0 0.0
        %1865 = vmatpush.msra.mxu0 0.0
        %1866 = vmatpush.msra.mxu0 0.0
        %1867 = vmatpush.msra.mxu0 0.0
        %1868 = vmatpush.msra.mxu0 0.0
        %1869 = vmatpush.msra.mxu0 0.0
        %1870 = vmatpush.msra.mxu0 0.0
        %1871 = vmatpush.msra.mxu0 0.0
        %1872 = vmatpush.msra.mxu0 0.0
        %1873 = vmatpush.msra.mxu0 0.0
        %v1874 = vand.u32 %v402, 4294901760
        %1875 = vmatpush.msra.mxu0 %v1874
        %v1876 = vand.u32 %v393, 4294901760
        %1877 = vmatpush.msra.mxu0 %v1876
        %v1878 = vand.u32 %v433, 4294901760
        %v1879 = vsub.f32 %v433, %v1878
        %v1880 = vand.u32 %v1879, 4294901760
        %1881 = vmatmul.f32.gmra.mxu0 %v1880
        %v1882 = vpop.f32.mrf.mxu0
        %v1883 = vadd.f32 %v1858, %v1882
        %1884 = vdwg.mxu0
        %1885 = vmatpush.msra.mxu0 0.0
        %1886 = vmatpush.msra.mxu0 0.0
        %1887 = vmatpush.msra.mxu0 0.0
        %1888 = vmatpush.msra.mxu0 0.0
        %1889 = vmatpush.msra.mxu0 0.0
        %1890 = vmatpush.msra.mxu0 0.0
        %1891 = vmatpush.msra.mxu0 0.0
        %1892 = vmatpush.msra.mxu0 0.0
        %1893 = vmatpush.msra.mxu0 0.0
        %1894 = vmatpush.msra.mxu0 0.0
        %1895 = vmatpush.msra.mxu0 0.0
        %1896 = vmatpush.msra.mxu0 0.0
        %1897 = vmatpush.msra.mxu0 0.0
        %1898 = vmatpush.msra.mxu0 0.0
        %v1899 = vand.u32 %v402, 4294901760
        %v1900 = vsub.f32 %v402, %v1899
        %v1901 = vand.u32 %v1900, 4294901760
        %1902 = vmatpush.msra.mxu0 %v1901
        %v1903 = vand.u32 %v393, 4294901760
        %v1904 = vsub.f32 %v393, %v1903
        %v1905 = vand.u32 %v1904, 4294901760
        %1906 = vmatpush.msra.mxu0 %v1905
        %v1907 = vand.u32 %v433, 4294901760
        %1908 = vmatmul.f32.gmra.mxu0 %v1907
        %v1909 = vpop.f32.mrf.mxu0
        %v1910 = vadd.f32 %v1883, %v1909
        %1911 = vdwg.mxu0
        %1912 = vmatpush.msra.mxu0 0.0
        %1913 = vmatpush.msra.mxu0 0.0
        %1914 = vmatpush.msra.mxu0 0.0
        %1915 = vmatpush.msra.mxu0 0.0
        %1916 = vmatpush.msra.mxu0 0.0
        %1917 = vmatpush.msra.mxu0 0.0
        %1918 = vmatpush.msra.mxu0 0.0
        %1919 = vmatpush.msra.mxu0 0.0
        %1920 = vmatpush.msra.mxu0 0.0
        %1921 = vmatpush.msra.mxu0 0.0
        %1922 = vmatpush.msra.mxu0 0.0
        %1923 = vmatpush.msra.mxu0 0.0
        %1924 = vmatpush.msra.mxu0 0.0
        %1925 = vmatpush.msra.mxu0 0.0
        %v1926 = vand.u32 %v402, 4294901760
        %1927 = vmatpush.msra.mxu0 %v1926
        %v1928 = vand.u32 %v393, 4294901760
        %1929 = vmatpush.msra.mxu0 %v1928
        %v1930 = vand.u32 %v433, 4294901760
        %1931 = vmatmul.f32.gmra.mxu0 %v1930
        %v1932 = vpop.f32.mrf.mxu0
        %v1933 = vadd.f32 %v1910, %v1932
        %1934 = vdwg.mxu0
        %v1935 = vand.u32 %v385, 4294901760
        %1936 = vmatpush.msra.mxu0 %v1935
        %v1937 = vand.u32 %v376, 4294901760
        %1938 = vmatpush.msra.mxu0 %v1937
        %v1939 = vand.u32 %v367, 4294901760
        %1940 = vmatpush.msra.mxu0 %v1939
        %v1941 = vand.u32 %v358, 4294901760
        %1942 = vmatpush.msra.mxu0 %v1941
        %v1943 = vand.u32 %v349, 4294901760
        %1944 = vmatpush.msra.mxu0 %v1943
        %v1945 = vand.u32 %v340, 4294901760
        %1946 = vmatpush.msra.mxu0 %v1945
        %v1947 = vand.u32 %v331, 4294901760
        %1948 = vmatpush.msra.mxu0 %v1947
        %v1949 = vand.u32 %v322, 4294901760
        %1950 = vmatpush.msra.mxu0 %v1949
        %v1951 = vand.u32 %v313, 4294901760
        %1952 = vmatpush.msra.mxu0 %v1951
        %v1953 = vand.u32 %v304, 4294901760
        %1954 = vmatpush.msra.mxu0 %v1953
        %v1955 = vand.u32 %v295, 4294901760
        %1956 = vmatpush.msra.mxu0 %v1955
        %v1957 = vand.u32 %v286, 4294901760
        %1958 = vmatpush.msra.mxu0 %v1957
        %v1959 = vand.u32 %v277, 4294901760
        %1960 = vmatpush.msra.mxu0 %v1959
        %v1961 = vand.u32 %v268, 4294901760
        %1962 = vmatpush.msra.mxu0 %v1961
        %v1963 = vand.u32 %v259, 4294901760
        %1964 = vmatpush.msra.mxu0 %v1963
        %v1965 = vand.u32 %v250, 4294901760
        %1966 = vmatpush.msra.mxu0 %v1965
        %v1967 = vand.u32 %v245, 4294901760
        %v1968 = vsub.f32 %v245, %v1967
        %v1969 = vand.u32 %v1968, 4294901760
        %v1970 = vsub.f32 %v1968, %v1969
        %v1971 = vand.u32 %v1970, 4294901760
        %1972 = vmatmul.f32.gmra.mxu0 %v1971
        %v1973 = vpop.f32.mrf.mxu0
        %v1974 = vadd.f32 %v416, %v1973
        %1975 = vdwg.mxu0
        %v1976 = vand.u32 %v385, 4294901760
        %v1977 = vsub.f32 %v385, %v1976
        %v1978 = vand.u32 %v1977, 4294901760
        %v1979 = vsub.f32 %v1977, %v1978
        %v1980 = vand.u32 %v1979, 4294901760
        %1981 = vmatpush.msra.mxu0 %v1980
        %v1982 = vand.u32 %v376, 4294901760
        %v1983 = vsub.f32 %v376, %v1982
        %v1984 = vand.u32 %v1983, 4294901760
        %v1985 = vsub.f32 %v1983, %v1984
        %v1986 = vand.u32 %v1985, 4294901760
        %1987 = vmatpush.msra.mxu0 %v1986
        %v1988 = vand.u32 %v367, 4294901760
        %v1989 = vsub.f32 %v367, %v1988
        %v1990 = vand.u32 %v1989, 4294901760
        %v1991 = vsub.f32 %v1989, %v1990
        %v1992 = vand.u32 %v1991, 4294901760
        %1993 = vmatpush.msra.mxu0 %v1992
        %v1994 = vand.u32 %v358, 4294901760
        %v1995 = vsub.f32 %v358, %v1994
        %v1996 = vand.u32 %v1995, 4294901760
        %v1997 = vsub.f32 %v1995, %v1996
        %v1998 = vand.u32 %v1997, 4294901760
        %1999 = vmatpush.msra.mxu0 %v1998
        %v2000 = vand.u32 %v349, 4294901760
        %v2001 = vsub.f32 %v349, %v2000
        %v2002 = vand.u32 %v2001, 4294901760
        %v2003 = vsub.f32 %v2001, %v2002
        %v2004 = vand.u32 %v2003, 4294901760
        %2005 = vmatpush.msra.mxu0 %v2004
        %v2006 = vand.u32 %v340, 4294901760
        %v2007 = vsub.f32 %v340, %v2006
        %v2008 = vand.u32 %v2007, 4294901760
        %v2009 = vsub.f32 %v2007, %v2008
        %v2010 = vand.u32 %v2009, 4294901760
        %2011 = vmatpush.msra.mxu0 %v2010
        %v2012 = vand.u32 %v331, 4294901760
        %v2013 = vsub.f32 %v331, %v2012
        %v2014 = vand.u32 %v2013, 4294901760
        %v2015 = vsub.f32 %v2013, %v2014
        %v2016 = vand.u32 %v2015, 4294901760
        %2017 = vmatpush.msra.mxu0 %v2016
        %v2018 = vand.u32 %v322, 4294901760
        %v2019 = vsub.f32 %v322, %v2018
        %v2020 = vand.u32 %v2019, 4294901760
        %v2021 = vsub.f32 %v2019, %v2020
        %v2022 = vand.u32 %v2021, 4294901760
        %2023 = vmatpush.msra.mxu0 %v2022
        %v2024 = vand.u32 %v313, 4294901760
        %v2025 = vsub.f32 %v313, %v2024
        %v2026 = vand.u32 %v2025, 4294901760
        %v2027 = vsub.f32 %v2025, %v2026
        %v2028 = vand.u32 %v2027, 4294901760
        %2029 = vmatpush.msra.mxu0 %v2028
        %v2030 = vand.u32 %v304, 4294901760
        %v2031 = vsub.f32 %v304, %v2030
        %v2032 = vand.u32 %v2031, 4294901760
        %v2033 = vsub.f32 %v2031, %v2032
        %v2034 = vand.u32 %v2033, 4294901760
        %2035 = vmatpush.msra.mxu0 %v2034
        %v2036 = vand.u32 %v295, 4294901760
        %v2037 = vsub.f32 %v295, %v2036
        %v2038 = vand.u32 %v2037, 4294901760
        %v2039 = vsub.f32 %v2037, %v2038
        %v2040 = vand.u32 %v2039, 4294901760
        %2041 = vmatpush.msra.mxu0 %v2040
        %v2042 = vand.u32 %v286, 4294901760
        %v2043 = vsub.f32 %v286, %v2042
        %v2044 = vand.u32 %v2043, 4294901760
        %v2045 = vsub.f32 %v2043, %v2044
        %v2046 = vand.u32 %v2045, 4294901760
        %2047 = vmatpush.msra.mxu0 %v2046
        %v2048 = vand.u32 %v277, 4294901760
        %v2049 = vsub.f32 %v277, %v2048
        %v2050 = vand.u32 %v2049, 4294901760
        %v2051 = vsub.f32 %v2049, %v2050
        %v2052 = vand.u32 %v2051, 4294901760
        %2053 = vmatpush.msra.mxu0 %v2052
        %v2054 = vand.u32 %v268, 4294901760
        %v2055 = vsub.f32 %v268, %v2054
        %v2056 = vand.u32 %v2055, 4294901760
        %v2057 = vsub.f32 %v2055, %v2056
        %v2058 = vand.u32 %v2057, 4294901760
        %2059 = vmatpush.msra.mxu0 %v2058
        %v2060 = vand.u32 %v259, 4294901760
        %v2061 = vsub.f32 %v259, %v2060
        %v2062 = vand.u32 %v2061, 4294901760
        %v2063 = vsub.f32 %v2061, %v2062
        %v2064 = vand.u32 %v2063, 4294901760
        %2065 = vmatpush.msra.mxu0 %v2064
        %v2066 = vand.u32 %v250, 4294901760
        %v2067 = vsub.f32 %v250, %v2066
        %v2068 = vand.u32 %v2067, 4294901760
        %v2069 = vsub.f32 %v2067, %v2068
        %v2070 = vand.u32 %v2069, 4294901760
        %2071 = vmatpush.msra.mxu0 %v2070
        %v2072 = vand.u32 %v245, 4294901760
        %2073 = vmatmul.f32.gmra.mxu0 %v2072
        %v2074 = vpop.f32.mrf.mxu0
        %v2075 = vadd.f32 %v1974, %v2074
        %2076 = vdwg.mxu0
        %v2077 = vand.u32 %v385, 4294901760
        %v2078 = vsub.f32 %v385, %v2077
        %2079 = vmatpush.msra.mxu0 %v2078
        %v2080 = vand.u32 %v376, 4294901760
        %v2081 = vsub.f32 %v376, %v2080
        %2082 = vmatpush.msra.mxu0 %v2081
        %v2083 = vand.u32 %v367, 4294901760
        %v2084 = vsub.f32 %v367, %v2083
        %2085 = vmatpush.msra.mxu0 %v2084
        %v2086 = vand.u32 %v358, 4294901760
        %v2087 = vsub.f32 %v358, %v2086
        %2088 = vmatpush.msra.mxu0 %v2087
        %v2089 = vand.u32 %v349, 4294901760
        %v2090 = vsub.f32 %v349, %v2089
        %2091 = vmatpush.msra.mxu0 %v2090
        %v2092 = vand.u32 %v340, 4294901760
        %v2093 = vsub.f32 %v340, %v2092
        %2094 = vmatpush.msra.mxu0 %v2093
        %v2095 = vand.u32 %v331, 4294901760
        %v2096 = vsub.f32 %v331, %v2095
        %2097 = vmatpush.msra.mxu0 %v2096
        %v2098 = vand.u32 %v322, 4294901760
        %v2099 = vsub.f32 %v322, %v2098
        %2100 = vmatpush.msra.mxu0 %v2099
        %v2101 = vand.u32 %v313, 4294901760
        %v2102 = vsub.f32 %v313, %v2101
        %2103 = vmatpush.msra.mxu0 %v2102
        %v2104 = vand.u32 %v304, 4294901760
        %v2105 = vsub.f32 %v304, %v2104
        %2106 = vmatpush.msra.mxu0 %v2105
        %v2107 = vand.u32 %v295, 4294901760
        %v2108 = vsub.f32 %v295, %v2107
        %2109 = vmatpush.msra.mxu0 %v2108
        %v2110 = vand.u32 %v286, 4294901760
        %v2111 = vsub.f32 %v286, %v2110
        %2112 = vmatpush.msra.mxu0 %v2111
        %v2113 = vand.u32 %v277, 4294901760
        %v2114 = vsub.f32 %v277, %v2113
        %2115 = vmatpush.msra.mxu0 %v2114
        %v2116 = vand.u32 %v268, 4294901760
        %v2117 = vsub.f32 %v268, %v2116
        %2118 = vmatpush.msra.mxu0 %v2117
        %v2119 = vand.u32 %v259, 4294901760
        %v2120 = vsub.f32 %v259, %v2119
        %2121 = vmatpush.msra.mxu0 %v2120
        %v2122 = vand.u32 %v250, 4294901760
        %v2123 = vsub.f32 %v250, %v2122
        %2124 = vmatpush.msra.mxu0 %v2123
        %v2125 = vand.u32 %v245, 4294901760
        %v2126 = vsub.f32 %v245, %v2125
        %2127 = vmatmul.f32.gmra.mxu0 %v2126
        %v2128 = vpop.f32.mrf.mxu0
        %v2129 = vadd.f32 %v2075, %v2128
        %2130 = vdwg.mxu0
        %v2131 = vand.u32 %v385, 4294901760
        %2132 = vmatpush.msra.mxu0 %v2131
        %v2133 = vand.u32 %v376, 4294901760
        %2134 = vmatpush.msra.mxu0 %v2133
        %v2135 = vand.u32 %v367, 4294901760
        %2136 = vmatpush.msra.mxu0 %v2135
        %v2137 = vand.u32 %v358, 4294901760
        %2138 = vmatpush.msra.mxu0 %v2137
        %v2139 = vand.u32 %v349, 4294901760
        %2140 = vmatpush.msra.mxu0 %v2139
        %v2141 = vand.u32 %v340, 4294901760
        %2142 = vmatpush.msra.mxu0 %v2141
        %v2143 = vand.u32 %v331, 4294901760
        %2144 = vmatpush.msra.mxu0 %v2143
        %v2145 = vand.u32 %v322, 4294901760
        %2146 = vmatpush.msra.mxu0 %v2145
        %v2147 = vand.u32 %v313, 4294901760
        %2148 = vmatpush.msra.mxu0 %v2147
        %v2149 = vand.u32 %v304, 4294901760
        %2150 = vmatpush.msra.mxu0 %v2149
        %v2151 = vand.u32 %v295, 4294901760
        %2152 = vmatpush.msra.mxu0 %v2151
        %v2153 = vand.u32 %v286, 4294901760
        %2154 = vmatpush.msra.mxu0 %v2153
        %v2155 = vand.u32 %v277, 4294901760
        %2156 = vmatpush.msra.mxu0 %v2155
        %v2157 = vand.u32 %v268, 4294901760
        %2158 = vmatpush.msra.mxu0 %v2157
        %v2159 = vand.u32 %v259, 4294901760
        %2160 = vmatpush.msra.mxu0 %v2159
        %v2161 = vand.u32 %v250, 4294901760
        %2162 = vmatpush.msra.mxu0 %v2161
        %v2163 = vand.u32 %v245, 4294901760
        %v2164 = vsub.f32 %v245, %v2163
        %v2165 = vand.u32 %v2164, 4294901760
        %2166 = vmatmul.f32.gmra.mxu0 %v2165
        %v2167 = vpop.f32.mrf.mxu0
        %v2168 = vadd.f32 %v2129, %v2167
        %2169 = vdwg.mxu0
        %v2170 = vand.u32 %v385, 4294901760
        %v2171 = vsub.f32 %v385, %v2170
        %v2172 = vand.u32 %v2171, 4294901760
        %2173 = vmatpush.msra.mxu0 %v2172
        %v2174 = vand.u32 %v376, 4294901760
        %v2175 = vsub.f32 %v376, %v2174
        %v2176 = vand.u32 %v2175, 4294901760
        %2177 = vmatpush.msra.mxu0 %v2176
        %v2178 = vand.u32 %v367, 4294901760
        %v2179 = vsub.f32 %v367, %v2178
        %v2180 = vand.u32 %v2179, 4294901760
        %2181 = vmatpush.msra.mxu0 %v2180
        %v2182 = vand.u32 %v358, 4294901760
        %v2183 = vsub.f32 %v358, %v2182
        %v2184 = vand.u32 %v2183, 4294901760
        %2185 = vmatpush.msra.mxu0 %v2184
        %v2186 = vand.u32 %v349, 4294901760
        %v2187 = vsub.f32 %v349, %v2186
        %v2188 = vand.u32 %v2187, 4294901760
        %2189 = vmatpush.msra.mxu0 %v2188
        %v2190 = vand.u32 %v340, 4294901760
        %v2191 = vsub.f32 %v340, %v2190
        %v2192 = vand.u32 %v2191, 4294901760
        %2193 = vmatpush.msra.mxu0 %v2192
        %v2194 = vand.u32 %v331, 4294901760
        %v2195 = vsub.f32 %v331, %v2194
        %v2196 = vand.u32 %v2195, 4294901760
        %2197 = vmatpush.msra.mxu0 %v2196
        %v2198 = vand.u32 %v322, 4294901760
        %v2199 = vsub.f32 %v322, %v2198
        %v2200 = vand.u32 %v2199, 4294901760
        %2201 = vmatpush.msra.mxu0 %v2200
        %v2202 = vand.u32 %v313, 4294901760
        %v2203 = vsub.f32 %v313, %v2202
        %v2204 = vand.u32 %v2203, 4294901760
        %2205 = vmatpush.msra.mxu0 %v2204
        %v2206 = vand.u32 %v304, 4294901760
        %v2207 = vsub.f32 %v304, %v2206
        %v2208 = vand.u32 %v2207, 4294901760
        %2209 = vmatpush.msra.mxu0 %v2208
        %v2210 = vand.u32 %v295, 4294901760
        %v2211 = vsub.f32 %v295, %v2210
        %v2212 = vand.u32 %v2211, 4294901760
        %2213 = vmatpush.msra.mxu0 %v2212
        %v2214 = vand.u32 %v286, 4294901760
        %v2215 = vsub.f32 %v286, %v2214
        %v2216 = vand.u32 %v2215, 4294901760
        %2217 = vmatpush.msra.mxu0 %v2216
        %v2218 = vand.u32 %v277, 4294901760
        %v2219 = vsub.f32 %v277, %v2218
        %v2220 = vand.u32 %v2219, 4294901760
        %2221 = vmatpush.msra.mxu0 %v2220
        %v2222 = vand.u32 %v268, 4294901760
        %v2223 = vsub.f32 %v268, %v2222
        %v2224 = vand.u32 %v2223, 4294901760
        %2225 = vmatpush.msra.mxu0 %v2224
        %v2226 = vand.u32 %v259, 4294901760
        %v2227 = vsub.f32 %v259, %v2226
        %v2228 = vand.u32 %v2227, 4294901760
        %2229 = vmatpush.msra.mxu0 %v2228
        %v2230 = vand.u32 %v250, 4294901760
        %v2231 = vsub.f32 %v250, %v2230
        %v2232 = vand.u32 %v2231, 4294901760
        %2233 = vmatpush.msra.mxu0 %v2232
        %v2234 = vand.u32 %v245, 4294901760
        %2235 = vmatmul.f32.gmra.mxu0 %v2234
        %v2236 = vpop.f32.mrf.mxu0
        %v2237 = vadd.f32 %v2168, %v2236
        %2238 = vdwg.mxu0
        %v2239 = vand.u32 %v385, 4294901760
        %2240 = vmatpush.msra.mxu0 %v2239
        %v2241 = vand.u32 %v376, 4294901760
        %2242 = vmatpush.msra.mxu0 %v2241
        %v2243 = vand.u32 %v367, 4294901760
        %2244 = vmatpush.msra.mxu0 %v2243
        %v2245 = vand.u32 %v358, 4294901760
        %2246 = vmatpush.msra.mxu0 %v2245
        %v2247 = vand.u32 %v349, 4294901760
        %2248 = vmatpush.msra.mxu0 %v2247
        %v2249 = vand.u32 %v340, 4294901760
        %2250 = vmatpush.msra.mxu0 %v2249
        %v2251 = vand.u32 %v331, 4294901760
        %2252 = vmatpush.msra.mxu0 %v2251
        %v2253 = vand.u32 %v322, 4294901760
        %2254 = vmatpush.msra.mxu0 %v2253
        %v2255 = vand.u32 %v313, 4294901760
        %2256 = vmatpush.msra.mxu0 %v2255
        %v2257 = vand.u32 %v304, 4294901760
        %2258 = vmatpush.msra.mxu0 %v2257
        %v2259 = vand.u32 %v295, 4294901760
        %2260 = vmatpush.msra.mxu0 %v2259
        %v2261 = vand.u32 %v286, 4294901760
        %2262 = vmatpush.msra.mxu0 %v2261
        %v2263 = vand.u32 %v277, 4294901760
        %2264 = vmatpush.msra.mxu0 %v2263
        %v2265 = vand.u32 %v268, 4294901760
        %2266 = vmatpush.msra.mxu0 %v2265
        %v2267 = vand.u32 %v259, 4294901760
        %2268 = vmatpush.msra.mxu0 %v2267
        %v2269 = vand.u32 %v250, 4294901760
        %2270 = vmatpush.msra.mxu0 %v2269
        %v2271 = vand.u32 %v245, 4294901760
        %2272 = vmatmul.f32.gmra.mxu0 %v2271
        %v2273 = vpop.f32.mrf.mxu0
        %v2274 = vadd.f32 %v2237, %v2273
        %2275 = vdwg.mxu0
        %2276 = vmatpush.msra.mxu0 0.0
        %2277 = vmatpush.msra.mxu0 0.0
        %2278 = vmatpush.msra.mxu0 0.0
        %2279 = vmatpush.msra.mxu0 0.0
        %2280 = vmatpush.msra.mxu0 0.0
        %2281 = vmatpush.msra.mxu0 0.0
        %2282 = vmatpush.msra.mxu0 0.0
        %2283 = vmatpush.msra.mxu0 0.0
        %2284 = vmatpush.msra.mxu0 0.0
        %2285 = vmatpush.msra.mxu0 0.0
        %2286 = vmatpush.msra.mxu0 0.0
        %2287 = vmatpush.msra.mxu0 0.0
        %2288 = vmatpush.msra.mxu0 0.0
        %2289 = vmatpush.msra.mxu0 0.0
        %v2290 = vand.u32 %v403, 4294901760
        %2291 = vmatpush.msra.mxu0 %v2290
        %v2292 = vand.u32 %v394, 4294901760
        %2293 = vmatpush.msra.mxu0 %v2292
        %v2294 = vand.u32 %v433, 4294901760
        %v2295 = vsub.f32 %v433, %v2294
        %v2296 = vand.u32 %v2295, 4294901760
        %v2297 = vsub.f32 %v2295, %v2296
        %v2298 = vand.u32 %v2297, 4294901760
        %2299 = vmatmul.f32.gmra.mxu0 %v2298
        %v2300 = vpop.f32.mrf.mxu0
        %v2301 = vadd.f32 %v2274, %v2300
        %2302 = vdwg.mxu0
        %2303 = vmatpush.msra.mxu0 0.0
        %2304 = vmatpush.msra.mxu0 0.0
        %2305 = vmatpush.msra.mxu0 0.0
        %2306 = vmatpush.msra.mxu0 0.0
        %2307 = vmatpush.msra.mxu0 0.0
        %2308 = vmatpush.msra.mxu0 0.0
        %2309 = vmatpush.msra.mxu0 0.0
        %2310 = vmatpush.msra.mxu0 0.0
        %2311 = vmatpush.msra.mxu0 0.0
        %2312 = vmatpush.msra.mxu0 0.0
        %2313 = vmatpush.msra.mxu0 0.0
        %2314 = vmatpush.msra.mxu0 0.0
        %2315 = vmatpush.msra.mxu0 0.0
        %2316 = vmatpush.msra.mxu0 0.0
        %v2317 = vand.u32 %v403, 4294901760
        %v2318 = vsub.f32 %v403, %v2317
        %v2319 = vand.u32 %v2318, 4294901760
        %v2320 = vsub.f32 %v2318, %v2319
        %v2321 = vand.u32 %v2320, 4294901760
        %2322 = vmatpush.msra.mxu0 %v2321
        %v2323 = vand.u32 %v394, 4294901760
        %v2324 = vsub.f32 %v394, %v2323
        %v2325 = vand.u32 %v2324, 4294901760
        %v2326 = vsub.f32 %v2324, %v2325
        %v2327 = vand.u32 %v2326, 4294901760
        %2328 = vmatpush.msra.mxu0 %v2327
        %v2329 = vand.u32 %v433, 4294901760
        %2330 = vmatmul.f32.gmra.mxu0 %v2329
        %v2331 = vpop.f32.mrf.mxu0
        %v2332 = vadd.f32 %v2301, %v2331
        %2333 = vdwg.mxu0
        %2334 = vmatpush.msra.mxu0 0.0
        %2335 = vmatpush.msra.mxu0 0.0
        %2336 = vmatpush.msra.mxu0 0.0
        %2337 = vmatpush.msra.mxu0 0.0
        %2338 = vmatpush.msra.mxu0 0.0
        %2339 = vmatpush.msra.mxu0 0.0
        %2340 = vmatpush.msra.mxu0 0.0
        %2341 = vmatpush.msra.mxu0 0.0
        %2342 = vmatpush.msra.mxu0 0.0
        %2343 = vmatpush.msra.mxu0 0.0
        %2344 = vmatpush.msra.mxu0 0.0
        %2345 = vmatpush.msra.mxu0 0.0
        %2346 = vmatpush.msra.mxu0 0.0
        %2347 = vmatpush.msra.mxu0 0.0
        %v2348 = vand.u32 %v403, 4294901760
        %v2349 = vsub.f32 %v403, %v2348
        %2350 = vmatpush.msra.mxu0 %v2349
        %v2351 = vand.u32 %v394, 4294901760
        %v2352 = vsub.f32 %v394, %v2351
        %2353 = vmatpush.msra.mxu0 %v2352
        %v2354 = vand.u32 %v433, 4294901760
        %v2355 = vsub.f32 %v433, %v2354
        %2356 = vmatmul.f32.gmra.mxu0 %v2355
        %v2357 = vpop.f32.mrf.mxu0
        %v2358 = vadd.f32 %v2332, %v2357
        %2359 = vdwg.mxu0
        %2360 = vmatpush.msra.mxu0 0.0
        %2361 = vmatpush.msra.mxu0 0.0
        %2362 = vmatpush.msra.mxu0 0.0
        %2363 = vmatpush.msra.mxu0 0.0
        %2364 = vmatpush.msra.mxu0 0.0
        %2365 = vmatpush.msra.mxu0 0.0
        %2366 = vmatpush.msra.mxu0 0.0
        %2367 = vmatpush.msra.mxu0 0.0
        %2368 = vmatpush.msra.mxu0 0.0
        %2369 = vmatpush.msra.mxu0 0.0
        %2370 = vmatpush.msra.mxu0 0.0
        %2371 = vmatpush.msra.mxu0 0.0
        %2372 = vmatpush.msra.mxu0 0.0
        %2373 = vmatpush.msra.mxu0 0.0
        %v2374 = vand.u32 %v403, 4294901760
        %2375 = vmatpush.msra.mxu0 %v2374
        %v2376 = vand.u32 %v394, 4294901760
        %2377 = vmatpush.msra.mxu0 %v2376
        %v2378 = vand.u32 %v433, 4294901760
        %v2379 = vsub.f32 %v433, %v2378
        %v2380 = vand.u32 %v2379, 4294901760
        %2381 = vmatmul.f32.gmra.mxu0 %v2380
        %v2382 = vpop.f32.mrf.mxu0
        %v2383 = vadd.f32 %v2358, %v2382
        %2384 = vdwg.mxu0
        %2385 = vmatpush.msra.mxu0 0.0
        %2386 = vmatpush.msra.mxu0 0.0
        %2387 = vmatpush.msra.mxu0 0.0
        %2388 = vmatpush.msra.mxu0 0.0
        %2389 = vmatpush.msra.mxu0 0.0
        %2390 = vmatpush.msra.mxu0 0.0
        %2391 = vmatpush.msra.mxu0 0.0
        %2392 = vmatpush.msra.mxu0 0.0
        %2393 = vmatpush.msra.mxu0 0.0
        %2394 = vmatpush.msra.mxu0 0.0
        %2395 = vmatpush.msra.mxu0 0.0
        %2396 = vmatpush.msra.mxu0 0.0
        %2397 = vmatpush.msra.mxu0 0.0
        %2398 = vmatpush.msra.mxu0 0.0
        %v2399 = vand.u32 %v403, 4294901760
        %v2400 = vsub.f32 %v403, %v2399
        %v2401 = vand.u32 %v2400, 4294901760
        %2402 = vmatpush.msra.mxu0 %v2401
        %v2403 = vand.u32 %v394, 4294901760
        %v2404 = vsub.f32 %v394, %v2403
        %v2405 = vand.u32 %v2404, 4294901760
        %2406 = vmatpush.msra.mxu0 %v2405
        %v2407 = vand.u32 %v433, 4294901760
        %2408 = vmatmul.f32.gmra.mxu0 %v2407
        %v2409 = vpop.f32.mrf.mxu0
        %v2410 = vadd.f32 %v2383, %v2409
        %2411 = vdwg.mxu0
        %2412 = vmatpush.msra.mxu0 0.0
        %2413 = vmatpush.msra.mxu0 0.0
        %2414 = vmatpush.msra.mxu0 0.0
        %2415 = vmatpush.msra.mxu0 0.0
        %2416 = vmatpush.msra.mxu0 0.0
        %2417 = vmatpush.msra.mxu0 0.0
        %2418 = vmatpush.msra.mxu0 0.0
        %2419 = vmatpush.msra.mxu0 0.0
        %2420 = vmatpush.msra.mxu0 0.0
        %2421 = vmatpush.msra.mxu0 0.0
        %2422 = vmatpush.msra.mxu0 0.0
        %2423 = vmatpush.msra.mxu0 0.0
        %2424 = vmatpush.msra.mxu0 0.0
        %2425 = vmatpush.msra.mxu0 0.0
        %v2426 = vand.u32 %v403, 4294901760
        %2427 = vmatpush.msra.mxu0 %v2426
        %v2428 = vand.u32 %v394, 4294901760
        %2429 = vmatpush.msra.mxu0 %v2428
        %v2430 = vand.u32 %v433, 4294901760
        %2431 = vmatmul.f32.gmra.mxu0 %v2430
        %v2432 = vpop.f32.mrf.mxu0
        %v2433 = vadd.f32 %v2410, %v2432
        %2434 = vdwg.mxu0
        %v2435 = vand.u32 %v386, 4294901760
        %2436 = vmatpush.msra.mxu0 %v2435
        %v2437 = vand.u32 %v377, 4294901760
        %2438 = vmatpush.msra.mxu0 %v2437
        %v2439 = vand.u32 %v368, 4294901760
        %2440 = vmatpush.msra.mxu0 %v2439
        %v2441 = vand.u32 %v359, 4294901760
        %2442 = vmatpush.msra.mxu0 %v2441
        %v2443 = vand.u32 %v350, 4294901760
        %2444 = vmatpush.msra.mxu0 %v2443
        %v2445 = vand.u32 %v341, 4294901760
        %2446 = vmatpush.msra.mxu0 %v2445
        %v2447 = vand.u32 %v332, 4294901760
        %2448 = vmatpush.msra.mxu0 %v2447
        %v2449 = vand.u32 %v323, 4294901760
        %2450 = vmatpush.msra.mxu0 %v2449
        %v2451 = vand.u32 %v314, 4294901760
        %2452 = vmatpush.msra.mxu0 %v2451
        %v2453 = vand.u32 %v305, 4294901760
        %2454 = vmatpush.msra.mxu0 %v2453
        %v2455 = vand.u32 %v296, 4294901760
        %2456 = vmatpush.msra.mxu0 %v2455
        %v2457 = vand.u32 %v287, 4294901760
        %2458 = vmatpush.msra.mxu0 %v2457
        %v2459 = vand.u32 %v278, 4294901760
        %2460 = vmatpush.msra.mxu0 %v2459
        %v2461 = vand.u32 %v269, 4294901760
        %2462 = vmatpush.msra.mxu0 %v2461
        %v2463 = vand.u32 %v260, 4294901760
        %2464 = vmatpush.msra.mxu0 %v2463
        %v2465 = vand.u32 %v251, 4294901760
        %2466 = vmatpush.msra.mxu0 %v2465
        %v2467 = vand.u32 %v245, 4294901760
        %v2468 = vsub.f32 %v245, %v2467
        %v2469 = vand.u32 %v2468, 4294901760
        %v2470 = vsub.f32 %v2468, %v2469
        %v2471 = vand.u32 %v2470, 4294901760
        %2472 = vmatmul.f32.gmra.mxu0 %v2471
        %v2473 = vpop.f32.mrf.mxu0
        %v2474 = vadd.f32 %v417, %v2473
        %2475 = vdwg.mxu0
        %v2476 = vand.u32 %v386, 4294901760
        %v2477 = vsub.f32 %v386, %v2476
        %v2478 = vand.u32 %v2477, 4294901760
        %v2479 = vsub.f32 %v2477, %v2478
        %v2480 = vand.u32 %v2479, 4294901760
        %2481 = vmatpush.msra.mxu0 %v2480
        %v2482 = vand.u32 %v377, 4294901760
        %v2483 = vsub.f32 %v377, %v2482
        %v2484 = vand.u32 %v2483, 4294901760
        %v2485 = vsub.f32 %v2483, %v2484
        %v2486 = vand.u32 %v2485, 4294901760
        %2487 = vmatpush.msra.mxu0 %v2486
        %v2488 = vand.u32 %v368, 4294901760
        %v2489 = vsub.f32 %v368, %v2488
        %v2490 = vand.u32 %v2489, 4294901760
        %v2491 = vsub.f32 %v2489, %v2490
        %v2492 = vand.u32 %v2491, 4294901760
        %2493 = vmatpush.msra.mxu0 %v2492
        %v2494 = vand.u32 %v359, 4294901760
        %v2495 = vsub.f32 %v359, %v2494
        %v2496 = vand.u32 %v2495, 4294901760
        %v2497 = vsub.f32 %v2495, %v2496
        %v2498 = vand.u32 %v2497, 4294901760
        %2499 = vmatpush.msra.mxu0 %v2498
        %v2500 = vand.u32 %v350, 4294901760
        %v2501 = vsub.f32 %v350, %v2500
        %v2502 = vand.u32 %v2501, 4294901760
        %v2503 = vsub.f32 %v2501, %v2502
        %v2504 = vand.u32 %v2503, 4294901760
        %2505 = vmatpush.msra.mxu0 %v2504
        %v2506 = vand.u32 %v341, 4294901760
        %v2507 = vsub.f32 %v341, %v2506
        %v2508 = vand.u32 %v2507, 4294901760
        %v2509 = vsub.f32 %v2507, %v2508
        %v2510 = vand.u32 %v2509, 4294901760
        %2511 = vmatpush.msra.mxu0 %v2510
        %v2512 = vand.u32 %v332, 4294901760
        %v2513 = vsub.f32 %v332, %v2512
        %v2514 = vand.u32 %v2513, 4294901760
        %v2515 = vsub.f32 %v2513, %v2514
        %v2516 = vand.u32 %v2515, 4294901760
        %2517 = vmatpush.msra.mxu0 %v2516
        %v2518 = vand.u32 %v323, 4294901760
        %v2519 = vsub.f32 %v323, %v2518
        %v2520 = vand.u32 %v2519, 4294901760
        %v2521 = vsub.f32 %v2519, %v2520
        %v2522 = vand.u32 %v2521, 4294901760
        %2523 = vmatpush.msra.mxu0 %v2522
        %v2524 = vand.u32 %v314, 4294901760
        %v2525 = vsub.f32 %v314, %v2524
        %v2526 = vand.u32 %v2525, 4294901760
        %v2527 = vsub.f32 %v2525, %v2526
        %v2528 = vand.u32 %v2527, 4294901760
        %2529 = vmatpush.msra.mxu0 %v2528
        %v2530 = vand.u32 %v305, 4294901760
        %v2531 = vsub.f32 %v305, %v2530
        %v2532 = vand.u32 %v2531, 4294901760
        %v2533 = vsub.f32 %v2531, %v2532
        %v2534 = vand.u32 %v2533, 4294901760
        %2535 = vmatpush.msra.mxu0 %v2534
        %v2536 = vand.u32 %v296, 4294901760
        %v2537 = vsub.f32 %v296, %v2536
        %v2538 = vand.u32 %v2537, 4294901760
        %v2539 = vsub.f32 %v2537, %v2538
        %v2540 = vand.u32 %v2539, 4294901760
        %2541 = vmatpush.msra.mxu0 %v2540
        %v2542 = vand.u32 %v287, 4294901760
        %v2543 = vsub.f32 %v287, %v2542
        %v2544 = vand.u32 %v2543, 4294901760
        %v2545 = vsub.f32 %v2543, %v2544
        %v2546 = vand.u32 %v2545, 4294901760
        %2547 = vmatpush.msra.mxu0 %v2546
        %v2548 = vand.u32 %v278, 4294901760
        %v2549 = vsub.f32 %v278, %v2548
        %v2550 = vand.u32 %v2549, 4294901760
        %v2551 = vsub.f32 %v2549, %v2550
        %v2552 = vand.u32 %v2551, 4294901760
        %2553 = vmatpush.msra.mxu0 %v2552
        %v2554 = vand.u32 %v269, 4294901760
        %v2555 = vsub.f32 %v269, %v2554
        %v2556 = vand.u32 %v2555, 4294901760
        %v2557 = vsub.f32 %v2555, %v2556
        %v2558 = vand.u32 %v2557, 4294901760
        %2559 = vmatpush.msra.mxu0 %v2558
        %v2560 = vand.u32 %v260, 4294901760
        %v2561 = vsub.f32 %v260, %v2560
        %v2562 = vand.u32 %v2561, 4294901760
        %v2563 = vsub.f32 %v2561, %v2562
        %v2564 = vand.u32 %v2563, 4294901760
        %2565 = vmatpush.msra.mxu0 %v2564
        %v2566 = vand.u32 %v251, 4294901760
        %v2567 = vsub.f32 %v251, %v2566
        %v2568 = vand.u32 %v2567, 4294901760
        %v2569 = vsub.f32 %v2567, %v2568
        %v2570 = vand.u32 %v2569, 4294901760
        %2571 = vmatpush.msra.mxu0 %v2570
        %v2572 = vand.u32 %v245, 4294901760
        %2573 = vmatmul.f32.gmra.mxu0 %v2572
        %v2574 = vpop.f32.mrf.mxu0
        %v2575 = vadd.f32 %v2474, %v2574
        %2576 = vdwg.mxu0
        %v2577 = vand.u32 %v386, 4294901760
        %v2578 = vsub.f32 %v386, %v2577
        %2579 = vmatpush.msra.mxu0 %v2578
        %v2580 = vand.u32 %v377, 4294901760
        %v2581 = vsub.f32 %v377, %v2580
        %2582 = vmatpush.msra.mxu0 %v2581
        %v2583 = vand.u32 %v368, 4294901760
        %v2584 = vsub.f32 %v368, %v2583
        %2585 = vmatpush.msra.mxu0 %v2584
        %v2586 = vand.u32 %v359, 4294901760
        %v2587 = vsub.f32 %v359, %v2586
        %2588 = vmatpush.msra.mxu0 %v2587
        %v2589 = vand.u32 %v350, 4294901760
        %v2590 = vsub.f32 %v350, %v2589
        %2591 = vmatpush.msra.mxu0 %v2590
        %v2592 = vand.u32 %v341, 4294901760
        %v2593 = vsub.f32 %v341, %v2592
        %2594 = vmatpush.msra.mxu0 %v2593
        %v2595 = vand.u32 %v332, 4294901760
        %v2596 = vsub.f32 %v332, %v2595
        %2597 = vmatpush.msra.mxu0 %v2596
        %v2598 = vand.u32 %v323, 4294901760
        %v2599 = vsub.f32 %v323, %v2598
        %2600 = vmatpush.msra.mxu0 %v2599
        %v2601 = vand.u32 %v314, 4294901760
        %v2602 = vsub.f32 %v314, %v2601
        %2603 = vmatpush.msra.mxu0 %v2602
        %v2604 = vand.u32 %v305, 4294901760
        %v2605 = vsub.f32 %v305, %v2604
        %2606 = vmatpush.msra.mxu0 %v2605
        %v2607 = vand.u32 %v296, 4294901760
        %v2608 = vsub.f32 %v296, %v2607
        %2609 = vmatpush.msra.mxu0 %v2608
        %v2610 = vand.u32 %v287, 4294901760
        %v2611 = vsub.f32 %v287, %v2610
        %2612 = vmatpush.msra.mxu0 %v2611
        %v2613 = vand.u32 %v278, 4294901760
        %v2614 = vsub.f32 %v278, %v2613
        %2615 = vmatpush.msra.mxu0 %v2614
        %v2616 = vand.u32 %v269, 4294901760
        %v2617 = vsub.f32 %v269, %v2616
        %2618 = vmatpush.msra.mxu0 %v2617
        %v2619 = vand.u32 %v260, 4294901760
        %v2620 = vsub.f32 %v260, %v2619
        %2621 = vmatpush.msra.mxu0 %v2620
        %v2622 = vand.u32 %v251, 4294901760
        %v2623 = vsub.f32 %v251, %v2622
        %2624 = vmatpush.msra.mxu0 %v2623
        %v2625 = vand.u32 %v245, 4294901760
        %v2626 = vsub.f32 %v245, %v2625
        %2627 = vmatmul.f32.gmra.mxu0 %v2626
        %v2628 = vpop.f32.mrf.mxu0
        %v2629 = vadd.f32 %v2575, %v2628
        %2630 = vdwg.mxu0
        %v2631 = vand.u32 %v386, 4294901760
        %2632 = vmatpush.msra.mxu0 %v2631
        %v2633 = vand.u32 %v377, 4294901760
        %2634 = vmatpush.msra.mxu0 %v2633
        %v2635 = vand.u32 %v368, 4294901760
        %2636 = vmatpush.msra.mxu0 %v2635
        %v2637 = vand.u32 %v359, 4294901760
        %2638 = vmatpush.msra.mxu0 %v2637
        %v2639 = vand.u32 %v350, 4294901760
        %2640 = vmatpush.msra.mxu0 %v2639
        %v2641 = vand.u32 %v341, 4294901760
        %2642 = vmatpush.msra.mxu0 %v2641
        %v2643 = vand.u32 %v332, 4294901760
        %2644 = vmatpush.msra.mxu0 %v2643
        %v2645 = vand.u32 %v323, 4294901760
        %2646 = vmatpush.msra.mxu0 %v2645
        %v2647 = vand.u32 %v314, 4294901760
        %2648 = vmatpush.msra.mxu0 %v2647
        %v2649 = vand.u32 %v305, 4294901760
        %2650 = vmatpush.msra.mxu0 %v2649
        %v2651 = vand.u32 %v296, 4294901760
        %2652 = vmatpush.msra.mxu0 %v2651
        %v2653 = vand.u32 %v287, 4294901760
        %2654 = vmatpush.msra.mxu0 %v2653
        %v2655 = vand.u32 %v278, 4294901760
        %2656 = vmatpush.msra.mxu0 %v2655
        %v2657 = vand.u32 %v269, 4294901760
        %2658 = vmatpush.msra.mxu0 %v2657
        %v2659 = vand.u32 %v260, 4294901760
        %2660 = vmatpush.msra.mxu0 %v2659
        %v2661 = vand.u32 %v251, 4294901760
        %2662 = vmatpush.msra.mxu0 %v2661
        %v2663 = vand.u32 %v245, 4294901760
        %v2664 = vsub.f32 %v245, %v2663
        %v2665 = vand.u32 %v2664, 4294901760
        %2666 = vmatmul.f32.gmra.mxu0 %v2665
        %v2667 = vpop.f32.mrf.mxu0
        %v2668 = vadd.f32 %v2629, %v2667
        %2669 = vdwg.mxu0
        %v2670 = vand.u32 %v386, 4294901760
        %v2671 = vsub.f32 %v386, %v2670
        %v2672 = vand.u32 %v2671, 4294901760
        %2673 = vmatpush.msra.mxu0 %v2672
        %v2674 = vand.u32 %v377, 4294901760
        %v2675 = vsub.f32 %v377, %v2674
        %v2676 = vand.u32 %v2675, 4294901760
        %2677 = vmatpush.msra.mxu0 %v2676
        %v2678 = vand.u32 %v368, 4294901760
        %v2679 = vsub.f32 %v368, %v2678
        %v2680 = vand.u32 %v2679, 4294901760
        %2681 = vmatpush.msra.mxu0 %v2680
        %v2682 = vand.u32 %v359, 4294901760
        %v2683 = vsub.f32 %v359, %v2682
        %v2684 = vand.u32 %v2683, 4294901760
        %2685 = vmatpush.msra.mxu0 %v2684
        %v2686 = vand.u32 %v350, 4294901760
        %v2687 = vsub.f32 %v350, %v2686
        %v2688 = vand.u32 %v2687, 4294901760
        %2689 = vmatpush.msra.mxu0 %v2688
        %v2690 = vand.u32 %v341, 4294901760
        %v2691 = vsub.f32 %v341, %v2690
        %v2692 = vand.u32 %v2691, 4294901760
        %2693 = vmatpush.msra.mxu0 %v2692
        %v2694 = vand.u32 %v332, 4294901760
        %v2695 = vsub.f32 %v332, %v2694
        %v2696 = vand.u32 %v2695, 4294901760
        %2697 = vmatpush.msra.mxu0 %v2696
        %v2698 = vand.u32 %v323, 4294901760
        %v2699 = vsub.f32 %v323, %v2698
        %v2700 = vand.u32 %v2699, 4294901760
        %2701 = vmatpush.msra.mxu0 %v2700
        %v2702 = vand.u32 %v314, 4294901760
        %v2703 = vsub.f32 %v314, %v2702
        %v2704 = vand.u32 %v2703, 4294901760
        %2705 = vmatpush.msra.mxu0 %v2704
        %v2706 = vand.u32 %v305, 4294901760
        %v2707 = vsub.f32 %v305, %v2706
        %v2708 = vand.u32 %v2707, 4294901760
        %2709 = vmatpush.msra.mxu0 %v2708
        %v2710 = vand.u32 %v296, 4294901760
        %v2711 = vsub.f32 %v296, %v2710
        %v2712 = vand.u32 %v2711, 4294901760
        %2713 = vmatpush.msra.mxu0 %v2712
        %v2714 = vand.u32 %v287, 4294901760
        %v2715 = vsub.f32 %v287, %v2714
        %v2716 = vand.u32 %v2715, 4294901760
        %2717 = vmatpush.msra.mxu0 %v2716
        %v2718 = vand.u32 %v278, 4294901760
        %v2719 = vsub.f32 %v278, %v2718
        %v2720 = vand.u32 %v2719, 4294901760
        %2721 = vmatpush.msra.mxu0 %v2720
        %v2722 = vand.u32 %v269, 4294901760
        %v2723 = vsub.f32 %v269, %v2722
        %v2724 = vand.u32 %v2723, 4294901760
        %2725 = vmatpush.msra.mxu0 %v2724
        %v2726 = vand.u32 %v260, 4294901760
        %v2727 = vsub.f32 %v260, %v2726
        %v2728 = vand.u32 %v2727, 4294901760
        %2729 = vmatpush.msra.mxu0 %v2728
        %v2730 = vand.u32 %v251, 4294901760
        %v2731 = vsub.f32 %v251, %v2730
        %v2732 = vand.u32 %v2731, 4294901760
        %2733 = vmatpush.msra.mxu0 %v2732
        %v2734 = vand.u32 %v245, 4294901760
        %2735 = vmatmul.f32.gmra.mxu0 %v2734
        %v2736 = vpop.f32.mrf.mxu0
        %v2737 = vadd.f32 %v2668, %v2736
        %2738 = vdwg.mxu0
        %v2739 = vand.u32 %v386, 4294901760
        %2740 = vmatpush.msra.mxu0 %v2739
        %v2741 = vand.u32 %v377, 4294901760
        %2742 = vmatpush.msra.mxu0 %v2741
        %v2743 = vand.u32 %v368, 4294901760
        %2744 = vmatpush.msra.mxu0 %v2743
        %v2745 = vand.u32 %v359, 4294901760
        %2746 = vmatpush.msra.mxu0 %v2745
        %v2747 = vand.u32 %v350, 4294901760
        %2748 = vmatpush.msra.mxu0 %v2747
        %v2749 = vand.u32 %v341, 4294901760
        %2750 = vmatpush.msra.mxu0 %v2749
        %v2751 = vand.u32 %v332, 4294901760
        %2752 = vmatpush.msra.mxu0 %v2751
        %v2753 = vand.u32 %v323, 4294901760
        %2754 = vmatpush.msra.mxu0 %v2753
        %v2755 = vand.u32 %v314, 4294901760
        %2756 = vmatpush.msra.mxu0 %v2755
        %v2757 = vand.u32 %v305, 4294901760
        %2758 = vmatpush.msra.mxu0 %v2757
        %v2759 = vand.u32 %v296, 4294901760
        %2760 = vmatpush.msra.mxu0 %v2759
        %v2761 = vand.u32 %v287, 4294901760
        %2762 = vmatpush.msra.mxu0 %v2761
        %v2763 = vand.u32 %v278, 4294901760
        %2764 = vmatpush.msra.mxu0 %v2763
        %v2765 = vand.u32 %v269, 4294901760
        %2766 = vmatpush.msra.mxu0 %v2765
        %v2767 = vand.u32 %v260, 4294901760
        %2768 = vmatpush.msra.mxu0 %v2767
        %v2769 = vand.u32 %v251, 4294901760
        %2770 = vmatpush.msra.mxu0 %v2769
        %v2771 = vand.u32 %v245, 4294901760
        %2772 = vmatmul.f32.gmra.mxu0 %v2771
        %v2773 = vpop.f32.mrf.mxu0
        %v2774 = vadd.f32 %v2737, %v2773
        %2775 = vdwg.mxu0
        %2776 = vmatpush.msra.mxu0 0.0
        %2777 = vmatpush.msra.mxu0 0.0
        %2778 = vmatpush.msra.mxu0 0.0
        %2779 = vmatpush.msra.mxu0 0.0
        %2780 = vmatpush.msra.mxu0 0.0
        %2781 = vmatpush.msra.mxu0 0.0
        %2782 = vmatpush.msra.mxu0 0.0
        %2783 = vmatpush.msra.mxu0 0.0
        %2784 = vmatpush.msra.mxu0 0.0
        %2785 = vmatpush.msra.mxu0 0.0
        %2786 = vmatpush.msra.mxu0 0.0
        %2787 = vmatpush.msra.mxu0 0.0
        %2788 = vmatpush.msra.mxu0 0.0
        %2789 = vmatpush.msra.mxu0 0.0
        %v2790 = vand.u32 %v404, 4294901760
        %2791 = vmatpush.msra.mxu0 %v2790
        %v2792 = vand.u32 %v395, 4294901760
        %2793 = vmatpush.msra.mxu0 %v2792
        %v2794 = vand.u32 %v433, 4294901760
        %v2795 = vsub.f32 %v433, %v2794
        %v2796 = vand.u32 %v2795, 4294901760
        %v2797 = vsub.f32 %v2795, %v2796
        %v2798 = vand.u32 %v2797, 4294901760
        %2799 = vmatmul.f32.gmra.mxu0 %v2798
        %v2800 = vpop.f32.mrf.mxu0
        %v2801 = vadd.f32 %v2774, %v2800
        %2802 = vdwg.mxu0
        %2803 = vmatpush.msra.mxu0 0.0
        %2804 = vmatpush.msra.mxu0 0.0
        %2805 = vmatpush.msra.mxu0 0.0
        %2806 = vmatpush.msra.mxu0 0.0
        %2807 = vmatpush.msra.mxu0 0.0
        %2808 = vmatpush.msra.mxu0 0.0
        %2809 = vmatpush.msra.mxu0 0.0
        %2810 = vmatpush.msra.mxu0 0.0
        %2811 = vmatpush.msra.mxu0 0.0
        %2812 = vmatpush.msra.mxu0 0.0
        %2813 = vmatpush.msra.mxu0 0.0
        %2814 = vmatpush.msra.mxu0 0.0
        %2815 = vmatpush.msra.mxu0 0.0
        %2816 = vmatpush.msra.mxu0 0.0
        %v2817 = vand.u32 %v404, 4294901760
        %v2818 = vsub.f32 %v404, %v2817
        %v2819 = vand.u32 %v2818, 4294901760
        %v2820 = vsub.f32 %v2818, %v2819
        %v2821 = vand.u32 %v2820, 4294901760
        %2822 = vmatpush.msra.mxu0 %v2821
        %v2823 = vand.u32 %v395, 4294901760
        %v2824 = vsub.f32 %v395, %v2823
        %v2825 = vand.u32 %v2824, 4294901760
        %v2826 = vsub.f32 %v2824, %v2825
        %v2827 = vand.u32 %v2826, 4294901760
        %2828 = vmatpush.msra.mxu0 %v2827
        %v2829 = vand.u32 %v433, 4294901760
        %2830 = vmatmul.f32.gmra.mxu0 %v2829
        %v2831 = vpop.f32.mrf.mxu0
        %v2832 = vadd.f32 %v2801, %v2831
        %2833 = vdwg.mxu0
        %2834 = vmatpush.msra.mxu0 0.0
        %2835 = vmatpush.msra.mxu0 0.0
        %2836 = vmatpush.msra.mxu0 0.0
        %2837 = vmatpush.msra.mxu0 0.0
        %2838 = vmatpush.msra.mxu0 0.0
        %2839 = vmatpush.msra.mxu0 0.0
        %2840 = vmatpush.msra.mxu0 0.0
        %2841 = vmatpush.msra.mxu0 0.0
        %2842 = vmatpush.msra.mxu0 0.0
        %2843 = vmatpush.msra.mxu0 0.0
        %2844 = vmatpush.msra.mxu0 0.0
        %2845 = vmatpush.msra.mxu0 0.0
        %2846 = vmatpush.msra.mxu0 0.0
        %2847 = vmatpush.msra.mxu0 0.0
        %v2848 = vand.u32 %v404, 4294901760
        %v2849 = vsub.f32 %v404, %v2848
        %2850 = vmatpush.msra.mxu0 %v2849
        %v2851 = vand.u32 %v395, 4294901760
        %v2852 = vsub.f32 %v395, %v2851
        %2853 = vmatpush.msra.mxu0 %v2852
        %v2854 = vand.u32 %v433, 4294901760
        %v2855 = vsub.f32 %v433, %v2854
        %2856 = vmatmul.f32.gmra.mxu0 %v2855
        %v2857 = vpop.f32.mrf.mxu0
        %v2858 = vadd.f32 %v2832, %v2857
        %2859 = vdwg.mxu0
        %2860 = vmatpush.msra.mxu0 0.0
        %2861 = vmatpush.msra.mxu0 0.0
        %2862 = vmatpush.msra.mxu0 0.0
        %2863 = vmatpush.msra.mxu0 0.0
        %2864 = vmatpush.msra.mxu0 0.0
        %2865 = vmatpush.msra.mxu0 0.0
        %2866 = vmatpush.msra.mxu0 0.0
        %2867 = vmatpush.msra.mxu0 0.0
        %2868 = vmatpush.msra.mxu0 0.0
        %2869 = vmatpush.msra.mxu0 0.0
        %2870 = vmatpush.msra.mxu0 0.0
        %2871 = vmatpush.msra.mxu0 0.0
        %2872 = vmatpush.msra.mxu0 0.0
        %2873 = vmatpush.msra.mxu0 0.0
        %v2874 = vand.u32 %v404, 4294901760
        %2875 = vmatpush.msra.mxu0 %v2874
        %v2876 = vand.u32 %v395, 4294901760
        %2877 = vmatpush.msra.mxu0 %v2876
        %v2878 = vand.u32 %v433, 4294901760
        %v2879 = vsub.f32 %v433, %v2878
        %v2880 = vand.u32 %v2879, 4294901760
        %2881 = vmatmul.f32.gmra.mxu0 %v2880
        %v2882 = vpop.f32.mrf.mxu0
        %v2883 = vadd.f32 %v2858, %v2882
        %2884 = vdwg.mxu0
        %2885 = vmatpush.msra.mxu0 0.0
        %2886 = vmatpush.msra.mxu0 0.0
        %2887 = vmatpush.msra.mxu0 0.0
        %2888 = vmatpush.msra.mxu0 0.0
        %2889 = vmatpush.msra.mxu0 0.0
        %2890 = vmatpush.msra.mxu0 0.0
        %2891 = vmatpush.msra.mxu0 0.0
        %2892 = vmatpush.msra.mxu0 0.0
        %2893 = vmatpush.msra.mxu0 0.0
        %2894 = vmatpush.msra.mxu0 0.0
        %2895 = vmatpush.msra.mxu0 0.0
        %2896 = vmatpush.msra.mxu0 0.0
        %2897 = vmatpush.msra.mxu0 0.0
        %2898 = vmatpush.msra.mxu0 0.0
        %v2899 = vand.u32 %v404, 4294901760
        %v2900 = vsub.f32 %v404, %v2899
        %v2901 = vand.u32 %v2900, 4294901760
        %2902 = vmatpush.msra.mxu0 %v2901
        %v2903 = vand.u32 %v395, 4294901760
        %v2904 = vsub.f32 %v395, %v2903
        %v2905 = vand.u32 %v2904, 4294901760
        %2906 = vmatpush.msra.mxu0 %v2905
        %v2907 = vand.u32 %v433, 4294901760
        %2908 = vmatmul.f32.gmra.mxu0 %v2907
        %v2909 = vpop.f32.mrf.mxu0
        %v2910 = vadd.f32 %v2883, %v2909
        %2911 = vdwg.mxu0
        %2912 = vmatpush.msra.mxu0 0.0
        %2913 = vmatpush.msra.mxu0 0.0
        %2914 = vmatpush.msra.mxu0 0.0
        %2915 = vmatpush.msra.mxu0 0.0
        %2916 = vmatpush.msra.mxu0 0.0
        %2917 = vmatpush.msra.mxu0 0.0
        %2918 = vmatpush.msra.mxu0 0.0
        %2919 = vmatpush.msra.mxu0 0.0
        %2920 = vmatpush.msra.mxu0 0.0
        %2921 = vmatpush.msra.mxu0 0.0
        %2922 = vmatpush.msra.mxu0 0.0
        %2923 = vmatpush.msra.mxu0 0.0
        %2924 = vmatpush.msra.mxu0 0.0
        %2925 = vmatpush.msra.mxu0 0.0
        %v2926 = vand.u32 %v404, 4294901760
        %2927 = vmatpush.msra.mxu0 %v2926
        %v2928 = vand.u32 %v395, 4294901760
        %2929 = vmatpush.msra.mxu0 %v2928
        %v2930 = vand.u32 %v433, 4294901760
        %2931 = vmatmul.f32.gmra.mxu0 %v2930
        %v2932 = vpop.f32.mrf.mxu0
        %v2933 = vadd.f32 %v2910, %v2932
        %2934 = vdwg.mxu0
        %v2935 = vand.u32 %v387, 4294901760
        %2936 = vmatpush.msra.mxu0 %v2935
        %v2937 = vand.u32 %v378, 4294901760
        %2938 = vmatpush.msra.mxu0 %v2937
        %v2939 = vand.u32 %v369, 4294901760
        %2940 = vmatpush.msra.mxu0 %v2939
        %v2941 = vand.u32 %v360, 4294901760
        %2942 = vmatpush.msra.mxu0 %v2941
        %v2943 = vand.u32 %v351, 4294901760
        %2944 = vmatpush.msra.mxu0 %v2943
        %v2945 = vand.u32 %v342, 4294901760
        %2946 = vmatpush.msra.mxu0 %v2945
        %v2947 = vand.u32 %v333, 4294901760
        %2948 = vmatpush.msra.mxu0 %v2947
        %v2949 = vand.u32 %v324, 4294901760
        %2950 = vmatpush.msra.mxu0 %v2949
        %v2951 = vand.u32 %v315, 4294901760
        %2952 = vmatpush.msra.mxu0 %v2951
        %v2953 = vand.u32 %v306, 4294901760
        %2954 = vmatpush.msra.mxu0 %v2953
        %v2955 = vand.u32 %v297, 4294901760
        %2956 = vmatpush.msra.mxu0 %v2955
        %v2957 = vand.u32 %v288, 4294901760
        %2958 = vmatpush.msra.mxu0 %v2957
        %v2959 = vand.u32 %v279, 4294901760
        %2960 = vmatpush.msra.mxu0 %v2959
        %v2961 = vand.u32 %v270, 4294901760
        %2962 = vmatpush.msra.mxu0 %v2961
        %v2963 = vand.u32 %v261, 4294901760
        %2964 = vmatpush.msra.mxu0 %v2963
        %v2965 = vand.u32 %v252, 4294901760
        %2966 = vmatpush.msra.mxu0 %v2965
        %v2967 = vand.u32 %v245, 4294901760
        %v2968 = vsub.f32 %v245, %v2967
        %v2969 = vand.u32 %v2968, 4294901760
        %v2970 = vsub.f32 %v2968, %v2969
        %v2971 = vand.u32 %v2970, 4294901760
        %2972 = vmatmul.f32.gmra.mxu0 %v2971
        %v2973 = vpop.f32.mrf.mxu0
        %v2974 = vadd.f32 %v418, %v2973
        %2975 = vdwg.mxu0
        %v2976 = vand.u32 %v387, 4294901760
        %v2977 = vsub.f32 %v387, %v2976
        %v2978 = vand.u32 %v2977, 4294901760
        %v2979 = vsub.f32 %v2977, %v2978
        %v2980 = vand.u32 %v2979, 4294901760
        %2981 = vmatpush.msra.mxu0 %v2980
        %v2982 = vand.u32 %v378, 4294901760
        %v2983 = vsub.f32 %v378, %v2982
        %v2984 = vand.u32 %v2983, 4294901760
        %v2985 = vsub.f32 %v2983, %v2984
        %v2986 = vand.u32 %v2985, 4294901760
        %2987 = vmatpush.msra.mxu0 %v2986
        %v2988 = vand.u32 %v369, 4294901760
        %v2989 = vsub.f32 %v369, %v2988
        %v2990 = vand.u32 %v2989, 4294901760
        %v2991 = vsub.f32 %v2989, %v2990
        %v2992 = vand.u32 %v2991, 4294901760
        %2993 = vmatpush.msra.mxu0 %v2992
        %v2994 = vand.u32 %v360, 4294901760
        %v2995 = vsub.f32 %v360, %v2994
        %v2996 = vand.u32 %v2995, 4294901760
        %v2997 = vsub.f32 %v2995, %v2996
        %v2998 = vand.u32 %v2997, 4294901760
        %2999 = vmatpush.msra.mxu0 %v2998
        %v3000 = vand.u32 %v351, 4294901760
        %v3001 = vsub.f32 %v351, %v3000
        %v3002 = vand.u32 %v3001, 4294901760
        %v3003 = vsub.f32 %v3001, %v3002
        %v3004 = vand.u32 %v3003, 4294901760
        %3005 = vmatpush.msra.mxu0 %v3004
        %v3006 = vand.u32 %v342, 4294901760
        %v3007 = vsub.f32 %v342, %v3006
        %v3008 = vand.u32 %v3007, 4294901760
        %v3009 = vsub.f32 %v3007, %v3008
        %v3010 = vand.u32 %v3009, 4294901760
        %3011 = vmatpush.msra.mxu0 %v3010
        %v3012 = vand.u32 %v333, 4294901760
        %v3013 = vsub.f32 %v333, %v3012
        %v3014 = vand.u32 %v3013, 4294901760
        %v3015 = vsub.f32 %v3013, %v3014
        %v3016 = vand.u32 %v3015, 4294901760
        %3017 = vmatpush.msra.mxu0 %v3016
        %v3018 = vand.u32 %v324, 4294901760
        %v3019 = vsub.f32 %v324, %v3018
        %v3020 = vand.u32 %v3019, 4294901760
        %v3021 = vsub.f32 %v3019, %v3020
        %v3022 = vand.u32 %v3021, 4294901760
        %3023 = vmatpush.msra.mxu0 %v3022
        %v3024 = vand.u32 %v315, 4294901760
        %v3025 = vsub.f32 %v315, %v3024
        %v3026 = vand.u32 %v3025, 4294901760
        %v3027 = vsub.f32 %v3025, %v3026
        %v3028 = vand.u32 %v3027, 4294901760
        %3029 = vmatpush.msra.mxu0 %v3028
        %v3030 = vand.u32 %v306, 4294901760
        %v3031 = vsub.f32 %v306, %v3030
        %v3032 = vand.u32 %v3031, 4294901760
        %v3033 = vsub.f32 %v3031, %v3032
        %v3034 = vand.u32 %v3033, 4294901760
        %3035 = vmatpush.msra.mxu0 %v3034
        %v3036 = vand.u32 %v297, 4294901760
        %v3037 = vsub.f32 %v297, %v3036
        %v3038 = vand.u32 %v3037, 4294901760
        %v3039 = vsub.f32 %v3037, %v3038
        %v3040 = vand.u32 %v3039, 4294901760
        %3041 = vmatpush.msra.mxu0 %v3040
        %v3042 = vand.u32 %v288, 4294901760
        %v3043 = vsub.f32 %v288, %v3042
        %v3044 = vand.u32 %v3043, 4294901760
        %v3045 = vsub.f32 %v3043, %v3044
        %v3046 = vand.u32 %v3045, 4294901760
        %3047 = vmatpush.msra.mxu0 %v3046
        %v3048 = vand.u32 %v279, 4294901760
        %v3049 = vsub.f32 %v279, %v3048
        %v3050 = vand.u32 %v3049, 4294901760
        %v3051 = vsub.f32 %v3049, %v3050
        %v3052 = vand.u32 %v3051, 4294901760
        %3053 = vmatpush.msra.mxu0 %v3052
        %v3054 = vand.u32 %v270, 4294901760
        %v3055 = vsub.f32 %v270, %v3054
        %v3056 = vand.u32 %v3055, 4294901760
        %v3057 = vsub.f32 %v3055, %v3056
        %v3058 = vand.u32 %v3057, 4294901760
        %3059 = vmatpush.msra.mxu0 %v3058
        %v3060 = vand.u32 %v261, 4294901760
        %v3061 = vsub.f32 %v261, %v3060
        %v3062 = vand.u32 %v3061, 4294901760
        %v3063 = vsub.f32 %v3061, %v3062
        %v3064 = vand.u32 %v3063, 4294901760
        %3065 = vmatpush.msra.mxu0 %v3064
        %v3066 = vand.u32 %v252, 4294901760
        %v3067 = vsub.f32 %v252, %v3066
        %v3068 = vand.u32 %v3067, 4294901760
        %v3069 = vsub.f32 %v3067, %v3068
        %v3070 = vand.u32 %v3069, 4294901760
        %3071 = vmatpush.msra.mxu0 %v3070
        %v3072 = vand.u32 %v245, 4294901760
        %3073 = vmatmul.f32.gmra.mxu0 %v3072
        %v3074 = vpop.f32.mrf.mxu0
        %v3075 = vadd.f32 %v2974, %v3074
        %3076 = vdwg.mxu0
        %v3077 = vand.u32 %v387, 4294901760
        %v3078 = vsub.f32 %v387, %v3077
        %3079 = vmatpush.msra.mxu0 %v3078
        %v3080 = vand.u32 %v378, 4294901760
        %v3081 = vsub.f32 %v378, %v3080
        %3082 = vmatpush.msra.mxu0 %v3081
        %v3083 = vand.u32 %v369, 4294901760
        %v3084 = vsub.f32 %v369, %v3083
        %3085 = vmatpush.msra.mxu0 %v3084
        %v3086 = vand.u32 %v360, 4294901760
        %v3087 = vsub.f32 %v360, %v3086
        %3088 = vmatpush.msra.mxu0 %v3087
        %v3089 = vand.u32 %v351, 4294901760
        %v3090 = vsub.f32 %v351, %v3089
        %3091 = vmatpush.msra.mxu0 %v3090
        %v3092 = vand.u32 %v342, 4294901760
        %v3093 = vsub.f32 %v342, %v3092
        %3094 = vmatpush.msra.mxu0 %v3093
        %v3095 = vand.u32 %v333, 4294901760
        %v3096 = vsub.f32 %v333, %v3095
        %3097 = vmatpush.msra.mxu0 %v3096
        %v3098 = vand.u32 %v324, 4294901760
        %v3099 = vsub.f32 %v324, %v3098
        %3100 = vmatpush.msra.mxu0 %v3099
        %v3101 = vand.u32 %v315, 4294901760
        %v3102 = vsub.f32 %v315, %v3101
        %3103 = vmatpush.msra.mxu0 %v3102
        %v3104 = vand.u32 %v306, 4294901760
        %v3105 = vsub.f32 %v306, %v3104
        %3106 = vmatpush.msra.mxu0 %v3105
        %v3107 = vand.u32 %v297, 4294901760
        %v3108 = vsub.f32 %v297, %v3107
        %3109 = vmatpush.msra.mxu0 %v3108
        %v3110 = vand.u32 %v288, 4294901760
        %v3111 = vsub.f32 %v288, %v3110
        %3112 = vmatpush.msra.mxu0 %v3111
        %v3113 = vand.u32 %v279, 4294901760
        %v3114 = vsub.f32 %v279, %v3113
        %3115 = vmatpush.msra.mxu0 %v3114
        %v3116 = vand.u32 %v270, 4294901760
        %v3117 = vsub.f32 %v270, %v3116
        %3118 = vmatpush.msra.mxu0 %v3117
        %v3119 = vand.u32 %v261, 4294901760
        %v3120 = vsub.f32 %v261, %v3119
        %3121 = vmatpush.msra.mxu0 %v3120
        %v3122 = vand.u32 %v252, 4294901760
        %v3123 = vsub.f32 %v252, %v3122
        %3124 = vmatpush.msra.mxu0 %v3123
        %v3125 = vand.u32 %v245, 4294901760
        %v3126 = vsub.f32 %v245, %v3125
        %3127 = vmatmul.f32.gmra.mxu0 %v3126
        %v3128 = vpop.f32.mrf.mxu0
        %v3129 = vadd.f32 %v3075, %v3128
        %3130 = vdwg.mxu0
        %v3131 = vand.u32 %v387, 4294901760
        %3132 = vmatpush.msra.mxu0 %v3131
        %v3133 = vand.u32 %v378, 4294901760
        %3134 = vmatpush.msra.mxu0 %v3133
        %v3135 = vand.u32 %v369, 4294901760
        %3136 = vmatpush.msra.mxu0 %v3135
        %v3137 = vand.u32 %v360, 4294901760
        %3138 = vmatpush.msra.mxu0 %v3137
        %v3139 = vand.u32 %v351, 4294901760
        %3140 = vmatpush.msra.mxu0 %v3139
        %v3141 = vand.u32 %v342, 4294901760
        %3142 = vmatpush.msra.mxu0 %v3141
        %v3143 = vand.u32 %v333, 4294901760
        %3144 = vmatpush.msra.mxu0 %v3143
        %v3145 = vand.u32 %v324, 4294901760
        %3146 = vmatpush.msra.mxu0 %v3145
        %v3147 = vand.u32 %v315, 4294901760
        %3148 = vmatpush.msra.mxu0 %v3147
        %v3149 = vand.u32 %v306, 4294901760
        %3150 = vmatpush.msra.mxu0 %v3149
        %v3151 = vand.u32 %v297, 4294901760
        %3152 = vmatpush.msra.mxu0 %v3151
        %v3153 = vand.u32 %v288, 4294901760
        %3154 = vmatpush.msra.mxu0 %v3153
        %v3155 = vand.u32 %v279, 4294901760
        %3156 = vmatpush.msra.mxu0 %v3155
        %v3157 = vand.u32 %v270, 4294901760
        %3158 = vmatpush.msra.mxu0 %v3157
        %v3159 = vand.u32 %v261, 4294901760
        %3160 = vmatpush.msra.mxu0 %v3159
        %v3161 = vand.u32 %v252, 4294901760
        %3162 = vmatpush.msra.mxu0 %v3161
        %v3163 = vand.u32 %v245, 4294901760
        %v3164 = vsub.f32 %v245, %v3163
        %v3165 = vand.u32 %v3164, 4294901760
        %3166 = vmatmul.f32.gmra.mxu0 %v3165
        %v3167 = vpop.f32.mrf.mxu0
        %v3168 = vadd.f32 %v3129, %v3167
        %3169 = vdwg.mxu0
        %v3170 = vand.u32 %v387, 4294901760
        %v3171 = vsub.f32 %v387, %v3170
        %v3172 = vand.u32 %v3171, 4294901760
        %3173 = vmatpush.msra.mxu0 %v3172
        %v3174 = vand.u32 %v378, 4294901760
        %v3175 = vsub.f32 %v378, %v3174
        %v3176 = vand.u32 %v3175, 4294901760
        %3177 = vmatpush.msra.mxu0 %v3176
        %v3178 = vand.u32 %v369, 4294901760
        %v3179 = vsub.f32 %v369, %v3178
        %v3180 = vand.u32 %v3179, 4294901760
        %3181 = vmatpush.msra.mxu0 %v3180
        %v3182 = vand.u32 %v360, 4294901760
        %v3183 = vsub.f32 %v360, %v3182
        %v3184 = vand.u32 %v3183, 4294901760
        %3185 = vmatpush.msra.mxu0 %v3184
        %v3186 = vand.u32 %v351, 4294901760
        %v3187 = vsub.f32 %v351, %v3186
        %v3188 = vand.u32 %v3187, 4294901760
        %3189 = vmatpush.msra.mxu0 %v3188
        %v3190 = vand.u32 %v342, 4294901760
        %v3191 = vsub.f32 %v342, %v3190
        %v3192 = vand.u32 %v3191, 4294901760
        %3193 = vmatpush.msra.mxu0 %v3192
        %v3194 = vand.u32 %v333, 4294901760
        %v3195 = vsub.f32 %v333, %v3194
        %v3196 = vand.u32 %v3195, 4294901760
        %3197 = vmatpush.msra.mxu0 %v3196
        %v3198 = vand.u32 %v324, 4294901760
        %v3199 = vsub.f32 %v324, %v3198
        %v3200 = vand.u32 %v3199, 4294901760
        %3201 = vmatpush.msra.mxu0 %v3200
        %v3202 = vand.u32 %v315, 4294901760
        %v3203 = vsub.f32 %v315, %v3202
        %v3204 = vand.u32 %v3203, 4294901760
        %3205 = vmatpush.msra.mxu0 %v3204
        %v3206 = vand.u32 %v306, 4294901760
        %v3207 = vsub.f32 %v306, %v3206
        %v3208 = vand.u32 %v3207, 4294901760
        %3209 = vmatpush.msra.mxu0 %v3208
        %v3210 = vand.u32 %v297, 4294901760
        %v3211 = vsub.f32 %v297, %v3210
        %v3212 = vand.u32 %v3211, 4294901760
        %3213 = vmatpush.msra.mxu0 %v3212
        %v3214 = vand.u32 %v288, 4294901760
        %v3215 = vsub.f32 %v288, %v3214
        %v3216 = vand.u32 %v3215, 4294901760
        %3217 = vmatpush.msra.mxu0 %v3216
        %v3218 = vand.u32 %v279, 4294901760
        %v3219 = vsub.f32 %v279, %v3218
        %v3220 = vand.u32 %v3219, 4294901760
        %3221 = vmatpush.msra.mxu0 %v3220
        %v3222 = vand.u32 %v270, 4294901760
        %v3223 = vsub.f32 %v270, %v3222
        %v3224 = vand.u32 %v3223, 4294901760
        %3225 = vmatpush.msra.mxu0 %v3224
        %v3226 = vand.u32 %v261, 4294901760
        %v3227 = vsub.f32 %v261, %v3226
        %v3228 = vand.u32 %v3227, 4294901760
        %3229 = vmatpush.msra.mxu0 %v3228
        %v3230 = vand.u32 %v252, 4294901760
        %v3231 = vsub.f32 %v252, %v3230
        %v3232 = vand.u32 %v3231, 4294901760
        %3233 = vmatpush.msra.mxu0 %v3232
        %v3234 = vand.u32 %v245, 4294901760
        %3235 = vmatmul.f32.gmra.mxu0 %v3234
        %v3236 = vpop.f32.mrf.mxu0
        %v3237 = vadd.f32 %v3168, %v3236
        %3238 = vdwg.mxu0
        %v3239 = vand.u32 %v387, 4294901760
        %3240 = vmatpush.msra.mxu0 %v3239
        %v3241 = vand.u32 %v378, 4294901760
        %3242 = vmatpush.msra.mxu0 %v3241
        %v3243 = vand.u32 %v369, 4294901760
        %3244 = vmatpush.msra.mxu0 %v3243
        %v3245 = vand.u32 %v360, 4294901760
        %3246 = vmatpush.msra.mxu0 %v3245
        %v3247 = vand.u32 %v351, 4294901760
        %3248 = vmatpush.msra.mxu0 %v3247
        %v3249 = vand.u32 %v342, 4294901760
        %3250 = vmatpush.msra.mxu0 %v3249
        %v3251 = vand.u32 %v333, 4294901760
        %3252 = vmatpush.msra.mxu0 %v3251
        %v3253 = vand.u32 %v324, 4294901760
        %3254 = vmatpush.msra.mxu0 %v3253
        %v3255 = vand.u32 %v315, 4294901760
        %3256 = vmatpush.msra.mxu0 %v3255
        %v3257 = vand.u32 %v306, 4294901760
        %3258 = vmatpush.msra.mxu0 %v3257
        %v3259 = vand.u32 %v297, 4294901760
        %3260 = vmatpush.msra.mxu0 %v3259
        %v3261 = vand.u32 %v288, 4294901760
        %3262 = vmatpush.msra.mxu0 %v3261
        %v3263 = vand.u32 %v279, 4294901760
        %3264 = vmatpush.msra.mxu0 %v3263
        %v3265 = vand.u32 %v270, 4294901760
        %3266 = vmatpush.msra.mxu0 %v3265
        %v3267 = vand.u32 %v261, 4294901760
        %3268 = vmatpush.msra.mxu0 %v3267
        %v3269 = vand.u32 %v252, 4294901760
        %3270 = vmatpush.msra.mxu0 %v3269
        %v3271 = vand.u32 %v245, 4294901760
        %3272 = vmatmul.f32.gmra.mxu0 %v3271
        %v3273 = vpop.f32.mrf.mxu0
        %v3274 = vadd.f32 %v3237, %v3273
        %3275 = vdwg.mxu0
        %3276 = vmatpush.msra.mxu0 0.0
        %3277 = vmatpush.msra.mxu0 0.0
        %3278 = vmatpush.msra.mxu0 0.0
        %3279 = vmatpush.msra.mxu0 0.0
        %3280 = vmatpush.msra.mxu0 0.0
        %3281 = vmatpush.msra.mxu0 0.0
        %3282 = vmatpush.msra.mxu0 0.0
        %3283 = vmatpush.msra.mxu0 0.0
        %3284 = vmatpush.msra.mxu0 0.0
        %3285 = vmatpush.msra.mxu0 0.0
        %3286 = vmatpush.msra.mxu0 0.0
        %3287 = vmatpush.msra.mxu0 0.0
        %3288 = vmatpush.msra.mxu0 0.0
        %3289 = vmatpush.msra.mxu0 0.0
        %v3290 = vand.u32 %v405, 4294901760
        %3291 = vmatpush.msra.mxu0 %v3290
        %v3292 = vand.u32 %v396, 4294901760
        %3293 = vmatpush.msra.mxu0 %v3292
        %v3294 = vand.u32 %v433, 4294901760
        %v3295 = vsub.f32 %v433, %v3294
        %v3296 = vand.u32 %v3295, 4294901760
        %v3297 = vsub.f32 %v3295, %v3296
        %v3298 = vand.u32 %v3297, 4294901760
        %3299 = vmatmul.f32.gmra.mxu0 %v3298
        %v3300 = vpop.f32.mrf.mxu0
        %v3301 = vadd.f32 %v3274, %v3300
        %3302 = vdwg.mxu0
        %3303 = vmatpush.msra.mxu0 0.0
        %3304 = vmatpush.msra.mxu0 0.0
        %3305 = vmatpush.msra.mxu0 0.0
        %3306 = vmatpush.msra.mxu0 0.0
        %3307 = vmatpush.msra.mxu0 0.0
        %3308 = vmatpush.msra.mxu0 0.0
        %3309 = vmatpush.msra.mxu0 0.0
        %3310 = vmatpush.msra.mxu0 0.0
        %3311 = vmatpush.msra.mxu0 0.0
        %3312 = vmatpush.msra.mxu0 0.0
        %3313 = vmatpush.msra.mxu0 0.0
        %3314 = vmatpush.msra.mxu0 0.0
        %3315 = vmatpush.msra.mxu0 0.0
        %3316 = vmatpush.msra.mxu0 0.0
        %v3317 = vand.u32 %v405, 4294901760
        %v3318 = vsub.f32 %v405, %v3317
        %v3319 = vand.u32 %v3318, 4294901760
        %v3320 = vsub.f32 %v3318, %v3319
        %v3321 = vand.u32 %v3320, 4294901760
        %3322 = vmatpush.msra.mxu0 %v3321
        %v3323 = vand.u32 %v396, 4294901760
        %v3324 = vsub.f32 %v396, %v3323
        %v3325 = vand.u32 %v3324, 4294901760
        %v3326 = vsub.f32 %v3324, %v3325
        %v3327 = vand.u32 %v3326, 4294901760
        %3328 = vmatpush.msra.mxu0 %v3327
        %v3329 = vand.u32 %v433, 4294901760
        %3330 = vmatmul.f32.gmra.mxu0 %v3329
        %v3331 = vpop.f32.mrf.mxu0
        %v3332 = vadd.f32 %v3301, %v3331
        %3333 = vdwg.mxu0
        %3334 = vmatpush.msra.mxu0 0.0
        %3335 = vmatpush.msra.mxu0 0.0
        %3336 = vmatpush.msra.mxu0 0.0
        %3337 = vmatpush.msra.mxu0 0.0
        %3338 = vmatpush.msra.mxu0 0.0
        %3339 = vmatpush.msra.mxu0 0.0
        %3340 = vmatpush.msra.mxu0 0.0
        %3341 = vmatpush.msra.mxu0 0.0
        %3342 = vmatpush.msra.mxu0 0.0
        %3343 = vmatpush.msra.mxu0 0.0
        %3344 = vmatpush.msra.mxu0 0.0
        %3345 = vmatpush.msra.mxu0 0.0
        %3346 = vmatpush.msra.mxu0 0.0
        %3347 = vmatpush.msra.mxu0 0.0
        %v3348 = vand.u32 %v405, 4294901760
        %v3349 = vsub.f32 %v405, %v3348
        %3350 = vmatpush.msra.mxu0 %v3349
        %v3351 = vand.u32 %v396, 4294901760
        %v3352 = vsub.f32 %v396, %v3351
        %3353 = vmatpush.msra.mxu0 %v3352
        %v3354 = vand.u32 %v433, 4294901760
        %v3355 = vsub.f32 %v433, %v3354
        %3356 = vmatmul.f32.gmra.mxu0 %v3355
        %v3357 = vpop.f32.mrf.mxu0
        %v3358 = vadd.f32 %v3332, %v3357
        %3359 = vdwg.mxu0
        %3360 = vmatpush.msra.mxu0 0.0
        %3361 = vmatpush.msra.mxu0 0.0
        %3362 = vmatpush.msra.mxu0 0.0
        %3363 = vmatpush.msra.mxu0 0.0
        %3364 = vmatpush.msra.mxu0 0.0
        %3365 = vmatpush.msra.mxu0 0.0
        %3366 = vmatpush.msra.mxu0 0.0
        %3367 = vmatpush.msra.mxu0 0.0
        %3368 = vmatpush.msra.mxu0 0.0
        %3369 = vmatpush.msra.mxu0 0.0
        %3370 = vmatpush.msra.mxu0 0.0
        %3371 = vmatpush.msra.mxu0 0.0
        %3372 = vmatpush.msra.mxu0 0.0
        %3373 = vmatpush.msra.mxu0 0.0
        %v3374 = vand.u32 %v405, 4294901760
        %3375 = vmatpush.msra.mxu0 %v3374
        %v3376 = vand.u32 %v396, 4294901760
        %3377 = vmatpush.msra.mxu0 %v3376
        %v3378 = vand.u32 %v433, 4294901760
        %v3379 = vsub.f32 %v433, %v3378
        %v3380 = vand.u32 %v3379, 4294901760
        %3381 = vmatmul.f32.gmra.mxu0 %v3380
        %v3382 = vpop.f32.mrf.mxu0
        %v3383 = vadd.f32 %v3358, %v3382
        %3384 = vdwg.mxu0
        %3385 = vmatpush.msra.mxu0 0.0
        %3386 = vmatpush.msra.mxu0 0.0
        %3387 = vmatpush.msra.mxu0 0.0
        %3388 = vmatpush.msra.mxu0 0.0
        %3389 = vmatpush.msra.mxu0 0.0
        %3390 = vmatpush.msra.mxu0 0.0
        %3391 = vmatpush.msra.mxu0 0.0
        %3392 = vmatpush.msra.mxu0 0.0
        %3393 = vmatpush.msra.mxu0 0.0
        %3394 = vmatpush.msra.mxu0 0.0
        %3395 = vmatpush.msra.mxu0 0.0
        %3396 = vmatpush.msra.mxu0 0.0
        %3397 = vmatpush.msra.mxu0 0.0
        %3398 = vmatpush.msra.mxu0 0.0
        %v3399 = vand.u32 %v405, 4294901760
        %v3400 = vsub.f32 %v405, %v3399
        %v3401 = vand.u32 %v3400, 4294901760
        %3402 = vmatpush.msra.mxu0 %v3401
        %v3403 = vand.u32 %v396, 4294901760
        %v3404 = vsub.f32 %v396, %v3403
        %v3405 = vand.u32 %v3404, 4294901760
        %3406 = vmatpush.msra.mxu0 %v3405
        %v3407 = vand.u32 %v433, 4294901760
        %3408 = vmatmul.f32.gmra.mxu0 %v3407
        %v3409 = vpop.f32.mrf.mxu0
        %v3410 = vadd.f32 %v3383, %v3409
        %3411 = vdwg.mxu0
        %3412 = vmatpush.msra.mxu0 0.0
        %3413 = vmatpush.msra.mxu0 0.0
        %3414 = vmatpush.msra.mxu0 0.0
        %3415 = vmatpush.msra.mxu0 0.0
        %3416 = vmatpush.msra.mxu0 0.0
        %3417 = vmatpush.msra.mxu0 0.0
        %3418 = vmatpush.msra.mxu0 0.0
        %3419 = vmatpush.msra.mxu0 0.0
        %3420 = vmatpush.msra.mxu0 0.0
        %3421 = vmatpush.msra.mxu0 0.0
        %3422 = vmatpush.msra.mxu0 0.0
        %3423 = vmatpush.msra.mxu0 0.0
        %3424 = vmatpush.msra.mxu0 0.0
        %3425 = vmatpush.msra.mxu0 0.0
        %v3426 = vand.u32 %v405, 4294901760
        %3427 = vmatpush.msra.mxu0 %v3426
        %v3428 = vand.u32 %v396, 4294901760
        %3429 = vmatpush.msra.mxu0 %v3428
        %v3430 = vand.u32 %v433, 4294901760
        %3431 = vmatmul.f32.gmra.mxu0 %v3430
        %v3432 = vpop.f32.mrf.mxu0
        %v3433 = vadd.f32 %v3410, %v3432
        %3434 = vdwg.mxu0
        %v3435 = vand.u32 %v388, 4294901760
        %3436 = vmatpush.msra.mxu0 %v3435
        %v3437 = vand.u32 %v379, 4294901760
        %3438 = vmatpush.msra.mxu0 %v3437
        %v3439 = vand.u32 %v370, 4294901760
        %3440 = vmatpush.msra.mxu0 %v3439
        %v3441 = vand.u32 %v361, 4294901760
        %3442 = vmatpush.msra.mxu0 %v3441
        %v3443 = vand.u32 %v352, 4294901760
        %3444 = vmatpush.msra.mxu0 %v3443
        %v3445 = vand.u32 %v343, 4294901760
        %3446 = vmatpush.msra.mxu0 %v3445
        %v3447 = vand.u32 %v334, 4294901760
        %3448 = vmatpush.msra.mxu0 %v3447
        %v3449 = vand.u32 %v325, 4294901760
        %3450 = vmatpush.msra.mxu0 %v3449
        %v3451 = vand.u32 %v316, 4294901760
        %3452 = vmatpush.msra.mxu0 %v3451
        %v3453 = vand.u32 %v307, 4294901760
        %3454 = vmatpush.msra.mxu0 %v3453
        %v3455 = vand.u32 %v298, 4294901760
        %3456 = vmatpush.msra.mxu0 %v3455
        %v3457 = vand.u32 %v289, 4294901760
        %3458 = vmatpush.msra.mxu0 %v3457
        %v3459 = vand.u32 %v280, 4294901760
        %3460 = vmatpush.msra.mxu0 %v3459
        %v3461 = vand.u32 %v271, 4294901760
        %3462 = vmatpush.msra.mxu0 %v3461
        %v3463 = vand.u32 %v262, 4294901760
        %3464 = vmatpush.msra.mxu0 %v3463
        %v3465 = vand.u32 %v253, 4294901760
        %3466 = vmatpush.msra.mxu0 %v3465
        %v3467 = vand.u32 %v245, 4294901760
        %v3468 = vsub.f32 %v245, %v3467
        %v3469 = vand.u32 %v3468, 4294901760
        %v3470 = vsub.f32 %v3468, %v3469
        %v3471 = vand.u32 %v3470, 4294901760
        %3472 = vmatmul.f32.gmra.mxu0 %v3471
        %v3473 = vpop.f32.mrf.mxu0
        %v3474 = vadd.f32 %v419, %v3473
        %3475 = vdwg.mxu0
        %v3476 = vand.u32 %v388, 4294901760
        %v3477 = vsub.f32 %v388, %v3476
        %v3478 = vand.u32 %v3477, 4294901760
        %v3479 = vsub.f32 %v3477, %v3478
        %v3480 = vand.u32 %v3479, 4294901760
        %3481 = vmatpush.msra.mxu0 %v3480
        %v3482 = vand.u32 %v379, 4294901760
        %v3483 = vsub.f32 %v379, %v3482
        %v3484 = vand.u32 %v3483, 4294901760
        %v3485 = vsub.f32 %v3483, %v3484
        %v3486 = vand.u32 %v3485, 4294901760
        %3487 = vmatpush.msra.mxu0 %v3486
        %v3488 = vand.u32 %v370, 4294901760
        %v3489 = vsub.f32 %v370, %v3488
        %v3490 = vand.u32 %v3489, 4294901760
        %v3491 = vsub.f32 %v3489, %v3490
        %v3492 = vand.u32 %v3491, 4294901760
        %3493 = vmatpush.msra.mxu0 %v3492
        %v3494 = vand.u32 %v361, 4294901760
        %v3495 = vsub.f32 %v361, %v3494
        %v3496 = vand.u32 %v3495, 4294901760
        %v3497 = vsub.f32 %v3495, %v3496
        %v3498 = vand.u32 %v3497, 4294901760
        %3499 = vmatpush.msra.mxu0 %v3498
        %v3500 = vand.u32 %v352, 4294901760
        %v3501 = vsub.f32 %v352, %v3500
        %v3502 = vand.u32 %v3501, 4294901760
        %v3503 = vsub.f32 %v3501, %v3502
        %v3504 = vand.u32 %v3503, 4294901760
        %3505 = vmatpush.msra.mxu0 %v3504
        %v3506 = vand.u32 %v343, 4294901760
        %v3507 = vsub.f32 %v343, %v3506
        %v3508 = vand.u32 %v3507, 4294901760
        %v3509 = vsub.f32 %v3507, %v3508
        %v3510 = vand.u32 %v3509, 4294901760
        %3511 = vmatpush.msra.mxu0 %v3510
        %v3512 = vand.u32 %v334, 4294901760
        %v3513 = vsub.f32 %v334, %v3512
        %v3514 = vand.u32 %v3513, 4294901760
        %v3515 = vsub.f32 %v3513, %v3514
        %v3516 = vand.u32 %v3515, 4294901760
        %3517 = vmatpush.msra.mxu0 %v3516
        %v3518 = vand.u32 %v325, 4294901760
        %v3519 = vsub.f32 %v325, %v3518
        %v3520 = vand.u32 %v3519, 4294901760
        %v3521 = vsub.f32 %v3519, %v3520
        %v3522 = vand.u32 %v3521, 4294901760
        %3523 = vmatpush.msra.mxu0 %v3522
        %v3524 = vand.u32 %v316, 4294901760
        %v3525 = vsub.f32 %v316, %v3524
        %v3526 = vand.u32 %v3525, 4294901760
        %v3527 = vsub.f32 %v3525, %v3526
        %v3528 = vand.u32 %v3527, 4294901760
        %3529 = vmatpush.msra.mxu0 %v3528
        %v3530 = vand.u32 %v307, 4294901760
        %v3531 = vsub.f32 %v307, %v3530
        %v3532 = vand.u32 %v3531, 4294901760
        %v3533 = vsub.f32 %v3531, %v3532
        %v3534 = vand.u32 %v3533, 4294901760
        %3535 = vmatpush.msra.mxu0 %v3534
        %v3536 = vand.u32 %v298, 4294901760
        %v3537 = vsub.f32 %v298, %v3536
        %v3538 = vand.u32 %v3537, 4294901760
        %v3539 = vsub.f32 %v3537, %v3538
        %v3540 = vand.u32 %v3539, 4294901760
        %3541 = vmatpush.msra.mxu0 %v3540
        %v3542 = vand.u32 %v289, 4294901760
        %v3543 = vsub.f32 %v289, %v3542
        %v3544 = vand.u32 %v3543, 4294901760
        %v3545 = vsub.f32 %v3543, %v3544
        %v3546 = vand.u32 %v3545, 4294901760
        %3547 = vmatpush.msra.mxu0 %v3546
        %v3548 = vand.u32 %v280, 4294901760
        %v3549 = vsub.f32 %v280, %v3548
        %v3550 = vand.u32 %v3549, 4294901760
        %v3551 = vsub.f32 %v3549, %v3550
        %v3552 = vand.u32 %v3551, 4294901760
        %3553 = vmatpush.msra.mxu0 %v3552
        %v3554 = vand.u32 %v271, 4294901760
        %v3555 = vsub.f32 %v271, %v3554
        %v3556 = vand.u32 %v3555, 4294901760
        %v3557 = vsub.f32 %v3555, %v3556
        %v3558 = vand.u32 %v3557, 4294901760
        %3559 = vmatpush.msra.mxu0 %v3558
        %v3560 = vand.u32 %v262, 4294901760
        %v3561 = vsub.f32 %v262, %v3560
        %v3562 = vand.u32 %v3561, 4294901760
        %v3563 = vsub.f32 %v3561, %v3562
        %v3564 = vand.u32 %v3563, 4294901760
        %3565 = vmatpush.msra.mxu0 %v3564
        %v3566 = vand.u32 %v253, 4294901760
        %v3567 = vsub.f32 %v253, %v3566
        %v3568 = vand.u32 %v3567, 4294901760
        %v3569 = vsub.f32 %v3567, %v3568
        %v3570 = vand.u32 %v3569, 4294901760
        %3571 = vmatpush.msra.mxu0 %v3570
        %v3572 = vand.u32 %v245, 4294901760
        %3573 = vmatmul.f32.gmra.mxu0 %v3572
        %v3574 = vpop.f32.mrf.mxu0
        %v3575 = vadd.f32 %v3474, %v3574
        %3576 = vdwg.mxu0
        %v3577 = vand.u32 %v388, 4294901760
        %v3578 = vsub.f32 %v388, %v3577
        %3579 = vmatpush.msra.mxu0 %v3578
        %v3580 = vand.u32 %v379, 4294901760
        %v3581 = vsub.f32 %v379, %v3580
        %3582 = vmatpush.msra.mxu0 %v3581
        %v3583 = vand.u32 %v370, 4294901760
        %v3584 = vsub.f32 %v370, %v3583
        %3585 = vmatpush.msra.mxu0 %v3584
        %v3586 = vand.u32 %v361, 4294901760
        %v3587 = vsub.f32 %v361, %v3586
        %3588 = vmatpush.msra.mxu0 %v3587
        %v3589 = vand.u32 %v352, 4294901760
        %v3590 = vsub.f32 %v352, %v3589
        %3591 = vmatpush.msra.mxu0 %v3590
        %v3592 = vand.u32 %v343, 4294901760
        %v3593 = vsub.f32 %v343, %v3592
        %3594 = vmatpush.msra.mxu0 %v3593
        %v3595 = vand.u32 %v334, 4294901760
        %v3596 = vsub.f32 %v334, %v3595
        %3597 = vmatpush.msra.mxu0 %v3596
        %v3598 = vand.u32 %v325, 4294901760
        %v3599 = vsub.f32 %v325, %v3598
        %3600 = vmatpush.msra.mxu0 %v3599
        %v3601 = vand.u32 %v316, 4294901760
        %v3602 = vsub.f32 %v316, %v3601
        %3603 = vmatpush.msra.mxu0 %v3602
        %v3604 = vand.u32 %v307, 4294901760
        %v3605 = vsub.f32 %v307, %v3604
        %3606 = vmatpush.msra.mxu0 %v3605
        %v3607 = vand.u32 %v298, 4294901760
        %v3608 = vsub.f32 %v298, %v3607
        %3609 = vmatpush.msra.mxu0 %v3608
        %v3610 = vand.u32 %v289, 4294901760
        %v3611 = vsub.f32 %v289, %v3610
        %3612 = vmatpush.msra.mxu0 %v3611
        %v3613 = vand.u32 %v280, 4294901760
        %v3614 = vsub.f32 %v280, %v3613
        %3615 = vmatpush.msra.mxu0 %v3614
        %v3616 = vand.u32 %v271, 4294901760
        %v3617 = vsub.f32 %v271, %v3616
        %3618 = vmatpush.msra.mxu0 %v3617
        %v3619 = vand.u32 %v262, 4294901760
        %v3620 = vsub.f32 %v262, %v3619
        %3621 = vmatpush.msra.mxu0 %v3620
        %v3622 = vand.u32 %v253, 4294901760
        %v3623 = vsub.f32 %v253, %v3622
        %3624 = vmatpush.msra.mxu0 %v3623
        %v3625 = vand.u32 %v245, 4294901760
        %v3626 = vsub.f32 %v245, %v3625
        %3627 = vmatmul.f32.gmra.mxu0 %v3626
        %v3628 = vpop.f32.mrf.mxu0
        %v3629 = vadd.f32 %v3575, %v3628
        %3630 = vdwg.mxu0
        %v3631 = vand.u32 %v388, 4294901760
        %3632 = vmatpush.msra.mxu0 %v3631
        %v3633 = vand.u32 %v379, 4294901760
        %3634 = vmatpush.msra.mxu0 %v3633
        %v3635 = vand.u32 %v370, 4294901760
        %3636 = vmatpush.msra.mxu0 %v3635
        %v3637 = vand.u32 %v361, 4294901760
        %3638 = vmatpush.msra.mxu0 %v3637
        %v3639 = vand.u32 %v352, 4294901760
        %3640 = vmatpush.msra.mxu0 %v3639
        %v3641 = vand.u32 %v343, 4294901760
        %3642 = vmatpush.msra.mxu0 %v3641
        %v3643 = vand.u32 %v334, 4294901760
        %3644 = vmatpush.msra.mxu0 %v3643
        %v3645 = vand.u32 %v325, 4294901760
        %3646 = vmatpush.msra.mxu0 %v3645
        %v3647 = vand.u32 %v316, 4294901760
        %3648 = vmatpush.msra.mxu0 %v3647
        %v3649 = vand.u32 %v307, 4294901760
        %3650 = vmatpush.msra.mxu0 %v3649
        %v3651 = vand.u32 %v298, 4294901760
        %3652 = vmatpush.msra.mxu0 %v3651
        %v3653 = vand.u32 %v289, 4294901760
        %3654 = vmatpush.msra.mxu0 %v3653
        %v3655 = vand.u32 %v280, 4294901760
        %3656 = vmatpush.msra.mxu0 %v3655
        %v3657 = vand.u32 %v271, 4294901760
        %3658 = vmatpush.msra.mxu0 %v3657
        %v3659 = vand.u32 %v262, 4294901760
        %3660 = vmatpush.msra.mxu0 %v3659
        %v3661 = vand.u32 %v253, 4294901760
        %3662 = vmatpush.msra.mxu0 %v3661
        %v3663 = vand.u32 %v245, 4294901760
        %v3664 = vsub.f32 %v245, %v3663
        %v3665 = vand.u32 %v3664, 4294901760
        %3666 = vmatmul.f32.gmra.mxu0 %v3665
        %v3667 = vpop.f32.mrf.mxu0
        %v3668 = vadd.f32 %v3629, %v3667
        %3669 = vdwg.mxu0
        %v3670 = vand.u32 %v388, 4294901760
        %v3671 = vsub.f32 %v388, %v3670
        %v3672 = vand.u32 %v3671, 4294901760
        %3673 = vmatpush.msra.mxu0 %v3672
        %v3674 = vand.u32 %v379, 4294901760
        %v3675 = vsub.f32 %v379, %v3674
        %v3676 = vand.u32 %v3675, 4294901760
        %3677 = vmatpush.msra.mxu0 %v3676
        %v3678 = vand.u32 %v370, 4294901760
        %v3679 = vsub.f32 %v370, %v3678
        %v3680 = vand.u32 %v3679, 4294901760
        %3681 = vmatpush.msra.mxu0 %v3680
        %v3682 = vand.u32 %v361, 4294901760
        %v3683 = vsub.f32 %v361, %v3682
        %v3684 = vand.u32 %v3683, 4294901760
        %3685 = vmatpush.msra.mxu0 %v3684
        %v3686 = vand.u32 %v352, 4294901760
        %v3687 = vsub.f32 %v352, %v3686
        %v3688 = vand.u32 %v3687, 4294901760
        %3689 = vmatpush.msra.mxu0 %v3688
        %v3690 = vand.u32 %v343, 4294901760
        %v3691 = vsub.f32 %v343, %v3690
        %v3692 = vand.u32 %v3691, 4294901760
        %3693 = vmatpush.msra.mxu0 %v3692
        %v3694 = vand.u32 %v334, 4294901760
        %v3695 = vsub.f32 %v334, %v3694
        %v3696 = vand.u32 %v3695, 4294901760
        %3697 = vmatpush.msra.mxu0 %v3696
        %v3698 = vand.u32 %v325, 4294901760
        %v3699 = vsub.f32 %v325, %v3698
        %v3700 = vand.u32 %v3699, 4294901760
        %3701 = vmatpush.msra.mxu0 %v3700
        %v3702 = vand.u32 %v316, 4294901760
        %v3703 = vsub.f32 %v316, %v3702
        %v3704 = vand.u32 %v3703, 4294901760
        %3705 = vmatpush.msra.mxu0 %v3704
        %v3706 = vand.u32 %v307, 4294901760
        %v3707 = vsub.f32 %v307, %v3706
        %v3708 = vand.u32 %v3707, 4294901760
        %3709 = vmatpush.msra.mxu0 %v3708
        %v3710 = vand.u32 %v298, 4294901760
        %v3711 = vsub.f32 %v298, %v3710
        %v3712 = vand.u32 %v3711, 4294901760
        %3713 = vmatpush.msra.mxu0 %v3712
        %v3714 = vand.u32 %v289, 4294901760
        %v3715 = vsub.f32 %v289, %v3714
        %v3716 = vand.u32 %v3715, 4294901760
        %3717 = vmatpush.msra.mxu0 %v3716
        %v3718 = vand.u32 %v280, 4294901760
        %v3719 = vsub.f32 %v280, %v3718
        %v3720 = vand.u32 %v3719, 4294901760
        %3721 = vmatpush.msra.mxu0 %v3720
        %v3722 = vand.u32 %v271, 4294901760
        %v3723 = vsub.f32 %v271, %v3722
        %v3724 = vand.u32 %v3723, 4294901760
        %3725 = vmatpush.msra.mxu0 %v3724
        %v3726 = vand.u32 %v262, 4294901760
        %v3727 = vsub.f32 %v262, %v3726
        %v3728 = vand.u32 %v3727, 4294901760
        %3729 = vmatpush.msra.mxu0 %v3728
        %v3730 = vand.u32 %v253, 4294901760
        %v3731 = vsub.f32 %v253, %v3730
        %v3732 = vand.u32 %v3731, 4294901760
        %3733 = vmatpush.msra.mxu0 %v3732
        %v3734 = vand.u32 %v245, 4294901760
        %3735 = vmatmul.f32.gmra.mxu0 %v3734
        %v3736 = vpop.f32.mrf.mxu0
        %v3737 = vadd.f32 %v3668, %v3736
        %3738 = vdwg.mxu0
        %v3739 = vand.u32 %v388, 4294901760
        %3740 = vmatpush.msra.mxu0 %v3739
        %v3741 = vand.u32 %v379, 4294901760
        %3742 = vmatpush.msra.mxu0 %v3741
        %v3743 = vand.u32 %v370, 4294901760
        %3744 = vmatpush.msra.mxu0 %v3743
        %v3745 = vand.u32 %v361, 4294901760
        %3746 = vmatpush.msra.mxu0 %v3745
        %v3747 = vand.u32 %v352, 4294901760
        %3748 = vmatpush.msra.mxu0 %v3747
        %v3749 = vand.u32 %v343, 4294901760
        %3750 = vmatpush.msra.mxu0 %v3749
        %v3751 = vand.u32 %v334, 4294901760
        %3752 = vmatpush.msra.mxu0 %v3751
        %v3753 = vand.u32 %v325, 4294901760
        %3754 = vmatpush.msra.mxu0 %v3753
        %v3755 = vand.u32 %v316, 4294901760
        %3756 = vmatpush.msra.mxu0 %v3755
        %v3757 = vand.u32 %v307, 4294901760
        %3758 = vmatpush.msra.mxu0 %v3757
        %v3759 = vand.u32 %v298, 4294901760
        %3760 = vmatpush.msra.mxu0 %v3759
        %v3761 = vand.u32 %v289, 4294901760
        %3762 = vmatpush.msra.mxu0 %v3761
        %v3763 = vand.u32 %v280, 4294901760
        %3764 = vmatpush.msra.mxu0 %v3763
        %v3765 = vand.u32 %v271, 4294901760
        %3766 = vmatpush.msra.mxu0 %v3765
        %v3767 = vand.u32 %v262, 4294901760
        %3768 = vmatpush.msra.mxu0 %v3767
        %v3769 = vand.u32 %v253, 4294901760
        %3770 = vmatpush.msra.mxu0 %v3769
        %v3771 = vand.u32 %v245, 4294901760
        %3772 = vmatmul.f32.gmra.mxu0 %v3771
        %v3773 = vpop.f32.mrf.mxu0
        %v3774 = vadd.f32 %v3737, %v3773
        %3775 = vdwg.mxu0
        %3776 = vmatpush.msra.mxu0 0.0
        %3777 = vmatpush.msra.mxu0 0.0
        %3778 = vmatpush.msra.mxu0 0.0
        %3779 = vmatpush.msra.mxu0 0.0
        %3780 = vmatpush.msra.mxu0 0.0
        %3781 = vmatpush.msra.mxu0 0.0
        %3782 = vmatpush.msra.mxu0 0.0
        %3783 = vmatpush.msra.mxu0 0.0
        %3784 = vmatpush.msra.mxu0 0.0
        %3785 = vmatpush.msra.mxu0 0.0
        %3786 = vmatpush.msra.mxu0 0.0
        %3787 = vmatpush.msra.mxu0 0.0
        %3788 = vmatpush.msra.mxu0 0.0
        %3789 = vmatpush.msra.mxu0 0.0
        %v3790 = vand.u32 %v406, 4294901760
        %3791 = vmatpush.msra.mxu0 %v3790
        %v3792 = vand.u32 %v397, 4294901760
        %3793 = vmatpush.msra.mxu0 %v3792
        %v3794 = vand.u32 %v433, 4294901760
        %v3795 = vsub.f32 %v433, %v3794
        %v3796 = vand.u32 %v3795, 4294901760
        %v3797 = vsub.f32 %v3795, %v3796
        %v3798 = vand.u32 %v3797, 4294901760
        %3799 = vmatmul.f32.gmra.mxu0 %v3798
        %v3800 = vpop.f32.mrf.mxu0
        %v3801 = vadd.f32 %v3774, %v3800
        %3802 = vdwg.mxu0
        %3803 = vmatpush.msra.mxu0 0.0
        %3804 = vmatpush.msra.mxu0 0.0
        %3805 = vmatpush.msra.mxu0 0.0
        %3806 = vmatpush.msra.mxu0 0.0
        %3807 = vmatpush.msra.mxu0 0.0
        %3808 = vmatpush.msra.mxu0 0.0
        %3809 = vmatpush.msra.mxu0 0.0
        %3810 = vmatpush.msra.mxu0 0.0
        %3811 = vmatpush.msra.mxu0 0.0
        %3812 = vmatpush.msra.mxu0 0.0
        %3813 = vmatpush.msra.mxu0 0.0
        %3814 = vmatpush.msra.mxu0 0.0
        %3815 = vmatpush.msra.mxu0 0.0
        %3816 = vmatpush.msra.mxu0 0.0
        %v3817 = vand.u32 %v406, 4294901760
        %v3818 = vsub.f32 %v406, %v3817
        %v3819 = vand.u32 %v3818, 4294901760
        %v3820 = vsub.f32 %v3818, %v3819
        %v3821 = vand.u32 %v3820, 4294901760
        %3822 = vmatpush.msra.mxu0 %v3821
        %v3823 = vand.u32 %v397, 4294901760
        %v3824 = vsub.f32 %v397, %v3823
        %v3825 = vand.u32 %v3824, 4294901760
        %v3826 = vsub.f32 %v3824, %v3825
        %v3827 = vand.u32 %v3826, 4294901760
        %3828 = vmatpush.msra.mxu0 %v3827
        %v3829 = vand.u32 %v433, 4294901760
        %3830 = vmatmul.f32.gmra.mxu0 %v3829
        %v3831 = vpop.f32.mrf.mxu0
        %v3832 = vadd.f32 %v3801, %v3831
        %3833 = vdwg.mxu0
        %3834 = vmatpush.msra.mxu0 0.0
        %3835 = vmatpush.msra.mxu0 0.0
        %3836 = vmatpush.msra.mxu0 0.0
        %3837 = vmatpush.msra.mxu0 0.0
        %3838 = vmatpush.msra.mxu0 0.0
        %3839 = vmatpush.msra.mxu0 0.0
        %3840 = vmatpush.msra.mxu0 0.0
        %3841 = vmatpush.msra.mxu0 0.0
        %3842 = vmatpush.msra.mxu0 0.0
        %3843 = vmatpush.msra.mxu0 0.0
        %3844 = vmatpush.msra.mxu0 0.0
        %3845 = vmatpush.msra.mxu0 0.0
        %3846 = vmatpush.msra.mxu0 0.0
        %3847 = vmatpush.msra.mxu0 0.0
        %v3848 = vand.u32 %v406, 4294901760
        %v3849 = vsub.f32 %v406, %v3848
        %3850 = vmatpush.msra.mxu0 %v3849
        %v3851 = vand.u32 %v397, 4294901760
        %v3852 = vsub.f32 %v397, %v3851
        %3853 = vmatpush.msra.mxu0 %v3852
        %v3854 = vand.u32 %v433, 4294901760
        %v3855 = vsub.f32 %v433, %v3854
        %3856 = vmatmul.f32.gmra.mxu0 %v3855
        %v3857 = vpop.f32.mrf.mxu0
        %v3858 = vadd.f32 %v3832, %v3857
        %3859 = vdwg.mxu0
        %3860 = vmatpush.msra.mxu0 0.0
        %3861 = vmatpush.msra.mxu0 0.0
        %3862 = vmatpush.msra.mxu0 0.0
        %3863 = vmatpush.msra.mxu0 0.0
        %3864 = vmatpush.msra.mxu0 0.0
        %3865 = vmatpush.msra.mxu0 0.0
        %3866 = vmatpush.msra.mxu0 0.0
        %3867 = vmatpush.msra.mxu0 0.0
        %3868 = vmatpush.msra.mxu0 0.0
        %3869 = vmatpush.msra.mxu0 0.0
        %3870 = vmatpush.msra.mxu0 0.0
        %3871 = vmatpush.msra.mxu0 0.0
        %3872 = vmatpush.msra.mxu0 0.0
        %3873 = vmatpush.msra.mxu0 0.0
        %v3874 = vand.u32 %v406, 4294901760
        %3875 = vmatpush.msra.mxu0 %v3874
        %v3876 = vand.u32 %v397, 4294901760
        %3877 = vmatpush.msra.mxu0 %v3876
        %v3878 = vand.u32 %v433, 4294901760
        %v3879 = vsub.f32 %v433, %v3878
        %v3880 = vand.u32 %v3879, 4294901760
        %3881 = vmatmul.f32.gmra.mxu0 %v3880
        %v3882 = vpop.f32.mrf.mxu0
        %v3883 = vadd.f32 %v3858, %v3882
        %3884 = vdwg.mxu0
        %3885 = vmatpush.msra.mxu0 0.0
        %3886 = vmatpush.msra.mxu0 0.0
        %3887 = vmatpush.msra.mxu0 0.0
        %3888 = vmatpush.msra.mxu0 0.0
        %3889 = vmatpush.msra.mxu0 0.0
        %3890 = vmatpush.msra.mxu0 0.0
        %3891 = vmatpush.msra.mxu0 0.0
        %3892 = vmatpush.msra.mxu0 0.0
        %3893 = vmatpush.msra.mxu0 0.0
        %3894 = vmatpush.msra.mxu0 0.0
        %3895 = vmatpush.msra.mxu0 0.0
        %3896 = vmatpush.msra.mxu0 0.0
        %3897 = vmatpush.msra.mxu0 0.0
        %3898 = vmatpush.msra.mxu0 0.0
        %v3899 = vand.u32 %v406, 4294901760
        %v3900 = vsub.f32 %v406, %v3899
        %v3901 = vand.u32 %v3900, 4294901760
        %3902 = vmatpush.msra.mxu0 %v3901
        %v3903 = vand.u32 %v397, 4294901760
        %v3904 = vsub.f32 %v397, %v3903
        %v3905 = vand.u32 %v3904, 4294901760
        %3906 = vmatpush.msra.mxu0 %v3905
        %v3907 = vand.u32 %v433, 4294901760
        %3908 = vmatmul.f32.gmra.mxu0 %v3907
        %v3909 = vpop.f32.mrf.mxu0
        %v3910 = vadd.f32 %v3883, %v3909
        %3911 = vdwg.mxu0
        %3912 = vmatpush.msra.mxu0 0.0
        %3913 = vmatpush.msra.mxu0 0.0
        %3914 = vmatpush.msra.mxu0 0.0
        %3915 = vmatpush.msra.mxu0 0.0
        %3916 = vmatpush.msra.mxu0 0.0
        %3917 = vmatpush.msra.mxu0 0.0
        %3918 = vmatpush.msra.mxu0 0.0
        %3919 = vmatpush.msra.mxu0 0.0
        %3920 = vmatpush.msra.mxu0 0.0
        %3921 = vmatpush.msra.mxu0 0.0
        %3922 = vmatpush.msra.mxu0 0.0
        %3923 = vmatpush.msra.mxu0 0.0
        %3924 = vmatpush.msra.mxu0 0.0
        %3925 = vmatpush.msra.mxu0 0.0
        %v3926 = vand.u32 %v406, 4294901760
        %3927 = vmatpush.msra.mxu0 %v3926
        %v3928 = vand.u32 %v397, 4294901760
        %3929 = vmatpush.msra.mxu0 %v3928
        %v3930 = vand.u32 %v433, 4294901760
        %3931 = vmatmul.f32.gmra.mxu0 %v3930
        %v3932 = vpop.f32.mrf.mxu0
        %v3933 = vadd.f32 %v3910, %v3932
        %3934 = vdwg.mxu0
        %v3935 = vand.u32 %v389, 4294901760
        %3936 = vmatpush.msra.mxu0 %v3935
        %v3937 = vand.u32 %v380, 4294901760
        %3938 = vmatpush.msra.mxu0 %v3937
        %v3939 = vand.u32 %v371, 4294901760
        %3940 = vmatpush.msra.mxu0 %v3939
        %v3941 = vand.u32 %v362, 4294901760
        %3942 = vmatpush.msra.mxu0 %v3941
        %v3943 = vand.u32 %v353, 4294901760
        %3944 = vmatpush.msra.mxu0 %v3943
        %v3945 = vand.u32 %v344, 4294901760
        %3946 = vmatpush.msra.mxu0 %v3945
        %v3947 = vand.u32 %v335, 4294901760
        %3948 = vmatpush.msra.mxu0 %v3947
        %v3949 = vand.u32 %v326, 4294901760
        %3950 = vmatpush.msra.mxu0 %v3949
        %v3951 = vand.u32 %v317, 4294901760
        %3952 = vmatpush.msra.mxu0 %v3951
        %v3953 = vand.u32 %v308, 4294901760
        %3954 = vmatpush.msra.mxu0 %v3953
        %v3955 = vand.u32 %v299, 4294901760
        %3956 = vmatpush.msra.mxu0 %v3955
        %v3957 = vand.u32 %v290, 4294901760
        %3958 = vmatpush.msra.mxu0 %v3957
        %v3959 = vand.u32 %v281, 4294901760
        %3960 = vmatpush.msra.mxu0 %v3959
        %v3961 = vand.u32 %v272, 4294901760
        %3962 = vmatpush.msra.mxu0 %v3961
        %v3963 = vand.u32 %v263, 4294901760
        %3964 = vmatpush.msra.mxu0 %v3963
        %v3965 = vand.u32 %v254, 4294901760
        %3966 = vmatpush.msra.mxu0 %v3965
        %v3967 = vand.u32 %v245, 4294901760
        %v3968 = vsub.f32 %v245, %v3967
        %v3969 = vand.u32 %v3968, 4294901760
        %v3970 = vsub.f32 %v3968, %v3969
        %v3971 = vand.u32 %v3970, 4294901760
        %3972 = vmatmul.f32.gmra.mxu0 %v3971
        %v3973 = vpop.f32.mrf.mxu0
        %v3974 = vadd.f32 %v420, %v3973
        %3975 = vdwg.mxu0
        %v3976 = vand.u32 %v389, 4294901760
        %v3977 = vsub.f32 %v389, %v3976
        %v3978 = vand.u32 %v3977, 4294901760
        %v3979 = vsub.f32 %v3977, %v3978
        %v3980 = vand.u32 %v3979, 4294901760
        %3981 = vmatpush.msra.mxu0 %v3980
        %v3982 = vand.u32 %v380, 4294901760
        %v3983 = vsub.f32 %v380, %v3982
        %v3984 = vand.u32 %v3983, 4294901760
        %v3985 = vsub.f32 %v3983, %v3984
        %v3986 = vand.u32 %v3985, 4294901760
        %3987 = vmatpush.msra.mxu0 %v3986
        %v3988 = vand.u32 %v371, 4294901760
        %v3989 = vsub.f32 %v371, %v3988
        %v3990 = vand.u32 %v3989, 4294901760
        %v3991 = vsub.f32 %v3989, %v3990
        %v3992 = vand.u32 %v3991, 4294901760
        %3993 = vmatpush.msra.mxu0 %v3992
        %v3994 = vand.u32 %v362, 4294901760
        %v3995 = vsub.f32 %v362, %v3994
        %v3996 = vand.u32 %v3995, 4294901760
        %v3997 = vsub.f32 %v3995, %v3996
        %v3998 = vand.u32 %v3997, 4294901760
        %3999 = vmatpush.msra.mxu0 %v3998
        %v4000 = vand.u32 %v353, 4294901760
        %v4001 = vsub.f32 %v353, %v4000
        %v4002 = vand.u32 %v4001, 4294901760
        %v4003 = vsub.f32 %v4001, %v4002
        %v4004 = vand.u32 %v4003, 4294901760
        %4005 = vmatpush.msra.mxu0 %v4004
        %v4006 = vand.u32 %v344, 4294901760
        %v4007 = vsub.f32 %v344, %v4006
        %v4008 = vand.u32 %v4007, 4294901760
        %v4009 = vsub.f32 %v4007, %v4008
        %v4010 = vand.u32 %v4009, 4294901760
        %4011 = vmatpush.msra.mxu0 %v4010
        %v4012 = vand.u32 %v335, 4294901760
        %v4013 = vsub.f32 %v335, %v4012
        %v4014 = vand.u32 %v4013, 4294901760
        %v4015 = vsub.f32 %v4013, %v4014
        %v4016 = vand.u32 %v4015, 4294901760
        %4017 = vmatpush.msra.mxu0 %v4016
        %v4018 = vand.u32 %v326, 4294901760
        %v4019 = vsub.f32 %v326, %v4018
        %v4020 = vand.u32 %v4019, 4294901760
        %v4021 = vsub.f32 %v4019, %v4020
        %v4022 = vand.u32 %v4021, 4294901760
        %4023 = vmatpush.msra.mxu0 %v4022
        %v4024 = vand.u32 %v317, 4294901760
        %v4025 = vsub.f32 %v317, %v4024
        %v4026 = vand.u32 %v4025, 4294901760
        %v4027 = vsub.f32 %v4025, %v4026
        %v4028 = vand.u32 %v4027, 4294901760
        %4029 = vmatpush.msra.mxu0 %v4028
        %v4030 = vand.u32 %v308, 4294901760
        %v4031 = vsub.f32 %v308, %v4030
        %v4032 = vand.u32 %v4031, 4294901760
        %v4033 = vsub.f32 %v4031, %v4032
        %v4034 = vand.u32 %v4033, 4294901760
        %4035 = vmatpush.msra.mxu0 %v4034
        %v4036 = vand.u32 %v299, 4294901760
        %v4037 = vsub.f32 %v299, %v4036
        %v4038 = vand.u32 %v4037, 4294901760
        %v4039 = vsub.f32 %v4037, %v4038
        %v4040 = vand.u32 %v4039, 4294901760
        %4041 = vmatpush.msra.mxu0 %v4040
        %v4042 = vand.u32 %v290, 4294901760
        %v4043 = vsub.f32 %v290, %v4042
        %v4044 = vand.u32 %v4043, 4294901760
        %v4045 = vsub.f32 %v4043, %v4044
        %v4046 = vand.u32 %v4045, 4294901760
        %4047 = vmatpush.msra.mxu0 %v4046
        %v4048 = vand.u32 %v281, 4294901760
        %v4049 = vsub.f32 %v281, %v4048
        %v4050 = vand.u32 %v4049, 4294901760
        %v4051 = vsub.f32 %v4049, %v4050
        %v4052 = vand.u32 %v4051, 4294901760
        %4053 = vmatpush.msra.mxu0 %v4052
        %v4054 = vand.u32 %v272, 4294901760
        %v4055 = vsub.f32 %v272, %v4054
        %v4056 = vand.u32 %v4055, 4294901760
        %v4057 = vsub.f32 %v4055, %v4056
        %v4058 = vand.u32 %v4057, 4294901760
        %4059 = vmatpush.msra.mxu0 %v4058
        %v4060 = vand.u32 %v263, 4294901760
        %v4061 = vsub.f32 %v263, %v4060
        %v4062 = vand.u32 %v4061, 4294901760
        %v4063 = vsub.f32 %v4061, %v4062
        %v4064 = vand.u32 %v4063, 4294901760
        %4065 = vmatpush.msra.mxu0 %v4064
        %v4066 = vand.u32 %v254, 4294901760
        %v4067 = vsub.f32 %v254, %v4066
        %v4068 = vand.u32 %v4067, 4294901760
        %v4069 = vsub.f32 %v4067, %v4068
        %v4070 = vand.u32 %v4069, 4294901760
        %4071 = vmatpush.msra.mxu0 %v4070
        %v4072 = vand.u32 %v245, 4294901760
        %4073 = vmatmul.f32.gmra.mxu0 %v4072
        %v4074 = vpop.f32.mrf.mxu0
        %v4075 = vadd.f32 %v3974, %v4074
        %4076 = vdwg.mxu0
        %v4077 = vand.u32 %v389, 4294901760
        %v4078 = vsub.f32 %v389, %v4077
        %4079 = vmatpush.msra.mxu0 %v4078
        %v4080 = vand.u32 %v380, 4294901760
        %v4081 = vsub.f32 %v380, %v4080
        %4082 = vmatpush.msra.mxu0 %v4081
        %v4083 = vand.u32 %v371, 4294901760
        %v4084 = vsub.f32 %v371, %v4083
        %4085 = vmatpush.msra.mxu0 %v4084
        %v4086 = vand.u32 %v362, 4294901760
        %v4087 = vsub.f32 %v362, %v4086
        %4088 = vmatpush.msra.mxu0 %v4087
        %v4089 = vand.u32 %v353, 4294901760
        %v4090 = vsub.f32 %v353, %v4089
        %4091 = vmatpush.msra.mxu0 %v4090
        %v4092 = vand.u32 %v344, 4294901760
        %v4093 = vsub.f32 %v344, %v4092
        %4094 = vmatpush.msra.mxu0 %v4093
        %v4095 = vand.u32 %v335, 4294901760
        %v4096 = vsub.f32 %v335, %v4095
        %4097 = vmatpush.msra.mxu0 %v4096
        %v4098 = vand.u32 %v326, 4294901760
        %v4099 = vsub.f32 %v326, %v4098
        %4100 = vmatpush.msra.mxu0 %v4099
        %v4101 = vand.u32 %v317, 4294901760
        %v4102 = vsub.f32 %v317, %v4101
        %4103 = vmatpush.msra.mxu0 %v4102
        %v4104 = vand.u32 %v308, 4294901760
        %v4105 = vsub.f32 %v308, %v4104
        %4106 = vmatpush.msra.mxu0 %v4105
        %v4107 = vand.u32 %v299, 4294901760
        %v4108 = vsub.f32 %v299, %v4107
        %4109 = vmatpush.msra.mxu0 %v4108
        %v4110 = vand.u32 %v290, 4294901760
        %v4111 = vsub.f32 %v290, %v4110
        %4112 = vmatpush.msra.mxu0 %v4111
        %v4113 = vand.u32 %v281, 4294901760
        %v4114 = vsub.f32 %v281, %v4113
        %4115 = vmatpush.msra.mxu0 %v4114
        %v4116 = vand.u32 %v272, 4294901760
        %v4117 = vsub.f32 %v272, %v4116
        %4118 = vmatpush.msra.mxu0 %v4117
        %v4119 = vand.u32 %v263, 4294901760
        %v4120 = vsub.f32 %v263, %v4119
        %4121 = vmatpush.msra.mxu0 %v4120
        %v4122 = vand.u32 %v254, 4294901760
        %v4123 = vsub.f32 %v254, %v4122
        %4124 = vmatpush.msra.mxu0 %v4123
        %v4125 = vand.u32 %v245, 4294901760
        %v4126 = vsub.f32 %v245, %v4125
        %4127 = vmatmul.f32.gmra.mxu0 %v4126
        %v4128 = vpop.f32.mrf.mxu0
        %v4129 = vadd.f32 %v4075, %v4128
        %4130 = vdwg.mxu0
        %v4131 = vand.u32 %v389, 4294901760
        %4132 = vmatpush.msra.mxu0 %v4131
        %v4133 = vand.u32 %v380, 4294901760
        %4134 = vmatpush.msra.mxu0 %v4133
        %v4135 = vand.u32 %v371, 4294901760
        %4136 = vmatpush.msra.mxu0 %v4135
        %v4137 = vand.u32 %v362, 4294901760
        %4138 = vmatpush.msra.mxu0 %v4137
        %v4139 = vand.u32 %v353, 4294901760
        %4140 = vmatpush.msra.mxu0 %v4139
        %v4141 = vand.u32 %v344, 4294901760
        %4142 = vmatpush.msra.mxu0 %v4141
        %v4143 = vand.u32 %v335, 4294901760
        %4144 = vmatpush.msra.mxu0 %v4143
        %v4145 = vand.u32 %v326, 4294901760
        %4146 = vmatpush.msra.mxu0 %v4145
        %v4147 = vand.u32 %v317, 4294901760
        %4148 = vmatpush.msra.mxu0 %v4147
        %v4149 = vand.u32 %v308, 4294901760
        %4150 = vmatpush.msra.mxu0 %v4149
        %v4151 = vand.u32 %v299, 4294901760
        %4152 = vmatpush.msra.mxu0 %v4151
        %v4153 = vand.u32 %v290, 4294901760
        %4154 = vmatpush.msra.mxu0 %v4153
        %v4155 = vand.u32 %v281, 4294901760
        %4156 = vmatpush.msra.mxu0 %v4155
        %v4157 = vand.u32 %v272, 4294901760
        %4158 = vmatpush.msra.mxu0 %v4157
        %v4159 = vand.u32 %v263, 4294901760
        %4160 = vmatpush.msra.mxu0 %v4159
        %v4161 = vand.u32 %v254, 4294901760
        %4162 = vmatpush.msra.mxu0 %v4161
        %v4163 = vand.u32 %v245, 4294901760
        %v4164 = vsub.f32 %v245, %v4163
        %v4165 = vand.u32 %v4164, 4294901760
        %4166 = vmatmul.f32.gmra.mxu0 %v4165
        %v4167 = vpop.f32.mrf.mxu0
        %v4168 = vadd.f32 %v4129, %v4167
        %4169 = vdwg.mxu0
        %v4170 = vand.u32 %v389, 4294901760
        %v4171 = vsub.f32 %v389, %v4170
        %v4172 = vand.u32 %v4171, 4294901760
        %4173 = vmatpush.msra.mxu0 %v4172
        %v4174 = vand.u32 %v380, 4294901760
        %v4175 = vsub.f32 %v380, %v4174
        %v4176 = vand.u32 %v4175, 4294901760
        %4177 = vmatpush.msra.mxu0 %v4176
        %v4178 = vand.u32 %v371, 4294901760
        %v4179 = vsub.f32 %v371, %v4178
        %v4180 = vand.u32 %v4179, 4294901760
        %4181 = vmatpush.msra.mxu0 %v4180
        %v4182 = vand.u32 %v362, 4294901760
        %v4183 = vsub.f32 %v362, %v4182
        %v4184 = vand.u32 %v4183, 4294901760
        %4185 = vmatpush.msra.mxu0 %v4184
        %v4186 = vand.u32 %v353, 4294901760
        %v4187 = vsub.f32 %v353, %v4186
        %v4188 = vand.u32 %v4187, 4294901760
        %4189 = vmatpush.msra.mxu0 %v4188
        %v4190 = vand.u32 %v344, 4294901760
        %v4191 = vsub.f32 %v344, %v4190
        %v4192 = vand.u32 %v4191, 4294901760
        %4193 = vmatpush.msra.mxu0 %v4192
        %v4194 = vand.u32 %v335, 4294901760
        %v4195 = vsub.f32 %v335, %v4194
        %v4196 = vand.u32 %v4195, 4294901760
        %4197 = vmatpush.msra.mxu0 %v4196
        %v4198 = vand.u32 %v326, 4294901760
        %v4199 = vsub.f32 %v326, %v4198
        %v4200 = vand.u32 %v4199, 4294901760
        %4201 = vmatpush.msra.mxu0 %v4200
        %v4202 = vand.u32 %v317, 4294901760
        %v4203 = vsub.f32 %v317, %v4202
        %v4204 = vand.u32 %v4203, 4294901760
        %4205 = vmatpush.msra.mxu0 %v4204
        %v4206 = vand.u32 %v308, 4294901760
        %v4207 = vsub.f32 %v308, %v4206
        %v4208 = vand.u32 %v4207, 4294901760
        %4209 = vmatpush.msra.mxu0 %v4208
        %v4210 = vand.u32 %v299, 4294901760
        %v4211 = vsub.f32 %v299, %v4210
        %v4212 = vand.u32 %v4211, 4294901760
        %4213 = vmatpush.msra.mxu0 %v4212
        %v4214 = vand.u32 %v290, 4294901760
        %v4215 = vsub.f32 %v290, %v4214
        %v4216 = vand.u32 %v4215, 4294901760
        %4217 = vmatpush.msra.mxu0 %v4216
        %v4218 = vand.u32 %v281, 4294901760
        %v4219 = vsub.f32 %v281, %v4218
        %v4220 = vand.u32 %v4219, 4294901760
        %4221 = vmatpush.msra.mxu0 %v4220
        %v4222 = vand.u32 %v272, 4294901760
        %v4223 = vsub.f32 %v272, %v4222
        %v4224 = vand.u32 %v4223, 4294901760
        %4225 = vmatpush.msra.mxu0 %v4224
        %v4226 = vand.u32 %v263, 4294901760
        %v4227 = vsub.f32 %v263, %v4226
        %v4228 = vand.u32 %v4227, 4294901760
        %4229 = vmatpush.msra.mxu0 %v4228
        %v4230 = vand.u32 %v254, 4294901760
        %v4231 = vsub.f32 %v254, %v4230
        %v4232 = vand.u32 %v4231, 4294901760
        %4233 = vmatpush.msra.mxu0 %v4232
        %v4234 = vand.u32 %v245, 4294901760
        %4235 = vmatmul.f32.gmra.mxu0 %v4234
        %v4236 = vpop.f32.mrf.mxu0
        %v4237 = vadd.f32 %v4168, %v4236
        %4238 = vdwg.mxu0
        %v4239 = vand.u32 %v389, 4294901760
        %4240 = vmatpush.msra.mxu0 %v4239
        %v4241 = vand.u32 %v380, 4294901760
        %4242 = vmatpush.msra.mxu0 %v4241
        %v4243 = vand.u32 %v371, 4294901760
        %4244 = vmatpush.msra.mxu0 %v4243
        %v4245 = vand.u32 %v362, 4294901760
        %4246 = vmatpush.msra.mxu0 %v4245
        %v4247 = vand.u32 %v353, 4294901760
        %4248 = vmatpush.msra.mxu0 %v4247
        %v4249 = vand.u32 %v344, 4294901760
        %4250 = vmatpush.msra.mxu0 %v4249
        %v4251 = vand.u32 %v335, 4294901760
        %4252 = vmatpush.msra.mxu0 %v4251
        %v4253 = vand.u32 %v326, 4294901760
        %4254 = vmatpush.msra.mxu0 %v4253
        %v4255 = vand.u32 %v317, 4294901760
        %4256 = vmatpush.msra.mxu0 %v4255
        %v4257 = vand.u32 %v308, 4294901760
        %4258 = vmatpush.msra.mxu0 %v4257
        %v4259 = vand.u32 %v299, 4294901760
        %4260 = vmatpush.msra.mxu0 %v4259
        %v4261 = vand.u32 %v290, 4294901760
        %4262 = vmatpush.msra.mxu0 %v4261
        %v4263 = vand.u32 %v281, 4294901760
        %4264 = vmatpush.msra.mxu0 %v4263
        %v4265 = vand.u32 %v272, 4294901760
        %4266 = vmatpush.msra.mxu0 %v4265
        %v4267 = vand.u32 %v263, 4294901760
        %4268 = vmatpush.msra.mxu0 %v4267
        %v4269 = vand.u32 %v254, 4294901760
        %4270 = vmatpush.msra.mxu0 %v4269
        %v4271 = vand.u32 %v245, 4294901760
        %4272 = vmatmul.f32.gmra.mxu0 %v4271
        %v4273 = vpop.f32.mrf.mxu0
        %v4274 = vadd.f32 %v4237, %v4273
        %4275 = vdwg.mxu0
        %4276 = vmatpush.msra.mxu0 0.0
        %4277 = vmatpush.msra.mxu0 0.0
        %4278 = vmatpush.msra.mxu0 0.0
        %4279 = vmatpush.msra.mxu0 0.0
        %4280 = vmatpush.msra.mxu0 0.0
        %4281 = vmatpush.msra.mxu0 0.0
        %4282 = vmatpush.msra.mxu0 0.0
        %4283 = vmatpush.msra.mxu0 0.0
        %4284 = vmatpush.msra.mxu0 0.0
        %4285 = vmatpush.msra.mxu0 0.0
        %4286 = vmatpush.msra.mxu0 0.0
        %4287 = vmatpush.msra.mxu0 0.0
        %4288 = vmatpush.msra.mxu0 0.0
        %4289 = vmatpush.msra.mxu0 0.0
        %v4290 = vand.u32 %v407, 4294901760
        %4291 = vmatpush.msra.mxu0 %v4290
        %v4292 = vand.u32 %v398, 4294901760
        %4293 = vmatpush.msra.mxu0 %v4292
        %v4294 = vand.u32 %v433, 4294901760
        %v4295 = vsub.f32 %v433, %v4294
        %v4296 = vand.u32 %v4295, 4294901760
        %v4297 = vsub.f32 %v4295, %v4296
        %v4298 = vand.u32 %v4297, 4294901760
        %4299 = vmatmul.f32.gmra.mxu0 %v4298
        %v4300 = vpop.f32.mrf.mxu0
        %v4301 = vadd.f32 %v4274, %v4300
        %4302 = vdwg.mxu0
        %4303 = vmatpush.msra.mxu0 0.0
        %4304 = vmatpush.msra.mxu0 0.0
        %4305 = vmatpush.msra.mxu0 0.0
        %4306 = vmatpush.msra.mxu0 0.0
        %4307 = vmatpush.msra.mxu0 0.0
        %4308 = vmatpush.msra.mxu0 0.0
        %4309 = vmatpush.msra.mxu0 0.0
        %4310 = vmatpush.msra.mxu0 0.0
        %4311 = vmatpush.msra.mxu0 0.0
        %4312 = vmatpush.msra.mxu0 0.0
        %4313 = vmatpush.msra.mxu0 0.0
        %4314 = vmatpush.msra.mxu0 0.0
        %4315 = vmatpush.msra.mxu0 0.0
        %4316 = vmatpush.msra.mxu0 0.0
        %v4317 = vand.u32 %v407, 4294901760
        %v4318 = vsub.f32 %v407, %v4317
        %v4319 = vand.u32 %v4318, 4294901760
        %v4320 = vsub.f32 %v4318, %v4319
        %v4321 = vand.u32 %v4320, 4294901760
        %4322 = vmatpush.msra.mxu0 %v4321
        %v4323 = vand.u32 %v398, 4294901760
        %v4324 = vsub.f32 %v398, %v4323
        %v4325 = vand.u32 %v4324, 4294901760
        %v4326 = vsub.f32 %v4324, %v4325
        %v4327 = vand.u32 %v4326, 4294901760
        %4328 = vmatpush.msra.mxu0 %v4327
        %v4329 = vand.u32 %v433, 4294901760
        %4330 = vmatmul.f32.gmra.mxu0 %v4329
        %v4331 = vpop.f32.mrf.mxu0
        %v4332 = vadd.f32 %v4301, %v4331
        %4333 = vdwg.mxu0
        %4334 = vmatpush.msra.mxu0 0.0
        %4335 = vmatpush.msra.mxu0 0.0
        %4336 = vmatpush.msra.mxu0 0.0
        %4337 = vmatpush.msra.mxu0 0.0
        %4338 = vmatpush.msra.mxu0 0.0
        %4339 = vmatpush.msra.mxu0 0.0
        %4340 = vmatpush.msra.mxu0 0.0
        %4341 = vmatpush.msra.mxu0 0.0
        %4342 = vmatpush.msra.mxu0 0.0
        %4343 = vmatpush.msra.mxu0 0.0
        %4344 = vmatpush.msra.mxu0 0.0
        %4345 = vmatpush.msra.mxu0 0.0
        %4346 = vmatpush.msra.mxu0 0.0
        %4347 = vmatpush.msra.mxu0 0.0
        %v4348 = vand.u32 %v407, 4294901760
        %v4349 = vsub.f32 %v407, %v4348
        %4350 = vmatpush.msra.mxu0 %v4349
        %v4351 = vand.u32 %v398, 4294901760
        %v4352 = vsub.f32 %v398, %v4351
        %4353 = vmatpush.msra.mxu0 %v4352
        %v4354 = vand.u32 %v433, 4294901760
        %v4355 = vsub.f32 %v433, %v4354
        %4356 = vmatmul.f32.gmra.mxu0 %v4355
        %v4357 = vpop.f32.mrf.mxu0
        %v4358 = vadd.f32 %v4332, %v4357
        %4359 = vdwg.mxu0
        %4360 = vmatpush.msra.mxu0 0.0
        %4361 = vmatpush.msra.mxu0 0.0
        %4362 = vmatpush.msra.mxu0 0.0
        %4363 = vmatpush.msra.mxu0 0.0
        %4364 = vmatpush.msra.mxu0 0.0
        %4365 = vmatpush.msra.mxu0 0.0
        %4366 = vmatpush.msra.mxu0 0.0
        %4367 = vmatpush.msra.mxu0 0.0
        %4368 = vmatpush.msra.mxu0 0.0
        %4369 = vmatpush.msra.mxu0 0.0
        %4370 = vmatpush.msra.mxu0 0.0
        %4371 = vmatpush.msra.mxu0 0.0
        %4372 = vmatpush.msra.mxu0 0.0
        %4373 = vmatpush.msra.mxu0 0.0
        %v4374 = vand.u32 %v407, 4294901760
        %4375 = vmatpush.msra.mxu0 %v4374
        %v4376 = vand.u32 %v398, 4294901760
        %4377 = vmatpush.msra.mxu0 %v4376
        %v4378 = vand.u32 %v433, 4294901760
        %v4379 = vsub.f32 %v433, %v4378
        %v4380 = vand.u32 %v4379, 4294901760
        %4381 = vmatmul.f32.gmra.mxu0 %v4380
        %v4382 = vpop.f32.mrf.mxu0
        %v4383 = vadd.f32 %v4358, %v4382
        %4384 = vdwg.mxu0
        %4385 = vmatpush.msra.mxu0 0.0
        %4386 = vmatpush.msra.mxu0 0.0
        %4387 = vmatpush.msra.mxu0 0.0
        %4388 = vmatpush.msra.mxu0 0.0
        %4389 = vmatpush.msra.mxu0 0.0
        %4390 = vmatpush.msra.mxu0 0.0
        %4391 = vmatpush.msra.mxu0 0.0
        %4392 = vmatpush.msra.mxu0 0.0
        %4393 = vmatpush.msra.mxu0 0.0
        %4394 = vmatpush.msra.mxu0 0.0
        %4395 = vmatpush.msra.mxu0 0.0
        %4396 = vmatpush.msra.mxu0 0.0
        %4397 = vmatpush.msra.mxu0 0.0
        %4398 = vmatpush.msra.mxu0 0.0
        %v4399 = vand.u32 %v407, 4294901760
        %v4400 = vsub.f32 %v407, %v4399
        %v4401 = vand.u32 %v4400, 4294901760
        %4402 = vmatpush.msra.mxu0 %v4401
        %v4403 = vand.u32 %v398, 4294901760
        %v4404 = vsub.f32 %v398, %v4403
        %v4405 = vand.u32 %v4404, 4294901760
        %4406 = vmatpush.msra.mxu0 %v4405
        %v4407 = vand.u32 %v433, 4294901760
        %4408 = vmatmul.f32.gmra.mxu0 %v4407
        %v4409 = vpop.f32.mrf.mxu0
        %v4410 = vadd.f32 %v4383, %v4409
        %4411 = vdwg.mxu0
        %4412 = vmatpush.msra.mxu0 0.0
        %4413 = vmatpush.msra.mxu0 0.0
        %4414 = vmatpush.msra.mxu0 0.0
        %4415 = vmatpush.msra.mxu0 0.0
        %4416 = vmatpush.msra.mxu0 0.0
        %4417 = vmatpush.msra.mxu0 0.0
        %4418 = vmatpush.msra.mxu0 0.0
        %4419 = vmatpush.msra.mxu0 0.0
        %4420 = vmatpush.msra.mxu0 0.0
        %4421 = vmatpush.msra.mxu0 0.0
        %4422 = vmatpush.msra.mxu0 0.0
        %4423 = vmatpush.msra.mxu0 0.0
        %4424 = vmatpush.msra.mxu0 0.0
        %4425 = vmatpush.msra.mxu0 0.0
        %v4426 = vand.u32 %v407, 4294901760
        %4427 = vmatpush.msra.mxu0 %v4426
        %v4428 = vand.u32 %v398, 4294901760
        %4429 = vmatpush.msra.mxu0 %v4428
        %v4430 = vand.u32 %v433, 4294901760
        %4431 = vmatmul.f32.gmra.mxu0 %v4430
        %v4432 = vpop.f32.mrf.mxu0
        %v4433 = vadd.f32 %v4410, %v4432
        %4434 = vdwg.mxu0
        %v4435 = vand.u32 %v390, 4294901760
        %4436 = vmatpush.msra.mxu0 %v4435
        %v4437 = vand.u32 %v381, 4294901760
        %4438 = vmatpush.msra.mxu0 %v4437
        %v4439 = vand.u32 %v372, 4294901760
        %4440 = vmatpush.msra.mxu0 %v4439
        %v4441 = vand.u32 %v363, 4294901760
        %4442 = vmatpush.msra.mxu0 %v4441
        %v4443 = vand.u32 %v354, 4294901760
        %4444 = vmatpush.msra.mxu0 %v4443
        %v4445 = vand.u32 %v345, 4294901760
        %4446 = vmatpush.msra.mxu0 %v4445
        %v4447 = vand.u32 %v336, 4294901760
        %4448 = vmatpush.msra.mxu0 %v4447
        %v4449 = vand.u32 %v327, 4294901760
        %4450 = vmatpush.msra.mxu0 %v4449
        %v4451 = vand.u32 %v318, 4294901760
        %4452 = vmatpush.msra.mxu0 %v4451
        %v4453 = vand.u32 %v309, 4294901760
        %4454 = vmatpush.msra.mxu0 %v4453
        %v4455 = vand.u32 %v300, 4294901760
        %4456 = vmatpush.msra.mxu0 %v4455
        %v4457 = vand.u32 %v291, 4294901760
        %4458 = vmatpush.msra.mxu0 %v4457
        %v4459 = vand.u32 %v282, 4294901760
        %4460 = vmatpush.msra.mxu0 %v4459
        %v4461 = vand.u32 %v273, 4294901760
        %4462 = vmatpush.msra.mxu0 %v4461
        %v4463 = vand.u32 %v264, 4294901760
        %4464 = vmatpush.msra.mxu0 %v4463
        %v4465 = vand.u32 %v255, 4294901760
        %4466 = vmatpush.msra.mxu0 %v4465
        %v4467 = vand.u32 %v245, 4294901760
        %v4468 = vsub.f32 %v245, %v4467
        %v4469 = vand.u32 %v4468, 4294901760
        %v4470 = vsub.f32 %v4468, %v4469
        %v4471 = vand.u32 %v4470, 4294901760
        %4472 = vmatmul.f32.gmra.mxu0 %v4471
        %v4473 = vpop.f32.mrf.mxu0
        %v4474 = vadd.f32 %v421, %v4473
        %4475 = vdwg.mxu0
        %v4476 = vand.u32 %v390, 4294901760
        %v4477 = vsub.f32 %v390, %v4476
        %v4478 = vand.u32 %v4477, 4294901760
        %v4479 = vsub.f32 %v4477, %v4478
        %v4480 = vand.u32 %v4479, 4294901760
        %4481 = vmatpush.msra.mxu0 %v4480
        %v4482 = vand.u32 %v381, 4294901760
        %v4483 = vsub.f32 %v381, %v4482
        %v4484 = vand.u32 %v4483, 4294901760
        %v4485 = vsub.f32 %v4483, %v4484
        %v4486 = vand.u32 %v4485, 4294901760
        %4487 = vmatpush.msra.mxu0 %v4486
        %v4488 = vand.u32 %v372, 4294901760
        %v4489 = vsub.f32 %v372, %v4488
        %v4490 = vand.u32 %v4489, 4294901760
        %v4491 = vsub.f32 %v4489, %v4490
        %v4492 = vand.u32 %v4491, 4294901760
        %4493 = vmatpush.msra.mxu0 %v4492
        %v4494 = vand.u32 %v363, 4294901760
        %v4495 = vsub.f32 %v363, %v4494
        %v4496 = vand.u32 %v4495, 4294901760
        %v4497 = vsub.f32 %v4495, %v4496
        %v4498 = vand.u32 %v4497, 4294901760
        %4499 = vmatpush.msra.mxu0 %v4498
        %v4500 = vand.u32 %v354, 4294901760
        %v4501 = vsub.f32 %v354, %v4500
        %v4502 = vand.u32 %v4501, 4294901760
        %v4503 = vsub.f32 %v4501, %v4502
        %v4504 = vand.u32 %v4503, 4294901760
        %4505 = vmatpush.msra.mxu0 %v4504
        %v4506 = vand.u32 %v345, 4294901760
        %v4507 = vsub.f32 %v345, %v4506
        %v4508 = vand.u32 %v4507, 4294901760
        %v4509 = vsub.f32 %v4507, %v4508
        %v4510 = vand.u32 %v4509, 4294901760
        %4511 = vmatpush.msra.mxu0 %v4510
        %v4512 = vand.u32 %v336, 4294901760
        %v4513 = vsub.f32 %v336, %v4512
        %v4514 = vand.u32 %v4513, 4294901760
        %v4515 = vsub.f32 %v4513, %v4514
        %v4516 = vand.u32 %v4515, 4294901760
        %4517 = vmatpush.msra.mxu0 %v4516
        %v4518 = vand.u32 %v327, 4294901760
        %v4519 = vsub.f32 %v327, %v4518
        %v4520 = vand.u32 %v4519, 4294901760
        %v4521 = vsub.f32 %v4519, %v4520
        %v4522 = vand.u32 %v4521, 4294901760
        %4523 = vmatpush.msra.mxu0 %v4522
        %v4524 = vand.u32 %v318, 4294901760
        %v4525 = vsub.f32 %v318, %v4524
        %v4526 = vand.u32 %v4525, 4294901760
        %v4527 = vsub.f32 %v4525, %v4526
        %v4528 = vand.u32 %v4527, 4294901760
        %4529 = vmatpush.msra.mxu0 %v4528
        %v4530 = vand.u32 %v309, 4294901760
        %v4531 = vsub.f32 %v309, %v4530
        %v4532 = vand.u32 %v4531, 4294901760
        %v4533 = vsub.f32 %v4531, %v4532
        %v4534 = vand.u32 %v4533, 4294901760
        %4535 = vmatpush.msra.mxu0 %v4534
        %v4536 = vand.u32 %v300, 4294901760
        %v4537 = vsub.f32 %v300, %v4536
        %v4538 = vand.u32 %v4537, 4294901760
        %v4539 = vsub.f32 %v4537, %v4538
        %v4540 = vand.u32 %v4539, 4294901760
        %4541 = vmatpush.msra.mxu0 %v4540
        %v4542 = vand.u32 %v291, 4294901760
        %v4543 = vsub.f32 %v291, %v4542
        %v4544 = vand.u32 %v4543, 4294901760
        %v4545 = vsub.f32 %v4543, %v4544
        %v4546 = vand.u32 %v4545, 4294901760
        %4547 = vmatpush.msra.mxu0 %v4546
        %v4548 = vand.u32 %v282, 4294901760
        %v4549 = vsub.f32 %v282, %v4548
        %v4550 = vand.u32 %v4549, 4294901760
        %v4551 = vsub.f32 %v4549, %v4550
        %v4552 = vand.u32 %v4551, 4294901760
        %4553 = vmatpush.msra.mxu0 %v4552
        %v4554 = vand.u32 %v273, 4294901760
        %v4555 = vsub.f32 %v273, %v4554
        %v4556 = vand.u32 %v4555, 4294901760
        %v4557 = vsub.f32 %v4555, %v4556
        %v4558 = vand.u32 %v4557, 4294901760
        %4559 = vmatpush.msra.mxu0 %v4558
        %v4560 = vand.u32 %v264, 4294901760
        %v4561 = vsub.f32 %v264, %v4560
        %v4562 = vand.u32 %v4561, 4294901760
        %v4563 = vsub.f32 %v4561, %v4562
        %v4564 = vand.u32 %v4563, 4294901760
        %4565 = vmatpush.msra.mxu0 %v4564
        %v4566 = vand.u32 %v255, 4294901760
        %v4567 = vsub.f32 %v255, %v4566
        %v4568 = vand.u32 %v4567, 4294901760
        %v4569 = vsub.f32 %v4567, %v4568
        %v4570 = vand.u32 %v4569, 4294901760
        %4571 = vmatpush.msra.mxu0 %v4570
        %v4572 = vand.u32 %v245, 4294901760
        %4573 = vmatmul.f32.gmra.mxu0 %v4572
        %v4574 = vpop.f32.mrf.mxu0
        %v4575 = vadd.f32 %v4474, %v4574
        %4576 = vdwg.mxu0
        %v4577 = vand.u32 %v390, 4294901760
        %v4578 = vsub.f32 %v390, %v4577
        %4579 = vmatpush.msra.mxu0 %v4578
        %v4580 = vand.u32 %v381, 4294901760
        %v4581 = vsub.f32 %v381, %v4580
        %4582 = vmatpush.msra.mxu0 %v4581
        %v4583 = vand.u32 %v372, 4294901760
        %v4584 = vsub.f32 %v372, %v4583
        %4585 = vmatpush.msra.mxu0 %v4584
        %v4586 = vand.u32 %v363, 4294901760
        %v4587 = vsub.f32 %v363, %v4586
        %4588 = vmatpush.msra.mxu0 %v4587
        %v4589 = vand.u32 %v354, 4294901760
        %v4590 = vsub.f32 %v354, %v4589
        %4591 = vmatpush.msra.mxu0 %v4590
        %v4592 = vand.u32 %v345, 4294901760
        %v4593 = vsub.f32 %v345, %v4592
        %4594 = vmatpush.msra.mxu0 %v4593
        %v4595 = vand.u32 %v336, 4294901760
        %v4596 = vsub.f32 %v336, %v4595
        %4597 = vmatpush.msra.mxu0 %v4596
        %v4598 = vand.u32 %v327, 4294901760
        %v4599 = vsub.f32 %v327, %v4598
        %4600 = vmatpush.msra.mxu0 %v4599
        %v4601 = vand.u32 %v318, 4294901760
        %v4602 = vsub.f32 %v318, %v4601
        %4603 = vmatpush.msra.mxu0 %v4602
        %v4604 = vand.u32 %v309, 4294901760
        %v4605 = vsub.f32 %v309, %v4604
        %4606 = vmatpush.msra.mxu0 %v4605
        %v4607 = vand.u32 %v300, 4294901760
        %v4608 = vsub.f32 %v300, %v4607
        %4609 = vmatpush.msra.mxu0 %v4608
        %v4610 = vand.u32 %v291, 4294901760
        %v4611 = vsub.f32 %v291, %v4610
        %4612 = vmatpush.msra.mxu0 %v4611
        %v4613 = vand.u32 %v282, 4294901760
        %v4614 = vsub.f32 %v282, %v4613
        %4615 = vmatpush.msra.mxu0 %v4614
        %v4616 = vand.u32 %v273, 4294901760
        %v4617 = vsub.f32 %v273, %v4616
        %4618 = vmatpush.msra.mxu0 %v4617
        %v4619 = vand.u32 %v264, 4294901760
        %v4620 = vsub.f32 %v264, %v4619
        %4621 = vmatpush.msra.mxu0 %v4620
        %v4622 = vand.u32 %v255, 4294901760
        %v4623 = vsub.f32 %v255, %v4622
        %4624 = vmatpush.msra.mxu0 %v4623
        %v4625 = vand.u32 %v245, 4294901760
        %v4626 = vsub.f32 %v245, %v4625
        %4627 = vmatmul.f32.gmra.mxu0 %v4626
        %v4628 = vpop.f32.mrf.mxu0
        %v4629 = vadd.f32 %v4575, %v4628
        %4630 = vdwg.mxu0
        %v4631 = vand.u32 %v390, 4294901760
        %4632 = vmatpush.msra.mxu0 %v4631
        %v4633 = vand.u32 %v381, 4294901760
        %4634 = vmatpush.msra.mxu0 %v4633
        %v4635 = vand.u32 %v372, 4294901760
        %4636 = vmatpush.msra.mxu0 %v4635
        %v4637 = vand.u32 %v363, 4294901760
        %4638 = vmatpush.msra.mxu0 %v4637
        %v4639 = vand.u32 %v354, 4294901760
        %4640 = vmatpush.msra.mxu0 %v4639
        %v4641 = vand.u32 %v345, 4294901760
        %4642 = vmatpush.msra.mxu0 %v4641
        %v4643 = vand.u32 %v336, 4294901760
        %4644 = vmatpush.msra.mxu0 %v4643
        %v4645 = vand.u32 %v327, 4294901760
        %4646 = vmatpush.msra.mxu0 %v4645
        %v4647 = vand.u32 %v318, 4294901760
        %4648 = vmatpush.msra.mxu0 %v4647
        %v4649 = vand.u32 %v309, 4294901760
        %4650 = vmatpush.msra.mxu0 %v4649
        %v4651 = vand.u32 %v300, 4294901760
        %4652 = vmatpush.msra.mxu0 %v4651
        %v4653 = vand.u32 %v291, 4294901760
        %4654 = vmatpush.msra.mxu0 %v4653
        %v4655 = vand.u32 %v282, 4294901760
        %4656 = vmatpush.msra.mxu0 %v4655
        %v4657 = vand.u32 %v273, 4294901760
        %4658 = vmatpush.msra.mxu0 %v4657
        %v4659 = vand.u32 %v264, 4294901760
        %4660 = vmatpush.msra.mxu0 %v4659
        %v4661 = vand.u32 %v255, 4294901760
        %4662 = vmatpush.msra.mxu0 %v4661
        %v4663 = vand.u32 %v245, 4294901760
        %v4664 = vsub.f32 %v245, %v4663
        %v4665 = vand.u32 %v4664, 4294901760
        %4666 = vmatmul.f32.gmra.mxu0 %v4665
        %v4667 = vpop.f32.mrf.mxu0
        %v4668 = vadd.f32 %v4629, %v4667
        %4669 = vdwg.mxu0
        %v4670 = vand.u32 %v390, 4294901760
        %v4671 = vsub.f32 %v390, %v4670
        %v4672 = vand.u32 %v4671, 4294901760
        %4673 = vmatpush.msra.mxu0 %v4672
        %v4674 = vand.u32 %v381, 4294901760
        %v4675 = vsub.f32 %v381, %v4674
        %v4676 = vand.u32 %v4675, 4294901760
        %4677 = vmatpush.msra.mxu0 %v4676
        %v4678 = vand.u32 %v372, 4294901760
        %v4679 = vsub.f32 %v372, %v4678
        %v4680 = vand.u32 %v4679, 4294901760
        %4681 = vmatpush.msra.mxu0 %v4680
        %v4682 = vand.u32 %v363, 4294901760
        %v4683 = vsub.f32 %v363, %v4682
        %v4684 = vand.u32 %v4683, 4294901760
        %4685 = vmatpush.msra.mxu0 %v4684
        %v4686 = vand.u32 %v354, 4294901760
        %v4687 = vsub.f32 %v354, %v4686
        %v4688 = vand.u32 %v4687, 4294901760
        %4689 = vmatpush.msra.mxu0 %v4688
        %v4690 = vand.u32 %v345, 4294901760
        %v4691 = vsub.f32 %v345, %v4690
        %v4692 = vand.u32 %v4691, 4294901760
        %4693 = vmatpush.msra.mxu0 %v4692
        %v4694 = vand.u32 %v336, 4294901760
        %v4695 = vsub.f32 %v336, %v4694
        %v4696 = vand.u32 %v4695, 4294901760
        %4697 = vmatpush.msra.mxu0 %v4696
        %v4698 = vand.u32 %v327, 4294901760
        %v4699 = vsub.f32 %v327, %v4698
        %v4700 = vand.u32 %v4699, 4294901760
        %4701 = vmatpush.msra.mxu0 %v4700
        %v4702 = vand.u32 %v318, 4294901760
        %v4703 = vsub.f32 %v318, %v4702
        %v4704 = vand.u32 %v4703, 4294901760
        %4705 = vmatpush.msra.mxu0 %v4704
        %v4706 = vand.u32 %v309, 4294901760
        %v4707 = vsub.f32 %v309, %v4706
        %v4708 = vand.u32 %v4707, 4294901760
        %4709 = vmatpush.msra.mxu0 %v4708
        %v4710 = vand.u32 %v300, 4294901760
        %v4711 = vsub.f32 %v300, %v4710
        %v4712 = vand.u32 %v4711, 4294901760
        %4713 = vmatpush.msra.mxu0 %v4712
        %v4714 = vand.u32 %v291, 4294901760
        %v4715 = vsub.f32 %v291, %v4714
        %v4716 = vand.u32 %v4715, 4294901760
        %4717 = vmatpush.msra.mxu0 %v4716
        %v4718 = vand.u32 %v282, 4294901760
        %v4719 = vsub.f32 %v282, %v4718
        %v4720 = vand.u32 %v4719, 4294901760
        %4721 = vmatpush.msra.mxu0 %v4720
        %v4722 = vand.u32 %v273, 4294901760
        %v4723 = vsub.f32 %v273, %v4722
        %v4724 = vand.u32 %v4723, 4294901760
        %4725 = vmatpush.msra.mxu0 %v4724
        %v4726 = vand.u32 %v264, 4294901760
        %v4727 = vsub.f32 %v264, %v4726
        %v4728 = vand.u32 %v4727, 4294901760
        %4729 = vmatpush.msra.mxu0 %v4728
        %v4730 = vand.u32 %v255, 4294901760
        %v4731 = vsub.f32 %v255, %v4730
        %v4732 = vand.u32 %v4731, 4294901760
        %4733 = vmatpush.msra.mxu0 %v4732
        %v4734 = vand.u32 %v245, 4294901760
        %4735 = vmatmul.f32.gmra.mxu0 %v4734
        %v4736 = vpop.f32.mrf.mxu0
        %v4737 = vadd.f32 %v4668, %v4736
        %4738 = vdwg.mxu0
        %v4739 = vand.u32 %v390, 4294901760
        %4740 = vmatpush.msra.mxu0 %v4739
        %v4741 = vand.u32 %v381, 4294901760
        %4742 = vmatpush.msra.mxu0 %v4741
        %v4743 = vand.u32 %v372, 4294901760
        %4744 = vmatpush.msra.mxu0 %v4743
        %v4745 = vand.u32 %v363, 4294901760
        %4746 = vmatpush.msra.mxu0 %v4745
        %v4747 = vand.u32 %v354, 4294901760
        %4748 = vmatpush.msra.mxu0 %v4747
        %v4749 = vand.u32 %v345, 4294901760
        %4750 = vmatpush.msra.mxu0 %v4749
        %v4751 = vand.u32 %v336, 4294901760
        %4752 = vmatpush.msra.mxu0 %v4751
        %v4753 = vand.u32 %v327, 4294901760
        %4754 = vmatpush.msra.mxu0 %v4753
        %v4755 = vand.u32 %v318, 4294901760
        %4756 = vmatpush.msra.mxu0 %v4755
        %v4757 = vand.u32 %v309, 4294901760
        %4758 = vmatpush.msra.mxu0 %v4757
        %v4759 = vand.u32 %v300, 4294901760
        %4760 = vmatpush.msra.mxu0 %v4759
        %v4761 = vand.u32 %v291, 4294901760
        %4762 = vmatpush.msra.mxu0 %v4761
        %v4763 = vand.u32 %v282, 4294901760
        %4764 = vmatpush.msra.mxu0 %v4763
        %v4765 = vand.u32 %v273, 4294901760
        %4766 = vmatpush.msra.mxu0 %v4765
        %v4767 = vand.u32 %v264, 4294901760
        %4768 = vmatpush.msra.mxu0 %v4767
        %v4769 = vand.u32 %v255, 4294901760
        %4770 = vmatpush.msra.mxu0 %v4769
        %v4771 = vand.u32 %v245, 4294901760
        %4772 = vmatmul.f32.gmra.mxu0 %v4771
        %v4773 = vpop.f32.mrf.mxu0
        %v4774 = vadd.f32 %v4737, %v4773
        %4775 = vdwg.mxu0
        %4776 = vmatpush.msra.mxu0 0.0
        %4777 = vmatpush.msra.mxu0 0.0
        %4778 = vmatpush.msra.mxu0 0.0
        %4779 = vmatpush.msra.mxu0 0.0
        %4780 = vmatpush.msra.mxu0 0.0
        %4781 = vmatpush.msra.mxu0 0.0
        %4782 = vmatpush.msra.mxu0 0.0
        %4783 = vmatpush.msra.mxu0 0.0
        %4784 = vmatpush.msra.mxu0 0.0
        %4785 = vmatpush.msra.mxu0 0.0
        %4786 = vmatpush.msra.mxu0 0.0
        %4787 = vmatpush.msra.mxu0 0.0
        %4788 = vmatpush.msra.mxu0 0.0
        %4789 = vmatpush.msra.mxu0 0.0
        %v4790 = vand.u32 %v408, 4294901760
        %4791 = vmatpush.msra.mxu0 %v4790
        %v4792 = vand.u32 %v399, 4294901760
        %4793 = vmatpush.msra.mxu0 %v4792
        %v4794 = vand.u32 %v433, 4294901760
        %v4795 = vsub.f32 %v433, %v4794
        %v4796 = vand.u32 %v4795, 4294901760
        %v4797 = vsub.f32 %v4795, %v4796
        %v4798 = vand.u32 %v4797, 4294901760
        %4799 = vmatmul.f32.gmra.mxu0 %v4798
        %v4800 = vpop.f32.mrf.mxu0
        %v4801 = vadd.f32 %v4774, %v4800
        %4802 = vdwg.mxu0
        %4803 = vmatpush.msra.mxu0 0.0
        %4804 = vmatpush.msra.mxu0 0.0
        %4805 = vmatpush.msra.mxu0 0.0
        %4806 = vmatpush.msra.mxu0 0.0
        %4807 = vmatpush.msra.mxu0 0.0
        %4808 = vmatpush.msra.mxu0 0.0
        %4809 = vmatpush.msra.mxu0 0.0
        %4810 = vmatpush.msra.mxu0 0.0
        %4811 = vmatpush.msra.mxu0 0.0
        %4812 = vmatpush.msra.mxu0 0.0
        %4813 = vmatpush.msra.mxu0 0.0
        %4814 = vmatpush.msra.mxu0 0.0
        %4815 = vmatpush.msra.mxu0 0.0
        %4816 = vmatpush.msra.mxu0 0.0
        %v4817 = vand.u32 %v408, 4294901760
        %v4818 = vsub.f32 %v408, %v4817
        %v4819 = vand.u32 %v4818, 4294901760
        %v4820 = vsub.f32 %v4818, %v4819
        %v4821 = vand.u32 %v4820, 4294901760
        %4822 = vmatpush.msra.mxu0 %v4821
        %v4823 = vand.u32 %v399, 4294901760
        %v4824 = vsub.f32 %v399, %v4823
        %v4825 = vand.u32 %v4824, 4294901760
        %v4826 = vsub.f32 %v4824, %v4825
        %v4827 = vand.u32 %v4826, 4294901760
        %4828 = vmatpush.msra.mxu0 %v4827
        %v4829 = vand.u32 %v433, 4294901760
        %4830 = vmatmul.f32.gmra.mxu0 %v4829
        %v4831 = vpop.f32.mrf.mxu0
        %v4832 = vadd.f32 %v4801, %v4831
        %4833 = vdwg.mxu0
        %4834 = vmatpush.msra.mxu0 0.0
        %4835 = vmatpush.msra.mxu0 0.0
        %4836 = vmatpush.msra.mxu0 0.0
        %4837 = vmatpush.msra.mxu0 0.0
        %4838 = vmatpush.msra.mxu0 0.0
        %4839 = vmatpush.msra.mxu0 0.0
        %4840 = vmatpush.msra.mxu0 0.0
        %4841 = vmatpush.msra.mxu0 0.0
        %4842 = vmatpush.msra.mxu0 0.0
        %4843 = vmatpush.msra.mxu0 0.0
        %4844 = vmatpush.msra.mxu0 0.0
        %4845 = vmatpush.msra.mxu0 0.0
        %4846 = vmatpush.msra.mxu0 0.0
        %4847 = vmatpush.msra.mxu0 0.0
        %v4848 = vand.u32 %v408, 4294901760
        %v4849 = vsub.f32 %v408, %v4848
        %4850 = vmatpush.msra.mxu0 %v4849
        %v4851 = vand.u32 %v399, 4294901760
        %v4852 = vsub.f32 %v399, %v4851
        %4853 = vmatpush.msra.mxu0 %v4852
        %v4854 = vand.u32 %v433, 4294901760
        %v4855 = vsub.f32 %v433, %v4854
        %4856 = vmatmul.f32.gmra.mxu0 %v4855
        %v4857 = vpop.f32.mrf.mxu0
        %v4858 = vadd.f32 %v4832, %v4857
        %4859 = vdwg.mxu0
        %4860 = vmatpush.msra.mxu0 0.0
        %4861 = vmatpush.msra.mxu0 0.0
        %4862 = vmatpush.msra.mxu0 0.0
        %4863 = vmatpush.msra.mxu0 0.0
        %4864 = vmatpush.msra.mxu0 0.0
        %4865 = vmatpush.msra.mxu0 0.0
        %4866 = vmatpush.msra.mxu0 0.0
        %4867 = vmatpush.msra.mxu0 0.0
        %4868 = vmatpush.msra.mxu0 0.0
        %4869 = vmatpush.msra.mxu0 0.0
        %4870 = vmatpush.msra.mxu0 0.0
        %4871 = vmatpush.msra.mxu0 0.0
        %4872 = vmatpush.msra.mxu0 0.0
        %4873 = vmatpush.msra.mxu0 0.0
        %v4874 = vand.u32 %v408, 4294901760
        %4875 = vmatpush.msra.mxu0 %v4874
        %v4876 = vand.u32 %v399, 4294901760
        %4877 = vmatpush.msra.mxu0 %v4876
        %v4878 = vand.u32 %v433, 4294901760
        %v4879 = vsub.f32 %v433, %v4878
        %v4880 = vand.u32 %v4879, 4294901760
        %4881 = vmatmul.f32.gmra.mxu0 %v4880
        %v4882 = vpop.f32.mrf.mxu0
        %v4883 = vadd.f32 %v4858, %v4882
        %4884 = vdwg.mxu0
        %4885 = vmatpush.msra.mxu0 0.0
        %4886 = vmatpush.msra.mxu0 0.0
        %4887 = vmatpush.msra.mxu0 0.0
        %4888 = vmatpush.msra.mxu0 0.0
        %4889 = vmatpush.msra.mxu0 0.0
        %4890 = vmatpush.msra.mxu0 0.0
        %4891 = vmatpush.msra.mxu0 0.0
        %4892 = vmatpush.msra.mxu0 0.0
        %4893 = vmatpush.msra.mxu0 0.0
        %4894 = vmatpush.msra.mxu0 0.0
        %4895 = vmatpush.msra.mxu0 0.0
        %4896 = vmatpush.msra.mxu0 0.0
        %4897 = vmatpush.msra.mxu0 0.0
        %4898 = vmatpush.msra.mxu0 0.0
        %v4899 = vand.u32 %v408, 4294901760
        %v4900 = vsub.f32 %v408, %v4899
        %v4901 = vand.u32 %v4900, 4294901760
        %4902 = vmatpush.msra.mxu0 %v4901
        %v4903 = vand.u32 %v399, 4294901760
        %v4904 = vsub.f32 %v399, %v4903
        %v4905 = vand.u32 %v4904, 4294901760
        %4906 = vmatpush.msra.mxu0 %v4905
        %v4907 = vand.u32 %v433, 4294901760
        %4908 = vmatmul.f32.gmra.mxu0 %v4907
        %v4909 = vpop.f32.mrf.mxu0
        %v4910 = vadd.f32 %v4883, %v4909
        %4911 = vdwg.mxu0
        %4912 = vmatpush.msra.mxu0 0.0
        %4913 = vmatpush.msra.mxu0 0.0
        %4914 = vmatpush.msra.mxu0 0.0
        %4915 = vmatpush.msra.mxu0 0.0
        %4916 = vmatpush.msra.mxu0 0.0
        %4917 = vmatpush.msra.mxu0 0.0
        %4918 = vmatpush.msra.mxu0 0.0
        %4919 = vmatpush.msra.mxu0 0.0
        %4920 = vmatpush.msra.mxu0 0.0
        %4921 = vmatpush.msra.mxu0 0.0
        %4922 = vmatpush.msra.mxu0 0.0
        %4923 = vmatpush.msra.mxu0 0.0
        %4924 = vmatpush.msra.mxu0 0.0
        %4925 = vmatpush.msra.mxu0 0.0
        %v4926 = vand.u32 %v408, 4294901760
        %4927 = vmatpush.msra.mxu0 %v4926
        %v4928 = vand.u32 %v399, 4294901760
        %4929 = vmatpush.msra.mxu0 %v4928
        %v4930 = vand.u32 %v433, 4294901760
        %4931 = vmatmul.f32.gmra.mxu0 %v4930
        %v4932 = vpop.f32.mrf.mxu0
        %v4933 = vadd.f32 %v4910, %v4932
        %4934 = vdwg.mxu0
        %4935 = vst [vmem:[%s241] sm:$0xff] %v933
        %4936 = vst [vmem:[%s241 + $0x8] sm:$0xff] %v1433
        %4937 = vst [vmem:[%s241 + $0x10] sm:$0xff] %v1933
        %4938 = vst [vmem:[%s241 + $0x18] sm:$0xff] %v2433
        %4939 = vst [vmem:[%s241 + $0x20] sm:$0xff] %v2933
        %4940 = vst [vmem:[%s241 + $0x28] sm:$0xff] %v3433
        %4941 = vst [vmem:[%s241 + $0x30] sm:$0xff] %v3933
        %4942 = vst [vmem:[%s241 + $0x38] sm:$0xff] %v4433
        %4943 = vst [vmem:[%s241 + $0x40] sm:$0xff] %v4933
        %s4944 = sand.u32 %s102, 1
        %s4945 = scalar_lea.sflag [#allocation4], %s4944
        %s4946 = sand.u32 %s102, 1
        %s4947 = smul.addr %s4946, 72
        %s4948 = scalar_lea.vmem [#allocation8], %s4947
        // Predicated region
        $region45: #{tpu_custom_call.1} parent=31 // pred_check
          %p4949 = pneg %p112
        $region46: #{tpu_custom_call.1} parent=31 // pred_check_branch
          %4951 = sbr.rel (%p4949) target = $region48
        $region47: #{tpu_custom_call.1} parent=31 // pred_region
          %s4952 = smul.u32 9, %s21
          %4954 = vsyncadd %s4945, 0
          %s4955 = smul.addr %s4952, 8
          %s4956 = scalar_lea.hbm %s3, %s4955
          %s4958 = sshll.u32 %s4948, 4
          %s4959 = int_to_ptr.vmem [resolvable:$true] %s4958
          %s4960 = sshll.u32 %s4956, 4
          %s4961 = int_to_ptr.hbm [resolvable:$true] %s4960
          %4963 = dma.vmem_to_hbm [thread:$0]  %s4959, 1152, %s4961, %s4945
        $region48: #{tpu_custom_call.1} parent=31 // pred_fallthru
          _
      $region32: #{tpu_custom_call.1} parent=5 // pred_fallthru
        _
      %p4964 = scmp.le.s32.totalorder 2, %s16
      // Predicated region
      $region49: #{tpu_custom_call.1} parent=5 // pred_check
        %p4965 = pneg %p4964
      $region50: #{tpu_custom_call.1} parent=5 // pred_check_branch
        %4967 = sbr.rel (%p4965) target = $region52
      $region51: #{tpu_custom_call.1} parent=5 // pred_region
        %s4968 = ssub.s32 %s16, 2
        // Predicated region
        $region53: #{tpu_custom_call.1} parent=51 // pred_check
          %p4969 = pneg %p118
        $region54: #{tpu_custom_call.1} parent=51 // pred_check_branch
          %4971 = sbr.rel (%p4969) target = $region56
        $region55: #{tpu_custom_call.1} parent=51 // pred_region
          %s4972 = sand.u32 %s103, 1
          %s4973 = scalar_lea.sflag [#allocation4], %s4972
          %s4974 = sand.u32 %s103, 1
          %s4975 = smul.addr %s4974, 72
          %s4976 = scalar_lea.vmem [#allocation8], %s4975
          %4978 = dma.done %s4973, 1152
        $region56: #{tpu_custom_call.1} parent=51 // pred_fallthru
          _
      $region52: #{tpu_custom_call.1} parent=5 // pred_fallthru
        _
    $region6: #{tpu_custom_call.1} parent=1 // loop_footer
      %s20 = sadd.s32 1, %s16
    $region7: #{tpu_custom_call.1} parent=1 // loop_footer_branch
      %15 = sbr.rel target = $region3
    $region8: #{tpu_custom_call.1} parent=1 // loop_exit
      _
    %4979 = vsyncpa [#allocation3], 1
    %s4980 = scalar_lea.sflag [#allocation3], 1
    %4981 = vsyncpa %s4980, 1
    %4982 = vsyncpa [#allocation6], 1
    %s4983 = scalar_lea.sflag [#allocation6], 1
    %4984 = vsyncpa %s4983, 1
    %4985 = vsyncpa [#allocation4], 1
    %s4986 = scalar_lea.sflag [#allocation4], 1
    %4987 = vsyncpa %s4986, 1

</llo_original>
